<compile_context>
chip_gen: v7x
topology: tpu7x:2x2x1
jax: 0.10.0
libtpu: 0.0.40
codegen_flags: <defaults>
</compile_context>

<pallas_src>
import jax
import jax.numpy as jnp
from jax.experimental import pallas as pl
from jax.experimental.pallas import tpu as pltpu

HIDDEN = 256            # num_hidden_units_phi
NUM_HIDDEN_LAYERS = 6   # FCBlock(num_hidden_layers=6)
IN_FEATS = 6            # plucker coords
OUT_DIM = 2             # (depth, alpha-logit)
IN_PAD = 8              # 6 -> 8 lanes (zero padded); last dim == full array dim
OUT_PAD = 8             # 2 -> 8 lanes; last dim == full array dim (BlockSpec-legal)
ALPHA_LANE = 1
LN_EPS = 1e-5           # torch.nn.LayerNorm default eps
TM_CANDIDATES = (2048, 1024, 512, 256, 128)   # rays per grid step
VMEM_LIMIT_BYTES = 32 * 1024 * 1024           # covers v5e's 16 MiB scoped default


def _layernorm_na_fused(h):
    """LayerNorm over features, no affine, single fused pass (f32 stats)."""
    mean = jnp.mean(h, axis=-1, keepdims=True)
    msq = jnp.mean(h * h, axis=-1, keepdims=True)
    var = jnp.maximum(msq - mean * mean, 0.0)
    return (h - mean) * jax.lax.rsqrt(var + LN_EPS)


def _layernorm_na_twopass(h):
    """Numerically safest form, used by the full-f32 reference."""
    mean = jnp.mean(h, axis=-1, keepdims=True)
    var = jnp.mean(jnp.square(h - mean), axis=-1, keepdims=True)
    return (h - mean) * jax.lax.rsqrt(var + LN_EPS)


def lfn_mlp_kernel(x_ref, w0_ref, b0_ref, wh_ref, bh_ref, wf_ref, bf_ref, o_ref):
    # First FC layer: (TM, 8) bf16 @ (8, 256) bf16 -> f32 (rows 6,7 of w0 are zero).
    x = x_ref[...].astype(jnp.bfloat16)
    h = jnp.dot(x, w0_ref[...], preferred_element_type=jnp.float32) + b0_ref[...]
    h = jnp.maximum(_layernorm_na_fused(h), 0.0)

    bh_all = bh_ref[...]                      # (6, 256) f32, tiny
    for i in range(NUM_HIDDEN_LAYERS):        # 6 hidden FC layers, unrolled
        h = jnp.dot(h.astype(jnp.bfloat16), wh_ref[i],
                    preferred_element_type=jnp.float32) + bh_all[i]
        h = jnp.maximum(_layernorm_na_fused(h), 0.0)

    # Outermost linear layer (output padded 2 -> 8 lanes; dense small writeback).
    out = jnp.dot(h.astype(jnp.bfloat16), wf_ref[...],
                  preferred_element_type=jnp.float32) + bf_ref[...]

    # depth = lf_out[..., 0]; alpha = sigmoid(lf_out[..., 1]) fused in-kernel.
    alpha = jax.nn.sigmoid(out[:, ALPHA_LANE:ALPHA_LANE + 1])           # (TM, 1)
    lane = jax.lax.broadcasted_iota(jnp.int32, out.shape, 1)
    o_ref[...] = jnp.where(lane == ALPHA_LANE, alpha, out)


def _choose_tm(n):
    # Largest tile that still leaves >= 4 grid steps (>= 2 per TensorCore on v7x),
    # so both cores keep DMA/compute overlap; tiny problems fall back to 128.
    for tm in TM_CANDIDATES:
        if n >= 4 * tm:
            return tm
    return TM_CANDIDATES[-1]


def lfn_mlp_pallas(x_pad, padded_params, *, tm):
    w0, b0, wh, bh, wf, bf = padded_params
    n = x_pad.shape[0]
    assert n % tm == 0
    grid = (n // tm,)
    return pl.pallas_call(
        lfn_mlp_kernel,
        out_shape=jax.ShapeDtypeStruct((n, OUT_PAD), jnp.float32),
        grid_spec=pltpu.PrefetchScalarGridSpec(
            num_scalar_prefetch=0,
            grid=grid,
            in_specs=[
                pl.BlockSpec((tm, IN_PAD), lambda i: (i, 0)),
                # Weights/biases: constant index_map -> fetched once, stay resident.
                pl.BlockSpec((IN_PAD, HIDDEN), lambda i: (0, 0)),
                pl.BlockSpec((1, HIDDEN), lambda i: (0, 0)),
                pl.BlockSpec((NUM_HIDDEN_LAYERS, HIDDEN, HIDDEN), lambda i: (0, 0, 0)),
                pl.BlockSpec((NUM_HIDDEN_LAYERS, HIDDEN), lambda i: (0, 0)),
                pl.BlockSpec((HIDDEN, OUT_PAD), lambda i: (0, 0)),
                pl.BlockSpec((1, OUT_PAD), lambda i: (0, 0)),
            ],
            out_specs=pl.BlockSpec((tm, OUT_PAD), lambda i: (i, 0)),
        ),
        compiler_params=pltpu.CompilerParams(
            dimension_semantics=("parallel",),
            vmem_limit_bytes=VMEM_LIMIT_BYTES,
        ),
    )(x_pad, w0, b0, wh, bh, wf, bf)


def init_params(key):
    """Deterministic synthetic params for phi = FCBlock(256, 6 hidden, 6->2, layernorm_na)."""
    ks = jax.random.split(key, 2 * (NUM_HIDDEN_LAYERS + 2))

    def linear(kw, kb, fan_in, fan_out):
        bound = 1.0 / jnp.sqrt(jnp.float32(fan_in))
        w = jax.random.uniform(kw, (fan_in, fan_out), jnp.float32, -bound, bound)
        b = jax.random.uniform(kb, (fan_out,), jnp.float32, -bound, bound)
        return w, b

    w0, b0 = linear(ks[0], ks[1], IN_FEATS, HIDDEN)
    whs, bhs = [], []
    for i in range(NUM_HIDDEN_LAYERS):
        w, b = linear(ks[2 + 2 * i], ks[3 + 2 * i], HIDDEN, HIDDEN)
        whs.append(w)
        bhs.append(b)
    wf, bf = linear(ks[-2], ks[-1], HIDDEN, OUT_DIM)

    raw = (w0, b0, jnp.stack(whs), jnp.stack(bhs), wf, bf)

    # Lane/sublane-friendly padded params; weights in bf16 (MXU operands),
    # biases stay f32 (added after the f32 accumulation).
    w0_p = (jnp.zeros((IN_PAD, HIDDEN), jnp.float32)
            .at[:IN_FEATS].set(w0).astype(jnp.bfloat16))
    b0_p = b0.reshape(1, HIDDEN)
    wh_p = jnp.stack(whs).astype(jnp.bfloat16)
    bh_p = jnp.stack(bhs)
    wf_p = (jnp.zeros((HIDDEN, OUT_PAD), jnp.float32)
            .at[:, :OUT_DIM].set(wf).astype(jnp.bfloat16))
    bf_p = jnp.zeros((1, OUT_PAD), jnp.float32).at[0, :OUT_DIM].set(bf)
    padded = (w0_p, b0_p, wh_p, bh_p, wf_p, bf_p)
    return raw, padded


def plucker_embedding(ray_origin, ray_dir):
    # geometry.plucker_embedding: cat((ray_dir, cross(ray_origin, ray_dir)), -1)
    moment = jnp.cross(ray_origin, ray_dir)
    return jnp.concatenate([ray_dir, moment], axis=-1)


@jax.jit
def light_field_model_forward(padded_params, x):
    """Mirrors LightFieldModel.forward (fit_single=True): returns (depth, alpha)."""
    b, n_pix, _ = x.shape
    x4 = x[:, None]                                             # x.unsqueeze(1)
    plucker = plucker_embedding(x4[..., -6:-3], x4[..., -3:])   # (B,1,n_pix,6)

    flat = plucker.reshape(-1, IN_FEATS).astype(jnp.float32)
    n = flat.shape[0]
    tm = _choose_tm(n)
    n_pad = ((n + tm - 1) // tm) * tm
    flat_pad = jnp.zeros((n_pad, IN_PAD), jnp.float32).at[:n, :IN_FEATS].set(flat)

    out = lfn_mlp_pallas(flat_pad, padded_params, tm=tm)[:n, :OUT_DIM]
    # NOTE: torch's .squeeze() drops the batch dim too when b == 1; mirrored here.
    lf_out = jnp.squeeze(out.reshape(b, 1, n_pix, OUT_DIM))
    depth = lf_out[..., 0]
    alpha = lf_out[..., 1]                                      # sigmoid done in-kernel
    return depth, alpha


def reference_forward_matched(raw_params, x):
    """Pure-JAX reference mirroring the kernel's numerics (bf16 dot operands, f32 acc/LN)."""
    w0, b0, whs, bhs, wf, bf = raw_params
    x4 = x[:, None]
    plucker = plucker_embedding(x4[..., -6:-3], x4[..., -3:])

    def bdot(a, w):
        return jnp.dot(a.astype(jnp.bfloat16), w.astype(jnp.bfloat16),
                       preferred_element_type=jnp.float32)

    h = jnp.maximum(_layernorm_na_fused(bdot(plucker, w0) + b0), 0.0)
    for i in range(NUM_HIDDEN_LAYERS):
        h = jnp.maximum(_layernorm_na_fused(bdot(h, whs[i]) + bhs[i]), 0.0)
    lf_out = jnp.squeeze(bdot(h, wf) + bf)
    return lf_out[..., 0], jax.nn.sigmoid(lf_out[..., 1])


def reference_forward_f32(raw_params, x):
    """Full-f32 reference of the original module's forward pass (two-pass LayerNorm)."""
    w0, b0, whs, bhs, wf, bf = raw_params
    x4 = x[:, None]
    plucker = plucker_embedding(x4[..., -6:-3], x4[..., -3:])
    h = jnp.maximum(_layernorm_na_twopass(plucker @ w0 + b0), 0.0)
    for i in range(NUM_HIDDEN_LAYERS):
        h = jnp.maximum(_layernorm_na_twopass(h @ whs[i] + bhs[i]), 0.0)
    lf_out = jnp.squeeze(h @ wf + bf)
    return lf_out[..., 0], jax.nn.sigmoid(lf_out[..., 1])


if __name__ == "__main__":
    key = jax.random.PRNGKey(0)
    k_param, k_x = jax.random.split(key)
    raw_params, padded_params = init_params(k_param)

    B, N_PIX = 2, 128
    x = jax.random.normal(k_x, (B, N_PIX, 6), dtype=jnp.float32)

    depth, alpha = light_field_model_forward(padded_params, x)
    jax.block_until_ready((depth, alpha))

    d_ref, a_ref = reference_forward_matched(raw_params, x)
    d_f32, a_f32 = reference_forward_f32(raw_params, x)

    assert depth.shape == (B, N_PIX) and alpha.shape == (B, N_PIX)
    # Against a reference with matching bf16-operand numerics.  Bit-level agreement
    # is NOT expected: reduction/accumulation order differs between the kernel and
    # XLA, and per-layer f32->bf16 re-rounding amplifies that over 7 layers.
    assert jnp.allclose(depth, d_ref, atol=2e-2, rtol=2e-2)
    assert jnp.allclose(alpha, a_ref, atol=2e-2, rtol=2e-2)
    # Fidelity check against the original full-f32 forward (bf16 MXU operands, f32 acc).
    assert jnp.allclose(depth, d_f32, atol=5e-2, rtol=5e-2)
    assert jnp.allclose(alpha, a_f32, atol=5e-2, rtol=5e-2)

    print("KERNEL_OK")
</pallas_src>

<mosaic_0001>
module attributes {stable_mosaic.version = 11 : i64} {
  func.func @lfn_mlp_kernel(%arg0: i32, %arg1: memref<128x8xf32, #tpu.memory_space<vmem>>, %arg2: memref<8x256xbf16, #tpu.memory_space<vmem>>, %arg3: memref<1x256xf32, #tpu.memory_space<vmem>>, %arg4: memref<6x256x256xbf16, #tpu.memory_space<vmem>>, %arg5: memref<6x256xf32, #tpu.memory_space<vmem>>, %arg6: memref<256x8xbf16, #tpu.memory_space<vmem>>, %arg7: memref<1x8xf32, #tpu.memory_space<vmem>>, %arg8: memref<128x8xf32, #tpu.memory_space<vmem>>) attributes {dimension_semantics = [#tpu.dimension_semantics<parallel>], iteration_bounds = array<i64: 2>, scalar_prefetch = 0 : i64, scratch_operands = 0 : i64, tpu.core_type = #tpu.core_type<tc>, window_params = [{transform_indices = @transform_0, window_bounds = array<i64: 128, 8>}, {pipeline_mode = #tpu.pipeline_mode<synchronous>, transform_indices = @transform_1, window_bounds = array<i64: 8, 256>}, {pipeline_mode = #tpu.pipeline_mode<synchronous>, transform_indices = @transform_2, window_bounds = array<i64: 1, 256>}, {pipeline_mode = #tpu.pipeline_mode<synchronous>, transform_indices = @transform_3, window_bounds = array<i64: 6, 256, 256>}, {pipeline_mode = #tpu.pipeline_mode<synchronous>, transform_indices = @transform_4, window_bounds = array<i64: 6, 256>}, {pipeline_mode = #tpu.pipeline_mode<synchronous>, transform_indices = @transform_5, window_bounds = array<i64: 256, 8>}, {pipeline_mode = #tpu.pipeline_mode<synchronous>, transform_indices = @transform_6, window_bounds = array<i64: 1, 8>}, {transform_indices = @transform_7, window_bounds = array<i64: 128, 8>}]} {
    %c0 = arith.constant 0 : index
    %c0_0 = arith.constant 0 : index
    %0 = vector.load %arg1[%c0, %c0_0] : memref<128x8xf32, #tpu.memory_space<vmem>>, vector<128x8xf32>
    %1 = arith.truncf %0 : vector<128x8xf32> to vector<128x8xbf16>
    %c0_1 = arith.constant 0 : index
    %c0_2 = arith.constant 0 : index
    %2 = vector.load %arg2[%c0_1, %c0_2] : memref<8x256xbf16, #tpu.memory_space<vmem>>, vector<8x256xbf16>
    %cst = arith.constant dense<0.000000e+00> : vector<128x256xf32>
    %3 = tpu.matmul %1, %2, %cst {dimension_numbers = #tpu.dot_dimension_numbers<[1], [0], [0], [1], [0, 0, 1, 1], [], []>} : vector<128x8xbf16>, vector<8x256xbf16>, vector<128x256xf32> -> vector<128x256xf32>
    %c0_3 = arith.constant 0 : index
    %c0_4 = arith.constant 0 : index
    %4 = vector.load %arg3[%c0_3, %c0_4] : memref<1x256xf32, #tpu.memory_space<vmem>>, vector<1x256xf32>
    %5 = vector.broadcast %4 : vector<1x256xf32> to vector<128x256xf32>
    %6 = arith.addf %3, %5 : vector<128x256xf32>
    %cst_5 = arith.constant dense<0.000000e+00> : vector<128xf32>
    %7 = vector.multi_reduction <add>, %6, %cst_5 [1] : vector<128x256xf32> to vector<128xf32>
    %8 = vector.shape_cast %7 : vector<128xf32> to vector<128x1xf32>
    %cst_6 = arith.constant 2.560000e+02 : f32
    %9 = vector.broadcast %cst_6 : f32 to vector<128x1xf32>
    %10 = arith.divf %8, %9 : vector<128x1xf32>
    %11 = arith.mulf %6, %6 : vector<128x256xf32>
    %cst_7 = arith.constant dense<0.000000e+00> : vector<128xf32>
    %12 = vector.multi_reduction <add>, %11, %cst_7 [1] : vector<128x256xf32> to vector<128xf32>
    %13 = vector.shape_cast %12 : vector<128xf32> to vector<128x1xf32>
    %cst_8 = arith.constant 2.560000e+02 : f32
    %14 = vector.broadcast %cst_8 : f32 to vector<128x1xf32>
    %15 = arith.divf %13, %14 : vector<128x1xf32>
    %16 = arith.mulf %10, %10 : vector<128x1xf32>
    %17 = arith.subf %15, %16 : vector<128x1xf32>
    %cst_9 = arith.constant 0.000000e+00 : f32
    %18 = vector.broadcast %cst_9 : f32 to vector<128x1xf32>
    %19 = arith.maximumf %17, %18 : vector<128x1xf32>
    %20 = vector.broadcast %10 : vector<128x1xf32> to vector<128x256xf32>
    %21 = arith.subf %6, %20 : vector<128x256xf32>
    %cst_10 = arith.constant 9.99999974E-6 : f32
    %22 = vector.broadcast %cst_10 : f32 to vector<128x1xf32>
    %23 = arith.addf %19, %22 : vector<128x1xf32>
    %24 = math.rsqrt %23 : vector<128x1xf32>
    %25 = vector.broadcast %24 : vector<128x1xf32> to vector<128x256xf32>
    %26 = arith.mulf %21, %25 : vector<128x256xf32>
    %cst_11 = arith.constant 0.000000e+00 : f32
    %27 = vector.broadcast %cst_11 : f32 to vector<128x256xf32>
    %28 = arith.maximumf %26, %27 : vector<128x256xf32>
    %c0_12 = arith.constant 0 : index
    %c0_13 = arith.constant 0 : index
    %29 = vector.load %arg5[%c0_12, %c0_13] : memref<6x256xf32, #tpu.memory_space<vmem>>, vector<6x256xf32>
    %30 = arith.truncf %28 : vector<128x256xf32> to vector<128x256xbf16>
    %c0_14 = arith.constant 0 : index
    %c0_15 = arith.constant 0 : index
    %c0_16 = arith.constant 0 : index
    %31 = vector.load %arg4[%c0_14, %c0_15, %c0_16] : memref<6x256x256xbf16, #tpu.memory_space<vmem>>, vector<1x256x256xbf16>
    %32 = vector.shape_cast %31 : vector<1x256x256xbf16> to vector<256x256xbf16>
    %cst_17 = arith.constant dense<0.000000e+00> : vector<128x256xf32>
    %33 = tpu.matmul %30, %32, %cst_17 {dimension_numbers = #tpu.dot_dimension_numbers<[1], [0], [0], [1], [0, 0, 1, 1], [], []>} : vector<128x256xbf16>, vector<256x256xbf16>, vector<128x256xf32> -> vector<128x256xf32>
    %34 = vector.extract_strided_slice %29 {offsets = [0, 0], sizes = [1, 256], strides = [1, 1]} : vector<6x256xf32> to vector<1x256xf32>
    %35 = vector.shape_cast %34 : vector<1x256xf32> to vector<256xf32>
    %36 = vector.shape_cast %35 : vector<256xf32> to vector<1x256xf32>
    %37 = vector.broadcast %36 : vector<1x256xf32> to vector<128x256xf32>
    %38 = arith.addf %33, %37 : vector<128x256xf32>
    %cst_18 = arith.constant dense<0.000000e+00> : vector<128xf32>
    %39 = vector.multi_reduction <add>, %38, %cst_18 [1] : vector<128x256xf32> to vector<128xf32>
    %40 = vector.shape_cast %39 : vector<128xf32> to vector<128x1xf32>
    %cst_19 = arith.constant 2.560000e+02 : f32
    %41 = vector.broadcast %cst_19 : f32 to vector<128x1xf32>
    %42 = arith.divf %40, %41 : vector<128x1xf32>
    %43 = arith.mulf %38, %38 : vector<128x256xf32>
    %cst_20 = arith.constant dense<0.000000e+00> : vector<128xf32>
    %44 = vector.multi_reduction <add>, %43, %cst_20 [1] : vector<128x256xf32> to vector<128xf32>
    %45 = vector.shape_cast %44 : vector<128xf32> to vector<128x1xf32>
    %cst_21 = arith.constant 2.560000e+02 : f32
    %46 = vector.broadcast %cst_21 : f32 to vector<128x1xf32>
    %47 = arith.divf %45, %46 : vector<128x1xf32>
    %48 = arith.mulf %42, %42 : vector<128x1xf32>
    %49 = arith.subf %47, %48 : vector<128x1xf32>
    %cst_22 = arith.constant 0.000000e+00 : f32
    %50 = vector.broadcast %cst_22 : f32 to vector<128x1xf32>
    %51 = arith.maximumf %49, %50 : vector<128x1xf32>
    %52 = vector.broadcast %42 : vector<128x1xf32> to vector<128x256xf32>
    %53 = arith.subf %38, %52 : vector<128x256xf32>
    %cst_23 = arith.constant 9.99999974E-6 : f32
    %54 = vector.broadcast %cst_23 : f32 to vector<128x1xf32>
    %55 = arith.addf %51, %54 : vector<128x1xf32>
    %56 = math.rsqrt %55 : vector<128x1xf32>
    %57 = vector.broadcast %56 : vector<128x1xf32> to vector<128x256xf32>
    %58 = arith.mulf %53, %57 : vector<128x256xf32>
    %cst_24 = arith.constant 0.000000e+00 : f32
    %59 = vector.broadcast %cst_24 : f32 to vector<128x256xf32>
    %60 = arith.maximumf %58, %59 : vector<128x256xf32>
    %61 = arith.truncf %60 : vector<128x256xf32> to vector<128x256xbf16>
    %c1 = arith.constant 1 : index
    %c0_25 = arith.constant 0 : index
    %c0_26 = arith.constant 0 : index
    %62 = vector.load %arg4[%c1, %c0_25, %c0_26] : memref<6x256x256xbf16, #tpu.memory_space<vmem>>, vector<1x256x256xbf16>
    %63 = vector.shape_cast %62 : vector<1x256x256xbf16> to vector<256x256xbf16>
    %cst_27 = arith.constant dense<0.000000e+00> : vector<128x256xf32>
    %64 = tpu.matmul %61, %63, %cst_27 {dimension_numbers = #tpu.dot_dimension_numbers<[1], [0], [0], [1], [0, 0, 1, 1], [], []>} : vector<128x256xbf16>, vector<256x256xbf16>, vector<128x256xf32> -> vector<128x256xf32>
    %65 = vector.extract_strided_slice %29 {offsets = [1, 0], sizes = [1, 256], strides = [1, 1]} : vector<6x256xf32> to vector<1x256xf32>
    %66 = vector.shape_cast %65 : vector<1x256xf32> to vector<256xf32>
    %67 = vector.shape_cast %66 : vector<256xf32> to vector<1x256xf32>
    %68 = vector.broadcast %67 : vector<1x256xf32> to vector<128x256xf32>
    %69 = arith.addf %64, %68 : vector<128x256xf32>
    %cst_28 = arith.constant dense<0.000000e+00> : vector<128xf32>
    %70 = vector.multi_reduction <add>, %69, %cst_28 [1] : vector<128x256xf32> to vector<128xf32>
    %71 = vector.shape_cast %70 : vector<128xf32> to vector<128x1xf32>
    %cst_29 = arith.constant 2.560000e+02 : f32
    %72 = vector.broadcast %cst_29 : f32 to vector<128x1xf32>
    %73 = arith.divf %71, %72 : vector<128x1xf32>
    %74 = arith.mulf %69, %69 : vector<128x256xf32>
    %cst_30 = arith.constant dense<0.000000e+00> : vector<128xf32>
    %75 = vector.multi_reduction <add>, %74, %cst_30 [1] : vector<128x256xf32> to vector<128xf32>
    %76 = vector.shape_cast %75 : vector<128xf32> to vector<128x1xf32>
    %cst_31 = arith.constant 2.560000e+02 : f32
    %77 = vector.broadcast %cst_31 : f32 to vector<128x1xf32>
    %78 = arith.divf %76, %77 : vector<128x1xf32>
    %79 = arith.mulf %73, %73 : vector<128x1xf32>
    %80 = arith.subf %78, %79 : vector<128x1xf32>
    %cst_32 = arith.constant 0.000000e+00 : f32
    %81 = vector.broadcast %cst_32 : f32 to vector<128x1xf32>
    %82 = arith.maximumf %80, %81 : vector<128x1xf32>
    %83 = vector.broadcast %73 : vector<128x1xf32> to vector<128x256xf32>
    %84 = arith.subf %69, %83 : vector<128x256xf32>
    %cst_33 = arith.constant 9.99999974E-6 : f32
    %85 = vector.broadcast %cst_33 : f32 to vector<128x1xf32>
    %86 = arith.addf %82, %85 : vector<128x1xf32>
    %87 = math.rsqrt %86 : vector<128x1xf32>
    %88 = vector.broadcast %87 : vector<128x1xf32> to vector<128x256xf32>
    %89 = arith.mulf %84, %88 : vector<128x256xf32>
    %cst_34 = arith.constant 0.000000e+00 : f32
    %90 = vector.broadcast %cst_34 : f32 to vector<128x256xf32>
    %91 = arith.maximumf %89, %90 : vector<128x256xf32>
    %92 = arith.truncf %91 : vector<128x256xf32> to vector<128x256xbf16>
    %c2 = arith.constant 2 : index
    %c0_35 = arith.constant 0 : index
    %c0_36 = arith.constant 0 : index
    %93 = vector.load %arg4[%c2, %c0_35, %c0_36] : memref<6x256x256xbf16, #tpu.memory_space<vmem>>, vector<1x256x256xbf16>
    %94 = vector.shape_cast %93 : vector<1x256x256xbf16> to vector<256x256xbf16>
    %cst_37 = arith.constant dense<0.000000e+00> : vector<128x256xf32>
    %95 = tpu.matmul %92, %94, %cst_37 {dimension_numbers = #tpu.dot_dimension_numbers<[1], [0], [0], [1], [0, 0, 1, 1], [], []>} : vector<128x256xbf16>, vector<256x256xbf16>, vector<128x256xf32> -> vector<128x256xf32>
    %96 = vector.extract_strided_slice %29 {offsets = [2, 0], sizes = [1, 256], strides = [1, 1]} : vector<6x256xf32> to vector<1x256xf32>
    %97 = vector.shape_cast %96 : vector<1x256xf32> to vector<256xf32>
    %98 = vector.shape_cast %97 : vector<256xf32> to vector<1x256xf32>
    %99 = vector.broadcast %98 : vector<1x256xf32> to vector<128x256xf32>
    %100 = arith.addf %95, %99 : vector<128x256xf32>
    %cst_38 = arith.constant dense<0.000000e+00> : vector<128xf32>
    %101 = vector.multi_reduction <add>, %100, %cst_38 [1] : vector<128x256xf32> to vector<128xf32>
    %102 = vector.shape_cast %101 : vector<128xf32> to vector<128x1xf32>
    %cst_39 = arith.constant 2.560000e+02 : f32
    %103 = vector.broadcast %cst_39 : f32 to vector<128x1xf32>
    %104 = arith.divf %102, %103 : vector<128x1xf32>
    %105 = arith.mulf %100, %100 : vector<128x256xf32>
    %cst_40 = arith.constant dense<0.000000e+00> : vector<128xf32>
    %106 = vector.multi_reduction <add>, %105, %cst_40 [1] : vector<128x256xf32> to vector<128xf32>
    %107 = vector.shape_cast %106 : vector<128xf32> to vector<128x1xf32>
    %cst_41 = arith.constant 2.560000e+02 : f32
    %108 = vector.broadcast %cst_41 : f32 to vector<128x1xf32>
    %109 = arith.divf %107, %108 : vector<128x1xf32>
    %110 = arith.mulf %104, %104 : vector<128x1xf32>
    %111 = arith.subf %109, %110 : vector<128x1xf32>
    %cst_42 = arith.constant 0.000000e+00 : f32
    %112 = vector.broadcast %cst_42 : f32 to vector<128x1xf32>
    %113 = arith.maximumf %111, %112 : vector<128x1xf32>
    %114 = vector.broadcast %104 : vector<128x1xf32> to vector<128x256xf32>
    %115 = arith.subf %100, %114 : vector<128x256xf32>
    %cst_43 = arith.constant 9.99999974E-6 : f32
    %116 = vector.broadcast %cst_43 : f32 to vector<128x1xf32>
    %117 = arith.addf %113, %116 : vector<128x1xf32>
    %118 = math.rsqrt %117 : vector<128x1xf32>
    %119 = vector.broadcast %118 : vector<128x1xf32> to vector<128x256xf32>
    %120 = arith.mulf %115, %119 : vector<128x256xf32>
    %cst_44 = arith.constant 0.000000e+00 : f32
    %121 = vector.broadcast %cst_44 : f32 to vector<128x256xf32>
    %122 = arith.maximumf %120, %121 : vector<128x256xf32>
    %123 = arith.truncf %122 : vector<128x256xf32> to vector<128x256xbf16>
    %c3 = arith.constant 3 : index
    %c0_45 = arith.constant 0 : index
    %c0_46 = arith.constant 0 : index
    %124 = vector.load %arg4[%c3, %c0_45, %c0_46] : memref<6x256x256xbf16, #tpu.memory_space<vmem>>, vector<1x256x256xbf16>
    %125 = vector.shape_cast %124 : vector<1x256x256xbf16> to vector<256x256xbf16>
    %cst_47 = arith.constant dense<0.000000e+00> : vector<128x256xf32>
    %126 = tpu.matmul %123, %125, %cst_47 {dimension_numbers = #tpu.dot_dimension_numbers<[1], [0], [0], [1], [0, 0, 1, 1], [], []>} : vector<128x256xbf16>, vector<256x256xbf16>, vector<128x256xf32> -> vector<128x256xf32>
    %127 = vector.extract_strided_slice %29 {offsets = [3, 0], sizes = [1, 256], strides = [1, 1]} : vector<6x256xf32> to vector<1x256xf32>
    %128 = vector.shape_cast %127 : vector<1x256xf32> to vector<256xf32>
    %129 = vector.shape_cast %128 : vector<256xf32> to vector<1x256xf32>
    %130 = vector.broadcast %129 : vector<1x256xf32> to vector<128x256xf32>
    %131 = arith.addf %126, %130 : vector<128x256xf32>
    %cst_48 = arith.constant dense<0.000000e+00> : vector<128xf32>
    %132 = vector.multi_reduction <add>, %131, %cst_48 [1] : vector<128x256xf32> to vector<128xf32>
    %133 = vector.shape_cast %132 : vector<128xf32> to vector<128x1xf32>
    %cst_49 = arith.constant 2.560000e+02 : f32
    %134 = vector.broadcast %cst_49 : f32 to vector<128x1xf32>
    %135 = arith.divf %133, %134 : vector<128x1xf32>
    %136 = arith.mulf %131, %131 : vector<128x256xf32>
    %cst_50 = arith.constant dense<0.000000e+00> : vector<128xf32>
    %137 = vector.multi_reduction <add>, %136, %cst_50 [1] : vector<128x256xf32> to vector<128xf32>
    %138 = vector.shape_cast %137 : vector<128xf32> to vector<128x1xf32>
    %cst_51 = arith.constant 2.560000e+02 : f32
    %139 = vector.broadcast %cst_51 : f32 to vector<128x1xf32>
    %140 = arith.divf %138, %139 : vector<128x1xf32>
    %141 = arith.mulf %135, %135 : vector<128x1xf32>
    %142 = arith.subf %140, %141 : vector<128x1xf32>
    %cst_52 = arith.constant 0.000000e+00 : f32
    %143 = vector.broadcast %cst_52 : f32 to vector<128x1xf32>
    %144 = arith.maximumf %142, %143 : vector<128x1xf32>
    %145 = vector.broadcast %135 : vector<128x1xf32> to vector<128x256xf32>
    %146 = arith.subf %131, %145 : vector<128x256xf32>
    %cst_53 = arith.constant 9.99999974E-6 : f32
    %147 = vector.broadcast %cst_53 : f32 to vector<128x1xf32>
    %148 = arith.addf %144, %147 : vector<128x1xf32>
    %149 = math.rsqrt %148 : vector<128x1xf32>
    %150 = vector.broadcast %149 : vector<128x1xf32> to vector<128x256xf32>
    %151 = arith.mulf %146, %150 : vector<128x256xf32>
    %cst_54 = arith.constant 0.000000e+00 : f32
    %152 = vector.broadcast %cst_54 : f32 to vector<128x256xf32>
    %153 = arith.maximumf %151, %152 : vector<128x256xf32>
    %154 = arith.truncf %153 : vector<128x256xf32> to vector<128x256xbf16>
    %c4 = arith.constant 4 : index
    %c0_55 = arith.constant 0 : index
    %c0_56 = arith.constant 0 : index
    %155 = vector.load %arg4[%c4, %c0_55, %c0_56] : memref<6x256x256xbf16, #tpu.memory_space<vmem>>, vector<1x256x256xbf16>
    %156 = vector.shape_cast %155 : vector<1x256x256xbf16> to vector<256x256xbf16>
    %cst_57 = arith.constant dense<0.000000e+00> : vector<128x256xf32>
    %157 = tpu.matmul %154, %156, %cst_57 {dimension_numbers = #tpu.dot_dimension_numbers<[1], [0], [0], [1], [0, 0, 1, 1], [], []>} : vector<128x256xbf16>, vector<256x256xbf16>, vector<128x256xf32> -> vector<128x256xf32>
    %158 = vector.extract_strided_slice %29 {offsets = [4, 0], sizes = [1, 256], strides = [1, 1]} : vector<6x256xf32> to vector<1x256xf32>
    %159 = vector.shape_cast %158 : vector<1x256xf32> to vector<256xf32>
    %160 = vector.shape_cast %159 : vector<256xf32> to vector<1x256xf32>
    %161 = vector.broadcast %160 : vector<1x256xf32> to vector<128x256xf32>
    %162 = arith.addf %157, %161 : vector<128x256xf32>
    %cst_58 = arith.constant dense<0.000000e+00> : vector<128xf32>
    %163 = vector.multi_reduction <add>, %162, %cst_58 [1] : vector<128x256xf32> to vector<128xf32>
    %164 = vector.shape_cast %163 : vector<128xf32> to vector<128x1xf32>
    %cst_59 = arith.constant 2.560000e+02 : f32
    %165 = vector.broadcast %cst_59 : f32 to vector<128x1xf32>
    %166 = arith.divf %164, %165 : vector<128x1xf32>
    %167 = arith.mulf %162, %162 : vector<128x256xf32>
    %cst_60 = arith.constant dense<0.000000e+00> : vector<128xf32>
    %168 = vector.multi_reduction <add>, %167, %cst_60 [1] : vector<128x256xf32> to vector<128xf32>
    %169 = vector.shape_cast %168 : vector<128xf32> to vector<128x1xf32>
    %cst_61 = arith.constant 2.560000e+02 : f32
    %170 = vector.broadcast %cst_61 : f32 to vector<128x1xf32>
    %171 = arith.divf %169, %170 : vector<128x1xf32>
    %172 = arith.mulf %166, %166 : vector<128x1xf32>
    %173 = arith.subf %171, %172 : vector<128x1xf32>
    %cst_62 = arith.constant 0.000000e+00 : f32
    %174 = vector.broadcast %cst_62 : f32 to vector<128x1xf32>
    %175 = arith.maximumf %173, %174 : vector<128x1xf32>
    %176 = vector.broadcast %166 : vector<128x1xf32> to vector<128x256xf32>
    %177 = arith.subf %162, %176 : vector<128x256xf32>
    %cst_63 = arith.constant 9.99999974E-6 : f32
    %178 = vector.broadcast %cst_63 : f32 to vector<128x1xf32>
    %179 = arith.addf %175, %178 : vector<128x1xf32>
    %180 = math.rsqrt %179 : vector<128x1xf32>
    %181 = vector.broadcast %180 : vector<128x1xf32> to vector<128x256xf32>
    %182 = arith.mulf %177, %181 : vector<128x256xf32>
    %cst_64 = arith.constant 0.000000e+00 : f32
    %183 = vector.broadcast %cst_64 : f32 to vector<128x256xf32>
    %184 = arith.maximumf %182, %183 : vector<128x256xf32>
    %185 = arith.truncf %184 : vector<128x256xf32> to vector<128x256xbf16>
    %c5 = arith.constant 5 : index
    %c0_65 = arith.constant 0 : index
    %c0_66 = arith.constant 0 : index
    %186 = vector.load %arg4[%c5, %c0_65, %c0_66] : memref<6x256x256xbf16, #tpu.memory_space<vmem>>, vector<1x256x256xbf16>
    %187 = vector.shape_cast %186 : vector<1x256x256xbf16> to vector<256x256xbf16>
    %cst_67 = arith.constant dense<0.000000e+00> : vector<128x256xf32>
    %188 = tpu.matmul %185, %187, %cst_67 {dimension_numbers = #tpu.dot_dimension_numbers<[1], [0], [0], [1], [0, 0, 1, 1], [], []>} : vector<128x256xbf16>, vector<256x256xbf16>, vector<128x256xf32> -> vector<128x256xf32>
    %189 = vector.extract_strided_slice %29 {offsets = [5, 0], sizes = [1, 256], strides = [1, 1]} : vector<6x256xf32> to vector<1x256xf32>
    %190 = vector.shape_cast %189 : vector<1x256xf32> to vector<256xf32>
    %191 = vector.shape_cast %190 : vector<256xf32> to vector<1x256xf32>
    %192 = vector.broadcast %191 : vector<1x256xf32> to vector<128x256xf32>
    %193 = arith.addf %188, %192 : vector<128x256xf32>
    %cst_68 = arith.constant dense<0.000000e+00> : vector<128xf32>
    %194 = vector.multi_reduction <add>, %193, %cst_68 [1] : vector<128x256xf32> to vector<128xf32>
    %195 = vector.shape_cast %194 : vector<128xf32> to vector<128x1xf32>
    %cst_69 = arith.constant 2.560000e+02 : f32
    %196 = vector.broadcast %cst_69 : f32 to vector<128x1xf32>
    %197 = arith.divf %195, %196 : vector<128x1xf32>
    %198 = arith.mulf %193, %193 : vector<128x256xf32>
    %cst_70 = arith.constant dense<0.000000e+00> : vector<128xf32>
    %199 = vector.multi_reduction <add>, %198, %cst_70 [1] : vector<128x256xf32> to vector<128xf32>
    %200 = vector.shape_cast %199 : vector<128xf32> to vector<128x1xf32>
    %cst_71 = arith.constant 2.560000e+02 : f32
    %201 = vector.broadcast %cst_71 : f32 to vector<128x1xf32>
    %202 = arith.divf %200, %201 : vector<128x1xf32>
    %203 = arith.mulf %197, %197 : vector<128x1xf32>
    %204 = arith.subf %202, %203 : vector<128x1xf32>
    %cst_72 = arith.constant 0.000000e+00 : f32
    %205 = vector.broadcast %cst_72 : f32 to vector<128x1xf32>
    %206 = arith.maximumf %204, %205 : vector<128x1xf32>
    %207 = vector.broadcast %197 : vector<128x1xf32> to vector<128x256xf32>
    %208 = arith.subf %193, %207 : vector<128x256xf32>
    %cst_73 = arith.constant 9.99999974E-6 : f32
    %209 = vector.broadcast %cst_73 : f32 to vector<128x1xf32>
    %210 = arith.addf %206, %209 : vector<128x1xf32>
    %211 = math.rsqrt %210 : vector<128x1xf32>
    %212 = vector.broadcast %211 : vector<128x1xf32> to vector<128x256xf32>
    %213 = arith.mulf %208, %212 : vector<128x256xf32>
    %cst_74 = arith.constant 0.000000e+00 : f32
    %214 = vector.broadcast %cst_74 : f32 to vector<128x256xf32>
    %215 = arith.maximumf %213, %214 : vector<128x256xf32>
    %216 = arith.truncf %215 : vector<128x256xf32> to vector<128x256xbf16>
    %c0_75 = arith.constant 0 : index
    %c0_76 = arith.constant 0 : index
    %217 = vector.load %arg6[%c0_75, %c0_76] : memref<256x8xbf16, #tpu.memory_space<vmem>>, vector<256x8xbf16>
    %cst_77 = arith.constant dense<0.000000e+00> : vector<128x8xf32>
    %218 = tpu.matmul %216, %217, %cst_77 {dimension_numbers = #tpu.dot_dimension_numbers<[1], [0], [0], [1], [0, 0, 1, 1], [], []>} : vector<128x256xbf16>, vector<256x8xbf16>, vector<128x8xf32> -> vector<128x8xf32>
    %c0_78 = arith.constant 0 : index
    %c0_79 = arith.constant 0 : index
    %219 = vector.load %arg7[%c0_78, %c0_79] : memref<1x8xf32, #tpu.memory_space<vmem>>, vector<1x8xf32>
    %220 = vector.broadcast %219 : vector<1x8xf32> to vector<128x8xf32>
    %221 = arith.addf %218, %220 : vector<128x8xf32>
    %222 = vector.extract_strided_slice %221 {offsets = [0, 1], sizes = [128, 1], strides = [1, 1]} : vector<128x8xf32> to vector<128x1xf32>
    %223 = arith.negf %222 : vector<128x1xf32>
    %224 = math.exp %223 : vector<128x1xf32>
    %cst_80 = arith.constant 1.000000e+00 : f32
    %225 = vector.broadcast %cst_80 : f32 to vector<128x1xf32>
    %226 = arith.addf %225, %224 : vector<128x1xf32>
    %227 = arith.divf %225, %226 : vector<128x1xf32>
    %228 = tpu.iota {dimensions = array<i32: 1>} : vector<128x8xi32>
    %c1_i32 = arith.constant 1 : i32
    %229 = vector.broadcast %c1_i32 : i32 to vector<128x8xi32>
    %230 = arith.cmpi eq, %228, %229 : vector<128x8xi32>
    %231 = vector.shape_cast %227 : vector<128x1xf32> to vector<128x1xf32>
    %232 = vector.broadcast %231 : vector<128x1xf32> to vector<128x8xf32>
    %233 = arith.select %230, %232, %221 : vector<128x8xi1>, vector<128x8xf32>
    %c0_81 = arith.constant 0 : index
    %c0_82 = arith.constant 0 : index
    %234 = vector.load %arg8[%c0_81, %c0_82] : memref<128x8xf32, #tpu.memory_space<vmem>>, vector<128x8xf32>
    tpu.vector_store %arg8[%c0_81, %c0_82], %233 {strides = array<i32>} : memref<128x8xf32, #tpu.memory_space<vmem>>, vector<128x8xf32>,
    return
  }
  func.func @transform_0(%arg0: i32) -> (i32, i32) {
    %c0_i32 = arith.constant 0 : i32
    %c0_i32_0 = arith.constant 0 : i32
    return %arg0, %c0_i32 : i32, i32
  }
  func.func @transform_1(%arg0: i32) -> (i32, i32) {
    %c0_i32 = arith.constant 0 : i32
    %c0_i32_0 = arith.constant 0 : i32
    %c0_i32_1 = arith.constant 0 : i32
    return %c0_i32, %c0_i32_0 : i32, i32
  }
  func.func @transform_2(%arg0: i32) -> (i32, i32) {
    %c0_i32 = arith.constant 0 : i32
    %c0_i32_0 = arith.constant 0 : i32
    %c0_i32_1 = arith.constant 0 : i32
    return %c0_i32, %c0_i32_0 : i32, i32
  }
  func.func @transform_3(%arg0: i32) -> (i32, i32, i32) {
    %c0_i32 = arith.constant 0 : i32
    %c0_i32_0 = arith.constant 0 : i32
    %c0_i32_1 = arith.constant 0 : i32
    %c0_i32_2 = arith.constant 0 : i32
    return %c0_i32, %c0_i32_0, %c0_i32_1 : i32, i32, i32
  }
  func.func @transform_4(%arg0: i32) -> (i32, i32) {
    %c0_i32 = arith.constant 0 : i32
    %c0_i32_0 = arith.constant 0 : i32
    %c0_i32_1 = arith.constant 0 : i32
    return %c0_i32, %c0_i32_0 : i32, i32
  }
  func.func @transform_5(%arg0: i32) -> (i32, i32) {
    %c0_i32 = arith.constant 0 : i32
    %c0_i32_0 = arith.constant 0 : i32
    %c0_i32_1 = arith.constant 0 : i32
    return %c0_i32, %c0_i32_0 : i32, i32
  }
  func.func @transform_6(%arg0: i32) -> (i32, i32) {
    %c0_i32 = arith.constant 0 : i32
    %c0_i32_0 = arith.constant 0 : i32
    %c0_i32_1 = arith.constant 0 : i32
    return %c0_i32, %c0_i32_0 : i32, i32
  }
  func.func @transform_7(%arg0: i32) -> (i32, i32) {
    %c0_i32 = arith.constant 0 : i32
    %c0_i32_0 = arith.constant 0 : i32
    return %arg0, %c0_i32 : i32, i32
  }
}

</mosaic_0001>

<llo_original>
// kernel: light_field_model_forward.1
$region0: #{light_field_model_forward.1}
  #allocation0 [shape = 'u32[]', space=smem, size = 0x4, offset = 0x4, fixed_abs, tag = 'smem constant byte address 0x4 - core index']
  #allocation1 [shape = 'u32[144,128]{1,0:T(1,128)}', space=vmem, size = 0x12000, scoped, tag = 'internal scratch']
  %s0 = inlined_call_operand.vmem [shape: f32[256,8], index: 0, kind: input, shape index: {}]
  %s1 = inlined_call_operand.vmem [shape: bf16[8,256], index: 1, kind: input, shape index: {}]
  %s2 = inlined_call_operand.vmem [shape: f32[1,256], index: 2, kind: input, shape index: {}]
  %s3 = inlined_call_operand.hbm [shape: bf16[6,256,256], index: 3, kind: input, shape index: {}]
  %s4 = inlined_call_operand.vmem [shape: f32[6,256], index: 4, kind: input, shape index: {}]
  %s5 = inlined_call_operand.vmem [shape: bf16[256,8], index: 5, kind: input, shape index: {}]
  %s6 = inlined_call_operand.vmem [shape: f32[1,8], index: 6, kind: input, shape index: {}]
  %s7 = inlined_call_operand.vmem [shape: f32[256,8], index: 7, kind: output, shape index: {}]
  %s8 = sld [smem:[#allocation0]]
  $region65: #{light_field_model_forward.1} parent=0
    _
  %s10 = ssub.s32 1, %s8
  %s11 = scalar_select 0, %s10, %s8
  $region1: #{light_field_model_forward.1} parent=0
    #allocation2 [shape = 'u8[786432]{0}', space=vmem, size = 0xc0000, scoped, tag = 'input window, operand 3, single buffered']
    #allocation3 [shape = 's32[2]{0}', space=sflag, size = 0x8, scoped, tag = 'scoped memory for light_field_model_forward.1']
    %12 = vsyncpa [#allocation3], 0
    loop: start=0, step=1, limit=4
    $region2: #{light_field_model_forward.1} parent=1 // loop_pre_header
      _
    $region3: #{light_field_model_forward.1} parent=1 // loop_header
      %s14 = sphi 0, %s18
      %p15 = scmp.ge.s32.totalorder %s14, 4
      %s24 = sphi 0, %s26
      %s27 = sphi 0, %s24
      %s28 = sphi 0, %s27
      %s44 = sphi 0, %s28
      %s48 = sphi 0, %s48
      %s50 = sphi 0, %s48
      %s51 = sphi 0, %s50
      %s65 = sphi 0, %s51
      %s69 = sphi 0, %s69
      %s71 = sphi 0, %s69
      %s72 = sphi 0, %s71
      %s86 = sphi 0, %s72
      %s90 = sphi 0, %s90
      %s92 = sphi 0, %s90
      %s93 = sphi 0, %s92
      %s107 = sphi 0, %s93
      %s111 = sphi 0, %s111
      %s113 = sphi 0, %s111
      %s114 = sphi 0, %s113
      %s128 = sphi 0, %s114
      %s132 = sphi 0, %s132
      %s134 = sphi 0, %s132
      %s135 = sphi 0, %s134
      %s149 = sphi 0, %s135
      %s153 = sphi 0, %s153
      %s155 = sphi 0, %s153
      %s156 = sphi 0, %s155
      %s170 = sphi 0, %s156
      %s176 = sphi 0, %s178
      %s179 = sphi 0, %s176
      %s180 = sphi 0, %s179
      %s196 = sphi 0, %s180
    $region4: #{light_field_model_forward.1} parent=1 // loop_header_branch
      %17 = sbr.rel (%p15) target = $region8
    $region5: #{light_field_model_forward.1} parent=1 // loop_body
      %s19 = ssub.s32 %s14, 1
      %s20 = ssub.s32 %s14, 2
      %s21 = sadd.s32 %s14, 1
      %s22 = ssub.s32 %s14, %s21
      %p23 = scmp.eq.s32.totalorder %s22, 0
      %s25 = sadd.s32 %s24, 1
      %s26 = scalar_select %p23, %s24, %s25
      %p29 = pneg %p23
      %p30 = scmp.eq.s32.totalorder %s14, 1
      %p31 = por %p29, %p30
      %p32 = scmp.ne.s32.totalorder %s24, %s27
      %p33 = scmp.eq.s32.totalorder %s14, 0
      %p34 = por %p32, %p33
      %p35 = scmp.ne.s32.totalorder %s24, %s27
      %p36 = scmp.eq.s32.totalorder %s19, 1
      %p37 = por %p35, %p36
      %p38 = scmp.ne.s32.totalorder %s27, %s28
      %p39 = scmp.eq.s32.totalorder %s19, 0
      %p40 = por %p38, %p39
      %p41 = scmp.ne.s32.totalorder %s27, %s28
      %p42 = scmp.eq.s32.totalorder %s20, 1
      %p43 = por %p41, %p42
      %p45 = scmp.ne.s32.totalorder %s28, %s44
      %p46 = scmp.eq.s32.totalorder %s20, 0
      %p47 = por %p45, %p46
      %s49 = sadd.s32 %s48, 1
      %p52 = scmp.eq.s32.totalorder %s14, 1
      %p53 = scmp.ne.s32.totalorder %s48, %s50
      %p54 = scmp.eq.s32.totalorder %s14, 0
      %p55 = por %p53, %p54
      %p56 = scmp.ne.s32.totalorder %s48, %s50
      %p57 = scmp.eq.s32.totalorder %s19, 1
      %p58 = por %p56, %p57
      %p59 = scmp.ne.s32.totalorder %s50, %s51
      %p60 = scmp.eq.s32.totalorder %s19, 0
      %p61 = por %p59, %p60
      %p62 = scmp.ne.s32.totalorder %s50, %s51
      %p63 = scmp.eq.s32.totalorder %s20, 1
      %p64 = por %p62, %p63
      %p66 = scmp.ne.s32.totalorder %s51, %s65
      %p67 = scmp.eq.s32.totalorder %s20, 0
      %p68 = por %p66, %p67
      %s70 = sadd.s32 %s69, 1
      %p73 = scmp.eq.s32.totalorder %s14, 1
      %p74 = scmp.ne.s32.totalorder %s69, %s71
      %p75 = scmp.eq.s32.totalorder %s14, 0
      %p76 = por %p74, %p75
      %p77 = scmp.ne.s32.totalorder %s69, %s71
      %p78 = scmp.eq.s32.totalorder %s19, 1
      %p79 = por %p77, %p78
      %p80 = scmp.ne.s32.totalorder %s71, %s72
      %p81 = scmp.eq.s32.totalorder %s19, 0
      %p82 = por %p80, %p81
      %p83 = scmp.ne.s32.totalorder %s71, %s72
      %p84 = scmp.eq.s32.totalorder %s20, 1
      %p85 = por %p83, %p84
      %p87 = scmp.ne.s32.totalorder %s72, %s86
      %p88 = scmp.eq.s32.totalorder %s20, 0
      %p89 = por %p87, %p88
      %s91 = sadd.s32 %s90, 1
      %p94 = scmp.eq.s32.totalorder %s14, 1
      %p95 = scmp.ne.s32.totalorder %s90, %s92
      %p96 = scmp.eq.s32.totalorder %s14, 0
      %p97 = por %p95, %p96
      %p98 = scmp.ne.s32.totalorder %s90, %s92
      %p99 = scmp.eq.s32.totalorder %s19, 1
      %p100 = por %p98, %p99
      %p101 = scmp.ne.s32.totalorder %s92, %s93
      %p102 = scmp.eq.s32.totalorder %s19, 0
      %p103 = por %p101, %p102
      %p104 = scmp.ne.s32.totalorder %s92, %s93
      %p105 = scmp.eq.s32.totalorder %s20, 1
      %p106 = por %p104, %p105
      %p108 = scmp.ne.s32.totalorder %s93, %s107
      %p109 = scmp.eq.s32.totalorder %s20, 0
      %p110 = por %p108, %p109
      %s112 = sadd.s32 %s111, 1
      %p115 = scmp.eq.s32.totalorder %s14, 1
      %p116 = scmp.ne.s32.totalorder %s111, %s113
      %p117 = scmp.eq.s32.totalorder %s14, 0
      %p118 = por %p116, %p117
      %p119 = scmp.ne.s32.totalorder %s111, %s113
      %p120 = scmp.eq.s32.totalorder %s19, 1
      %p121 = por %p119, %p120
      %p122 = scmp.ne.s32.totalorder %s113, %s114
      %p123 = scmp.eq.s32.totalorder %s19, 0
      %p124 = por %p122, %p123
      %p125 = scmp.ne.s32.totalorder %s113, %s114
      %p126 = scmp.eq.s32.totalorder %s20, 1
      %p127 = por %p125, %p126
      %p129 = scmp.ne.s32.totalorder %s114, %s128
      %p130 = scmp.eq.s32.totalorder %s20, 0
      %p131 = por %p129, %p130
      %s133 = sadd.s32 %s132, 1
      %p136 = scmp.eq.s32.totalorder %s14, 1
      %p137 = scmp.ne.s32.totalorder %s132, %s134
      %p138 = scmp.eq.s32.totalorder %s14, 0
      %p139 = por %p137, %p138
      %p140 = scmp.ne.s32.totalorder %s132, %s134
      %p141 = scmp.eq.s32.totalorder %s19, 1
      %p142 = por %p140, %p141
      %p143 = scmp.ne.s32.totalorder %s134, %s135
      %p144 = scmp.eq.s32.totalorder %s19, 0
      %p145 = por %p143, %p144
      %p146 = scmp.ne.s32.totalorder %s134, %s135
      %p147 = scmp.eq.s32.totalorder %s20, 1
      %p148 = por %p146, %p147
      %p150 = scmp.ne.s32.totalorder %s135, %s149
      %p151 = scmp.eq.s32.totalorder %s20, 0
      %p152 = por %p150, %p151
      %s154 = sadd.s32 %s153, 1
      %p157 = scmp.eq.s32.totalorder %s14, 1
      %p158 = scmp.ne.s32.totalorder %s153, %s155
      %p159 = scmp.eq.s32.totalorder %s14, 0
      %p160 = por %p158, %p159
      %p161 = scmp.ne.s32.totalorder %s153, %s155
      %p162 = scmp.eq.s32.totalorder %s19, 1
      %p163 = por %p161, %p162
      %p164 = scmp.ne.s32.totalorder %s155, %s156
      %p165 = scmp.eq.s32.totalorder %s19, 0
      %p166 = por %p164, %p165
      %p167 = scmp.ne.s32.totalorder %s155, %s156
      %p168 = scmp.eq.s32.totalorder %s20, 1
      %p169 = por %p167, %p168
      %p171 = scmp.ne.s32.totalorder %s156, %s170
      %p172 = scmp.eq.s32.totalorder %s20, 0
      %p173 = por %p171, %p172
      %s174 = ssub.s32 %s14, %s21
      %p175 = scmp.eq.s32.totalorder %s174, 0
      %s177 = sadd.s32 %s176, 1
      %s178 = scalar_select %p175, %s176, %s177
      %p181 = pneg %p175
      %p182 = scmp.eq.s32.totalorder %s14, 1
      %p183 = por %p181, %p182
      %p184 = scmp.ne.s32.totalorder %s176, %s179
      %p185 = scmp.eq.s32.totalorder %s14, 0
      %p186 = por %p184, %p185
      %p187 = scmp.ne.s32.totalorder %s176, %s179
      %p188 = scmp.eq.s32.totalorder %s19, 1
      %p189 = por %p187, %p188
      %p190 = scmp.ne.s32.totalorder %s179, %s180
      %p191 = scmp.eq.s32.totalorder %s19, 0
      %p192 = por %p190, %p191
      %p193 = scmp.ne.s32.totalorder %s179, %s180
      %p194 = scmp.eq.s32.totalorder %s20, 1
      %p195 = por %p193, %p194
      %p197 = scmp.ne.s32.totalorder %s180, %s196
      %p198 = scmp.eq.s32.totalorder %s20, 0
      %p199 = por %p197, %p198
      %p200 = scmp.le.s32.totalorder 1, %s14
      %p201 = scmp.lt.s32.totalorder %s14, 3
      %p202 = pnand %p200, %p201
      %p203 = pneg %p202
      // Predicated region
      $region9: #{light_field_model_forward.1} parent=5 // pred_check
        _
      $region10: #{light_field_model_forward.1} parent=5 // pred_check_branch
        %205 = sbr.rel (%p202) target = $region12
      $region11: #{light_field_model_forward.1} parent=5 // pred_region
        %s206 = ssub.s32 %s14, 1
        // Predicated region
        $region13: #{light_field_model_forward.1} parent=11 // pred_check
          %p207 = pneg %p61
        $region14: #{light_field_model_forward.1} parent=11 // pred_check_branch
          %209 = sbr.rel (%p207) target = $region16
        $region15: #{light_field_model_forward.1} parent=11 // pred_region
          _
        $region16: #{light_field_model_forward.1} parent=11 // pred_fallthru
          _
        // Predicated region
        $region17: #{light_field_model_forward.1} parent=11 // pred_check
          %p210 = pneg %p82
        $region18: #{light_field_model_forward.1} parent=11 // pred_check_branch
          %212 = sbr.rel (%p210) target = $region20
        $region19: #{light_field_model_forward.1} parent=11 // pred_region
          _
        $region20: #{light_field_model_forward.1} parent=11 // pred_fallthru
          _
        // Predicated region
        $region21: #{light_field_model_forward.1} parent=11 // pred_check
          %p213 = pneg %p103
        $region22: #{light_field_model_forward.1} parent=11 // pred_check_branch
          %215 = sbr.rel (%p213) target = $region24
        $region23: #{light_field_model_forward.1} parent=11 // pred_region
          %s217 = ssub.s32 24576, 24576
          %218 = vsyncadd [#allocation3], %s217
          %s219 = sshll.u32 [#allocation2], 4
          %s220 = int_to_ptr.vmem [resolvable:$true] %s219
          %225 = dma.hbm_to_vmem [thread:$0]  %s3, 24576, %s220, [#allocation3], 128, 128, 8
        $region24: #{light_field_model_forward.1} parent=11 // pred_fallthru
          _
        // Predicated region
        $region25: #{light_field_model_forward.1} parent=11 // pred_check
          %p226 = pneg %p124
        $region26: #{light_field_model_forward.1} parent=11 // pred_check_branch
          %228 = sbr.rel (%p226) target = $region28
        $region27: #{light_field_model_forward.1} parent=11 // pred_region
          _
        $region28: #{light_field_model_forward.1} parent=11 // pred_fallthru
          _
        // Predicated region
        $region29: #{light_field_model_forward.1} parent=11 // pred_check
          %p229 = pneg %p145
        $region30: #{light_field_model_forward.1} parent=11 // pred_check_branch
          %231 = sbr.rel (%p229) target = $region32
        $region31: #{light_field_model_forward.1} parent=11 // pred_region
          _
        $region32: #{light_field_model_forward.1} parent=11 // pred_fallthru
          _
        // Predicated region
        $region33: #{light_field_model_forward.1} parent=11 // pred_check
          %p232 = pneg %p166
        $region34: #{light_field_model_forward.1} parent=11 // pred_check_branch
          %234 = sbr.rel (%p232) target = $region36
        $region35: #{light_field_model_forward.1} parent=11 // pred_region
          _
        $region36: #{light_field_model_forward.1} parent=11 // pred_fallthru
          _
      $region12: #{light_field_model_forward.1} parent=5 // pred_fallthru
        _
      %p235 = scmp.lt.s32.totalorder %s14, 2
      // Predicated region
      $region37: #{light_field_model_forward.1} parent=5 // pred_check
        %p236 = pneg %p235
      $region38: #{light_field_model_forward.1} parent=5 // pred_check_branch
        %238 = sbr.rel (%p236) target = $region40
      $region39: #{light_field_model_forward.1} parent=5 // pred_region
        // Predicated region
        $region41: #{light_field_model_forward.1} parent=39 // pred_check
          %p239 = pneg %p34
        $region42: #{light_field_model_forward.1} parent=39 // pred_check_branch
          %241 = sbr.rel (%p239) target = $region44
        $region43: #{light_field_model_forward.1} parent=39 // pred_region
          %s242 = smul.u32 16, %s14
          %p243 = scmp.lt.s32.totalorder %s242, 31
          %s244 = scalar_select %p243, %s242, 31
          %s245 = smul.addr %s244, 8
          %s246 = scalar_lea.vmem %s0, %s245
          %s247 = smul.u32 16, %s14
        $region44: #{light_field_model_forward.1} parent=39 // pred_fallthru
          _
      $region40: #{light_field_model_forward.1} parent=5 // pred_fallthru
        _
      %p248 = scmp.le.s32.totalorder 1, %s14
      %p249 = scmp.lt.s32.totalorder %s14, 3
      %p250 = pnand %p248, %p249
      %p251 = pneg %p250
      // Predicated region
      $region45: #{light_field_model_forward.1} parent=5 // pred_check
        _
      $region46: #{light_field_model_forward.1} parent=5 // pred_check_branch
        %253 = sbr.rel (%p250) target = $region48
      $region47: #{light_field_model_forward.1} parent=5 // pred_region
        %s254 = ssub.s32 %s14, 1
        // Predicated region
        $region49: #{light_field_model_forward.1} parent=47 // pred_check
          %p255 = pneg %p103
        $region50: #{light_field_model_forward.1} parent=47 // pred_check_branch
          %257 = sbr.rel (%p255) target = $region52
        $region51: #{light_field_model_forward.1} parent=47 // pred_region
          %258 = dma.done [#allocation3], 24576
        $region52: #{light_field_model_forward.1} parent=47 // pred_fallthru
          _
        %s259 = smul.u32 16, %s19
        %p260 = scmp.lt.s32.totalorder %s259, 31
        %s261 = scalar_select %p260, %s259, 31
        %s262 = smul.addr %s261, 8
        %s263 = scalar_lea.vmem %s0, %s262
        %p264 = pneg %p40
        %p265 = pneg %p37
        %p266 = pneg %p61
        %p267 = pneg %p58
        %p268 = pneg %p82
        %p269 = pneg %p79
        %p270 = pneg %p103
        %p271 = pneg %p100
        %p272 = pneg %p124
        %p273 = pneg %p121
        %p274 = pneg %p145
        %p275 = pneg %p142
        %p276 = pneg %p166
        %p277 = pneg %p163
        %p278 = pneg %p192
        %p279 = pneg %p189
        %s280 = smul.u32 16, %s19
        %p281 = scmp.lt.s32.totalorder %s280, 31
        %s282 = scalar_select %p281, %s280, 31
        %s283 = smul.addr %s282, 8
        %s284 = scalar_lea.vmem %s7, %s283
        %s285 = smul.u32 16, %s19
        %p286 = scmp.lt.s32.totalorder %s285, 31
        %s287 = scalar_select %p286, %s285, 31
        %s288 = smul.addr %s287, 8
        %s289 = scalar_lea.vmem %s0, %s288
        %s290 = smul.u32 16, %s19
        %s291 = smul.u32 16, %s19
        %p292 = scmp.lt.s32.totalorder %s291, 31
        %s293 = scalar_select %p292, %s291, 31
        %s294 = smul.addr %s293, 8
        %s295 = scalar_lea.vmem %s7, %s294
        %s296 = smul.u32 16, %s19
        %v298 = vld [vmem:[%s289] sm:$0xff]
        %v299 = vld [vmem:[%s289 + $0x8] sm:$0xff]
        %v300 = vld [vmem:[%s289 + $0x10] sm:$0xff]
        %v301 = vld [vmem:[%s289 + $0x18] sm:$0xff]
        %v302 = vld [vmem:[%s289 + $0x20] sm:$0xff]
        %v303 = vld [vmem:[%s289 + $0x28] sm:$0xff]
        %v304 = vld [vmem:[%s289 + $0x30] sm:$0xff]
        %v305 = vld [vmem:[%s289 + $0x38] sm:$0xff]
        %v306 = vld [vmem:[%s289 + $0x40] sm:$0xff]
        %v307 = vld [vmem:[%s289 + $0x48] sm:$0xff]
        %v308 = vld [vmem:[%s289 + $0x50] sm:$0xff]
        %v309 = vld [vmem:[%s289 + $0x58] sm:$0xff]
        %v310 = vld [vmem:[%s289 + $0x60] sm:$0xff]
        %v311 = vld [vmem:[%s289 + $0x68] sm:$0xff]
        %v312 = vld [vmem:[%s289 + $0x70] sm:$0xff]
        %v313 = vld [vmem:[%s289 + $0x78] sm:$0xff]
        %v314 = vpack.c.bf16 %v299, %v298
        %v315 = vpack.c.bf16 %v301, %v300
        %v316 = vpack.c.bf16 %v303, %v302
        %v317 = vpack.c.bf16 %v305, %v304
        %v318 = vpack.c.bf16 %v307, %v306
        %v319 = vpack.c.bf16 %v309, %v308
        %v320 = vpack.c.bf16 %v311, %v310
        %v321 = vpack.c.bf16 %v313, %v312
        %v322 = vld [vmem:[%s1] sm:$0xff]
        %v323 = vld [vmem:[%s2] sm:$0x3]
        %v325 = vlaneseq
        %v326 = vshrl.u32 %v325, 7
        %v327 = vsub.s32 0, %v326
        %v328 = vrot.slane %v323, %v327
        %v329 = vlaneseq
        %v330 = vshrl.u32 %v329, 7
        %v331 = vsub.s32 1, %v330
        %v332 = vrot.slane %v323, %v331
        %v336 = vunpack.c.l.b16 %v322
        %v337 = vunpack.c.h.b16 %v322
        %v338 = vpack.c.b16 %v336, %v336
        %v339 = vpack.c.b16 %v337, %v337
        %vm340 = vcmask 64512
        %v342 = vsel %vm340, %v314, 0
        %v345 = vsel %vm340, %v315, 0
        %v348 = vsel %vm340, %v316, 0
        %v351 = vsel %vm340, %v317, 0
        %v354 = vsel %vm340, %v318, 0
        %v357 = vsel %vm340, %v319, 0
        %v360 = vsel %vm340, %v320, 0
        %v363 = vsel %vm340, %v321, 0
        %vm365 = vcmask 1043456
        %v367 = vsel %vm365, %v338, 0
        %v370 = vsel %vm365, %v339, 0
        %372 = vmatprep.subr.bf16.mxu0 %v370
        %373 = vmatpush1.bf16.msra.mxu0 %v367
        %374 = vmatprep.subr.bf16.mxu0 0
        %375 = vmatpush1.bf16.msra.mxu0 0
        %376 = vmatprep.subr.bf16.mxu0 0
        %377 = vmatpush1.bf16.msra.mxu0 0
        %378 = vmatprep.subr.bf16.mxu0 0
        %379 = vmatpush1.bf16.msra.mxu0 0
        %380 = vmatprep.subr.bf16.mxu0 0
        %381 = vmatpush1.bf16.msra.mxu0 0
        %382 = vmatprep.subr.bf16.mxu0 0
        %383 = vmatpush1.bf16.msra.mxu0 0
        %384 = vmatprep.subr.bf16.mxu0 0
        %385 = vmatpush1.bf16.msra.mxu0 0
        %386 = vmatprep.subr.bf16.mxu0 0
        %387 = vmatpush1.bf16.msra.mxu0 0
        %388 = vmatprep.subr.bf16.mxu0 0
        %389 = vmatpush1.bf16.msra.mxu0 0
        %390 = vmatprep.subr.bf16.mxu0 0
        %391 = vmatpush1.bf16.msra.mxu0 0
        %392 = vmatprep.subr.bf16.mxu0 0
        %393 = vmatpush1.bf16.msra.mxu0 0
        %394 = vmatprep.subr.bf16.mxu0 0
        %395 = vmatpush1.bf16.msra.mxu0 0
        %396 = vmatprep.subr.bf16.mxu0 0
        %397 = vmatpush1.bf16.msra.mxu0 0
        %398 = vmatprep.subr.bf16.mxu0 0
        %399 = vmatpush1.bf16.msra.mxu0 0
        %400 = vmatprep.subr.bf16.mxu0 0
        %401 = vmatpush1.bf16.msra.mxu0 0
        %402 = vmatprep.subr.bf16.mxu0 0
        %403 = vmatpush1.bf16.msra.mxu0 0
        %404 = vmatprep.mubr.bf16.mxu0 0
        %405 = vmatmul.mubr.bf16.gmra.mrb[0].mxu0 %v342
        %v406 = vpop.f32.mrb[0].mxu0
        %v407 = vadd.f32 %v328, %v406
        %v408 = vpop.f32.mrb[0].mxu0
        %v409 = vadd.f32 %v332, %v408
        %v410 = vpop.f32.mrb[0].mxu0
        %v411 = vadd.f32 %v328, %v410
        %v412 = vpop.f32.mrb[0].mxu0
        %v413 = vadd.f32 %v332, %v412
        %414 = vmatprep.mubr.bf16.mxu0 0
        %415 = vmatmul.mubr.bf16.gmra.mrb[0].mxu0 %v345
        %v416 = vpop.f32.mrb[0].mxu0
        %v417 = vadd.f32 %v328, %v416
        %v418 = vpop.f32.mrb[0].mxu0
        %v419 = vadd.f32 %v332, %v418
        %v420 = vpop.f32.mrb[0].mxu0
        %v421 = vadd.f32 %v328, %v420
        %v422 = vpop.f32.mrb[0].mxu0
        %v423 = vadd.f32 %v332, %v422
        %424 = vmatprep.mubr.bf16.mxu0 0
        %425 = vmatmul.mubr.bf16.gmra.mrb[0].mxu0 %v348
        %v426 = vpop.f32.mrb[0].mxu0
        %v427 = vadd.f32 %v328, %v426
        %v428 = vpop.f32.mrb[0].mxu0
        %v429 = vadd.f32 %v332, %v428
        %v430 = vpop.f32.mrb[0].mxu0
        %v431 = vadd.f32 %v328, %v430
        %v432 = vpop.f32.mrb[0].mxu0
        %v433 = vadd.f32 %v332, %v432
        %434 = vmatprep.mubr.bf16.mxu0 0
        %435 = vmatmul.mubr.bf16.gmra.mrb[0].mxu0 %v351
        %v436 = vpop.f32.mrb[0].mxu0
        %v437 = vadd.f32 %v328, %v436
        %v438 = vpop.f32.mrb[0].mxu0
        %v439 = vadd.f32 %v332, %v438
        %v440 = vpop.f32.mrb[0].mxu0
        %v441 = vadd.f32 %v328, %v440
        %v442 = vpop.f32.mrb[0].mxu0
        %v443 = vadd.f32 %v332, %v442
        %444 = vmatprep.mubr.bf16.mxu0 0
        %445 = vmatmul.mubr.bf16.gmra.mrb[0].mxu0 %v354
        %v446 = vpop.f32.mrb[0].mxu0
        %v447 = vadd.f32 %v328, %v446
        %v448 = vpop.f32.mrb[0].mxu0
        %v449 = vadd.f32 %v332, %v448
        %v450 = vpop.f32.mrb[0].mxu0
        %v451 = vadd.f32 %v328, %v450
        %v452 = vpop.f32.mrb[0].mxu0
        %v453 = vadd.f32 %v332, %v452
        %454 = vmatprep.mubr.bf16.mxu0 0
        %455 = vmatmul.mubr.bf16.gmra.mrb[0].mxu0 %v357
        %v456 = vpop.f32.mrb[0].mxu0
        %v457 = vadd.f32 %v328, %v456
        %v458 = vpop.f32.mrb[0].mxu0
        %v459 = vadd.f32 %v332, %v458
        %v460 = vpop.f32.mrb[0].mxu0
        %v461 = vadd.f32 %v328, %v460
        %v462 = vpop.f32.mrb[0].mxu0
        %v463 = vadd.f32 %v332, %v462
        %464 = vmatprep.mubr.bf16.mxu0 0
        %465 = vmatmul.mubr.bf16.gmra.mrb[0].mxu0 %v360
        %v466 = vpop.f32.mrb[0].mxu0
        %v467 = vadd.f32 %v328, %v466
        %v468 = vpop.f32.mrb[0].mxu0
        %v469 = vadd.f32 %v332, %v468
        %v470 = vpop.f32.mrb[0].mxu0
        %v471 = vadd.f32 %v328, %v470
        %v472 = vpop.f32.mrb[0].mxu0
        %v473 = vadd.f32 %v332, %v472
        %474 = vmatprep.mubr.bf16.mxu0 0
        %475 = vmatmul.mubr.bf16.gmra.mrb[0].mxu0 %v363
        %v476 = vpop.f32.mrb[0].mxu0
        %v477 = vadd.f32 %v328, %v476
        %v478 = vpop.f32.mrb[0].mxu0
        %v479 = vadd.f32 %v332, %v478
        %v480 = vpop.f32.mrb[0].mxu0
        %v481 = vadd.f32 %v328, %v480
        %v482 = vpop.f32.mrb[0].mxu0
        %v483 = vadd.f32 %v332, %v482
        %484 = vdwg.mxu0
        %v485 = vadd.f32 %v407, %v409
        %486 = vadd.xlane.f32.xlu0 %v485
        %v487 = vpop.xlane.xlu0 %486
        %v488 = vadd.f32 %v411, %v413
        %489 = vadd.xlane.f32.xlu0 %v488
        %v490 = vpop.xlane.xlu0 %489
        %v491 = vadd.f32 %v417, %v419
        %492 = vadd.xlane.f32.xlu0 %v491
        %v493 = vpop.xlane.xlu0 %492
        %v494 = vadd.f32 %v421, %v423
        %495 = vadd.xlane.f32.xlu0 %v494
        %v496 = vpop.xlane.xlu0 %495
        %v497 = vadd.f32 %v427, %v429
        %498 = vadd.xlane.f32.xlu0 %v497
        %v499 = vpop.xlane.xlu0 %498
        %v500 = vadd.f32 %v431, %v433
        %501 = vadd.xlane.f32.xlu0 %v500
        %v502 = vpop.xlane.xlu0 %501
        %v503 = vadd.f32 %v437, %v439
        %504 = vadd.xlane.f32.xlu0 %v503
        %v505 = vpop.xlane.xlu0 %504
        %v506 = vadd.f32 %v441, %v443
        %507 = vadd.xlane.f32.xlu0 %v506
        %v508 = vpop.xlane.xlu0 %507
        %v509 = vadd.f32 %v447, %v449
        %510 = vadd.xlane.f32.xlu0 %v509
        %v511 = vpop.xlane.xlu0 %510
        %v512 = vadd.f32 %v451, %v453
        %513 = vadd.xlane.f32.xlu0 %v512
        %v514 = vpop.xlane.xlu0 %513
        %v515 = vadd.f32 %v457, %v459
        %516 = vadd.xlane.f32.xlu0 %v515
        %v517 = vpop.xlane.xlu0 %516
        %v518 = vadd.f32 %v461, %v463
        %519 = vadd.xlane.f32.xlu0 %v518
        %v520 = vpop.xlane.xlu0 %519
        %v521 = vadd.f32 %v467, %v469
        %522 = vadd.xlane.f32.xlu0 %v521
        %v523 = vpop.xlane.xlu0 %522
        %v524 = vadd.f32 %v471, %v473
        %525 = vadd.xlane.f32.xlu0 %v524
        %v526 = vpop.xlane.xlu0 %525
        %v527 = vadd.f32 %v477, %v479
        %528 = vadd.xlane.f32.xlu0 %v527
        %v529 = vpop.xlane.xlu0 %528
        %v530 = vadd.f32 %v481, %v483
        %531 = vadd.xlane.f32.xlu0 %v530
        %v532 = vpop.xlane.xlu0 %531
        %v533 = vrcp.pop 256.0
        %v534 = vmul.f32 %v487, %v533
        %v535 = vmul.f32 %v490, %v533
        %v536 = vmul.f32 %v493, %v533
        %v537 = vmul.f32 %v496, %v533
        %v538 = vmul.f32 %v499, %v533
        %v539 = vmul.f32 %v502, %v533
        %v540 = vmul.f32 %v505, %v533
        %v541 = vmul.f32 %v508, %v533
        %v542 = vmul.f32 %v511, %v533
        %v543 = vmul.f32 %v514, %v533
        %v544 = vmul.f32 %v517, %v533
        %v545 = vmul.f32 %v520, %v533
        %v546 = vmul.f32 %v523, %v533
        %v547 = vmul.f32 %v526, %v533
        %v548 = vmul.f32 %v529, %v533
        %v549 = vmul.f32 %v532, %v533
        %v550 = vmul.f32 %v407, %v407
        %v551 = vmul.f32 %v409, %v409
        %v552 = vmul.f32 %v411, %v411
        %v553 = vmul.f32 %v413, %v413
        %v554 = vmul.f32 %v417, %v417
        %v555 = vmul.f32 %v419, %v419
        %v556 = vmul.f32 %v421, %v421
        %v557 = vmul.f32 %v423, %v423
        %v558 = vmul.f32 %v427, %v427
        %v559 = vmul.f32 %v429, %v429
        %v560 = vmul.f32 %v431, %v431
        %v561 = vmul.f32 %v433, %v433
        %v562 = vmul.f32 %v437, %v437
        %v563 = vmul.f32 %v439, %v439
        %v564 = vmul.f32 %v441, %v441
        %v565 = vmul.f32 %v443, %v443
        %v566 = vmul.f32 %v447, %v447
        %v567 = vmul.f32 %v449, %v449
        %v568 = vmul.f32 %v451, %v451
        %v569 = vmul.f32 %v453, %v453
        %v570 = vmul.f32 %v457, %v457
        %v571 = vmul.f32 %v459, %v459
        %v572 = vmul.f32 %v461, %v461
        %v573 = vmul.f32 %v463, %v463
        %v574 = vmul.f32 %v467, %v467
        %v575 = vmul.f32 %v469, %v469
        %v576 = vmul.f32 %v471, %v471
        %v577 = vmul.f32 %v473, %v473
        %v578 = vmul.f32 %v477, %v477
        %v579 = vmul.f32 %v479, %v479
        %v580 = vmul.f32 %v481, %v481
        %v581 = vmul.f32 %v483, %v483
        %v582 = vadd.f32 %v550, %v551
        %583 = vadd.xlane.f32.xlu0 %v582
        %v584 = vpop.xlane.xlu0 %583
        %v585 = vadd.f32 %v552, %v553
        %586 = vadd.xlane.f32.xlu0 %v585
        %v587 = vpop.xlane.xlu0 %586
        %v588 = vadd.f32 %v554, %v555
        %589 = vadd.xlane.f32.xlu0 %v588
        %v590 = vpop.xlane.xlu0 %589
        %v591 = vadd.f32 %v556, %v557
        %592 = vadd.xlane.f32.xlu0 %v591
        %v593 = vpop.xlane.xlu0 %592
        %v594 = vadd.f32 %v558, %v559
        %595 = vadd.xlane.f32.xlu0 %v594
        %v596 = vpop.xlane.xlu0 %595
        %v597 = vadd.f32 %v560, %v561
        %598 = vadd.xlane.f32.xlu0 %v597
        %v599 = vpop.xlane.xlu0 %598
        %v600 = vadd.f32 %v562, %v563
        %601 = vadd.xlane.f32.xlu0 %v600
        %v602 = vpop.xlane.xlu0 %601
        %v603 = vadd.f32 %v564, %v565
        %604 = vadd.xlane.f32.xlu0 %v603
        %v605 = vpop.xlane.xlu0 %604
        %v606 = vadd.f32 %v566, %v567
        %607 = vadd.xlane.f32.xlu0 %v606
        %v608 = vpop.xlane.xlu0 %607
        %v609 = vadd.f32 %v568, %v569
        %610 = vadd.xlane.f32.xlu0 %v609
        %v611 = vpop.xlane.xlu0 %610
        %v612 = vadd.f32 %v570, %v571
        %613 = vadd.xlane.f32.xlu0 %v612
        %v614 = vpop.xlane.xlu0 %613
        %v615 = vadd.f32 %v572, %v573
        %616 = vadd.xlane.f32.xlu0 %v615
        %v617 = vpop.xlane.xlu0 %616
        %v618 = vadd.f32 %v574, %v575
        %619 = vadd.xlane.f32.xlu0 %v618
        %v620 = vpop.xlane.xlu0 %619
        %v621 = vadd.f32 %v576, %v577
        %622 = vadd.xlane.f32.xlu0 %v621
        %v623 = vpop.xlane.xlu0 %622
        %v624 = vadd.f32 %v578, %v579
        %625 = vadd.xlane.f32.xlu0 %v624
        %v626 = vpop.xlane.xlu0 %625
        %v627 = vadd.f32 %v580, %v581
        %628 = vadd.xlane.f32.xlu0 %v627
        %v629 = vpop.xlane.xlu0 %628
        %v630 = vmul.f32 %v584, %v533
        %v631 = vmul.f32 %v587, %v533
        %v632 = vmul.f32 %v590, %v533
        %v633 = vmul.f32 %v593, %v533
        %v634 = vmul.f32 %v596, %v533
        %v635 = vmul.f32 %v599, %v533
        %v636 = vmul.f32 %v602, %v533
        %v637 = vmul.f32 %v605, %v533
        %v638 = vmul.f32 %v608, %v533
        %v639 = vmul.f32 %v611, %v533
        %v640 = vmul.f32 %v614, %v533
        %v641 = vmul.f32 %v617, %v533
        %v642 = vmul.f32 %v620, %v533
        %v643 = vmul.f32 %v623, %v533
        %v644 = vmul.f32 %v626, %v533
        %v645 = vmul.f32 %v629, %v533
        %v646 = vmul.f32 %v534, %v534
        %v647 = vmul.f32 %v535, %v535
        %v648 = vmul.f32 %v536, %v536
        %v649 = vmul.f32 %v537, %v537
        %v650 = vmul.f32 %v538, %v538
        %v651 = vmul.f32 %v539, %v539
        %v652 = vmul.f32 %v540, %v540
        %v653 = vmul.f32 %v541, %v541
        %v654 = vmul.f32 %v542, %v542
        %v655 = vmul.f32 %v543, %v543
        %v656 = vmul.f32 %v544, %v544
        %v657 = vmul.f32 %v545, %v545
        %v658 = vmul.f32 %v546, %v546
        %v659 = vmul.f32 %v547, %v547
        %v660 = vmul.f32 %v548, %v548
        %v661 = vmul.f32 %v549, %v549
        %v662 = vsub.f32 %v630, %v646
        %v663 = vsub.f32 %v631, %v647
        %v664 = vsub.f32 %v632, %v648
        %v665 = vsub.f32 %v633, %v649
        %v666 = vsub.f32 %v634, %v650
        %v667 = vsub.f32 %v635, %v651
        %v668 = vsub.f32 %v636, %v652
        %v669 = vsub.f32 %v637, %v653
        %v670 = vsub.f32 %v638, %v654
        %v671 = vsub.f32 %v639, %v655
        %v672 = vsub.f32 %v640, %v656
        %v673 = vsub.f32 %v641, %v657
        %v674 = vsub.f32 %v642, %v658
        %v675 = vsub.f32 %v643, %v659
        %v676 = vsub.f32 %v644, %v660
        %v677 = vsub.f32 %v645, %v661
        %v678 = vmax.f32 %v662, 0.0
        %v679 = vmax.f32 %v663, 0.0
        %v680 = vmax.f32 %v664, 0.0
        %v681 = vmax.f32 %v665, 0.0
        %v682 = vmax.f32 %v666, 0.0
        %v683 = vmax.f32 %v667, 0.0
        %v684 = vmax.f32 %v668, 0.0
        %v685 = vmax.f32 %v669, 0.0
        %v686 = vmax.f32 %v670, 0.0
        %v687 = vmax.f32 %v671, 0.0
        %v688 = vmax.f32 %v672, 0.0
        %v689 = vmax.f32 %v673, 0.0
        %v690 = vmax.f32 %v674, 0.0
        %v691 = vmax.f32 %v675, 0.0
        %v692 = vmax.f32 %v676, 0.0
        %v693 = vmax.f32 %v677, 0.0
        %v694 = vsub.f32 %v407, %v534
        %v695 = vsub.f32 %v409, %v534
        %v696 = vsub.f32 %v411, %v535
        %v697 = vsub.f32 %v413, %v535
        %v698 = vsub.f32 %v417, %v536
        %v699 = vsub.f32 %v419, %v536
        %v700 = vsub.f32 %v421, %v537
        %v701 = vsub.f32 %v423, %v537
        %v702 = vsub.f32 %v427, %v538
        %v703 = vsub.f32 %v429, %v538
        %v704 = vsub.f32 %v431, %v539
        %v705 = vsub.f32 %v433, %v539
        %v706 = vsub.f32 %v437, %v540
        %v707 = vsub.f32 %v439, %v540
        %v708 = vsub.f32 %v441, %v541
        %v709 = vsub.f32 %v443, %v541
        %v710 = vsub.f32 %v447, %v542
        %v711 = vsub.f32 %v449, %v542
        %v712 = vsub.f32 %v451, %v543
        %v713 = vsub.f32 %v453, %v543
        %v714 = vsub.f32 %v457, %v544
        %v715 = vsub.f32 %v459, %v544
        %v716 = vsub.f32 %v461, %v545
        %v717 = vsub.f32 %v463, %v545
        %v718 = vsub.f32 %v467, %v546
        %v719 = vsub.f32 %v469, %v546
        %v720 = vsub.f32 %v471, %v547
        %v721 = vsub.f32 %v473, %v547
        %v722 = vsub.f32 %v477, %v548
        %v723 = vsub.f32 %v479, %v548
        %v724 = vsub.f32 %v481, %v549
        %v725 = vsub.f32 %v483, %v549
        %v726 = vadd.f32 %v678, 1e-05
        %v727 = vadd.f32 %v679, 1e-05
        %v728 = vadd.f32 %v680, 1e-05
        %v729 = vadd.f32 %v681, 1e-05
        %v730 = vadd.f32 %v682, 1e-05
        %v731 = vadd.f32 %v683, 1e-05
        %v732 = vadd.f32 %v684, 1e-05
        %v733 = vadd.f32 %v685, 1e-05
        %v734 = vadd.f32 %v686, 1e-05
        %v735 = vadd.f32 %v687, 1e-05
        %v736 = vadd.f32 %v688, 1e-05
        %v737 = vadd.f32 %v689, 1e-05
        %v738 = vadd.f32 %v690, 1e-05
        %v739 = vadd.f32 %v691, 1e-05
        %v740 = vadd.f32 %v692, 1e-05
        %v741 = vadd.f32 %v693, 1e-05
        %v742 = vrsqrt.pop %v726
        %v743 = vrsqrt.pop %v727
        %v744 = vrsqrt.pop %v728
        %v745 = vrsqrt.pop %v729
        %v746 = vrsqrt.pop %v730
        %v747 = vrsqrt.pop %v731
        %v748 = vrsqrt.pop %v732
        %v749 = vrsqrt.pop %v733
        %v750 = vrsqrt.pop %v734
        %v751 = vrsqrt.pop %v735
        %v752 = vrsqrt.pop %v736
        %v753 = vrsqrt.pop %v737
        %v754 = vrsqrt.pop %v738
        %v755 = vrsqrt.pop %v739
        %v756 = vrsqrt.pop %v740
        %v757 = vrsqrt.pop %v741
        %v758 = vmul.f32 %v694, %v742
        %v759 = vmul.f32 %v695, %v742
        %v760 = vmul.f32 %v696, %v743
        %v761 = vmul.f32 %v697, %v743
        %v762 = vmul.f32 %v698, %v744
        %v763 = vmul.f32 %v699, %v744
        %v764 = vmul.f32 %v700, %v745
        %v765 = vmul.f32 %v701, %v745
        %v766 = vmul.f32 %v702, %v746
        %v767 = vmul.f32 %v703, %v746
        %v768 = vmul.f32 %v704, %v747
        %v769 = vmul.f32 %v705, %v747
        %v770 = vmul.f32 %v706, %v748
        %v771 = vmul.f32 %v707, %v748
        %v772 = vmul.f32 %v708, %v749
        %v773 = vmul.f32 %v709, %v749
        %v774 = vmul.f32 %v710, %v750
        %v775 = vmul.f32 %v711, %v750
        %v776 = vmul.f32 %v712, %v751
        %v777 = vmul.f32 %v713, %v751
        %v778 = vmul.f32 %v714, %v752
        %v779 = vmul.f32 %v715, %v752
        %v780 = vmul.f32 %v716, %v753
        %v781 = vmul.f32 %v717, %v753
        %v782 = vmul.f32 %v718, %v754
        %v783 = vmul.f32 %v719, %v754
        %v784 = vmul.f32 %v720, %v755
        %v785 = vmul.f32 %v721, %v755
        %v786 = vmul.f32 %v722, %v756
        %v787 = vmul.f32 %v723, %v756
        %v788 = vmul.f32 %v724, %v757
        %v789 = vmul.f32 %v725, %v757
        %v790 = vmax.f32 %v758, 0.0
        %v791 = vmax.f32 %v759, 0.0
        %v792 = vmax.f32 %v760, 0.0
        %v793 = vmax.f32 %v761, 0.0
        %v794 = vmax.f32 %v762, 0.0
        %v795 = vmax.f32 %v763, 0.0
        %v796 = vmax.f32 %v764, 0.0
        %v797 = vmax.f32 %v765, 0.0
        %v798 = vmax.f32 %v766, 0.0
        %v799 = vmax.f32 %v767, 0.0
        %v800 = vmax.f32 %v768, 0.0
        %v801 = vmax.f32 %v769, 0.0
        %v802 = vmax.f32 %v770, 0.0
        %v803 = vmax.f32 %v771, 0.0
        %v804 = vmax.f32 %v772, 0.0
        %v805 = vmax.f32 %v773, 0.0
        %v806 = vmax.f32 %v774, 0.0
        %v807 = vmax.f32 %v775, 0.0
        %v808 = vmax.f32 %v776, 0.0
        %v809 = vmax.f32 %v777, 0.0
        %v810 = vmax.f32 %v778, 0.0
        %v811 = vmax.f32 %v779, 0.0
        %v812 = vmax.f32 %v780, 0.0
        %v813 = vmax.f32 %v781, 0.0
        %v814 = vmax.f32 %v782, 0.0
        %v815 = vmax.f32 %v783, 0.0
        %v816 = vmax.f32 %v784, 0.0
        %v817 = vmax.f32 %v785, 0.0
        %v818 = vmax.f32 %v786, 0.0
        %v819 = vmax.f32 %v787, 0.0
        %v820 = vmax.f32 %v788, 0.0
        %v821 = vmax.f32 %v789, 0.0
        %v822 = vld [vmem:[%s4] sm:$0x3f]
        %v823 = vld [vmem:[%s4 + $0x8] sm:$0x3f]
        %v824 = vpack.c.bf16 %v792, %v790
        %v825 = vpack.c.bf16 %v793, %v791
        %v826 = vpack.c.bf16 %v796, %v794
        %v827 = vpack.c.bf16 %v797, %v795
        %v828 = vpack.c.bf16 %v800, %v798
        %v829 = vpack.c.bf16 %v801, %v799
        %v830 = vpack.c.bf16 %v804, %v802
        %v831 = vpack.c.bf16 %v805, %v803
        %v832 = vpack.c.bf16 %v808, %v806
        %v833 = vpack.c.bf16 %v809, %v807
        %v834 = vpack.c.bf16 %v812, %v810
        %v835 = vpack.c.bf16 %v813, %v811
        %v836 = vpack.c.bf16 %v816, %v814
        %v837 = vpack.c.bf16 %v817, %v815
        %v838 = vpack.c.bf16 %v820, %v818
        %v839 = vpack.c.bf16 %v821, %v819
        %v840 = vld [vmem:[#allocation2] sm:$0xff]
        %v841 = vld [vmem:[#allocation2 + $0x8] sm:$0xff]
        %v842 = vld [vmem:[#allocation2 + $0x10] sm:$0xff]
        %v843 = vld [vmem:[#allocation2 + $0x18] sm:$0xff]
        %v844 = vld [vmem:[#allocation2 + $0x20] sm:$0xff]
        %v845 = vld [vmem:[#allocation2 + $0x28] sm:$0xff]
        %v846 = vld [vmem:[#allocation2 + $0x30] sm:$0xff]
        %v847 = vld [vmem:[#allocation2 + $0x38] sm:$0xff]
        %v848 = vld [vmem:[#allocation2 + $0x40] sm:$0xff]
        %v849 = vld [vmem:[#allocation2 + $0x48] sm:$0xff]
        %v850 = vld [vmem:[#allocation2 + $0x50] sm:$0xff]
        %v851 = vld [vmem:[#allocation2 + $0x58] sm:$0xff]
        %v852 = vld [vmem:[#allocation2 + $0x60] sm:$0xff]
        %v853 = vld [vmem:[#allocation2 + $0x68] sm:$0xff]
        %v854 = vld [vmem:[#allocation2 + $0x70] sm:$0xff]
        %v855 = vld [vmem:[#allocation2 + $0x78] sm:$0xff]
        %v856 = vld [vmem:[#allocation2 + $0x80] sm:$0xff]
        %v857 = vld [vmem:[#allocation2 + $0x88] sm:$0xff]
        %v858 = vld [vmem:[#allocation2 + $0x90] sm:$0xff]
        %v859 = vld [vmem:[#allocation2 + $0x98] sm:$0xff]
        %v860 = vld [vmem:[#allocation2 + $0xa0] sm:$0xff]
        %v861 = vld [vmem:[#allocation2 + $0xa8] sm:$0xff]
        %v862 = vld [vmem:[#allocation2 + $0xb0] sm:$0xff]
        %v863 = vld [vmem:[#allocation2 + $0xb8] sm:$0xff]
        %v864 = vld [vmem:[#allocation2 + $0xc0] sm:$0xff]
        %v865 = vld [vmem:[#allocation2 + $0xc8] sm:$0xff]
        %v866 = vld [vmem:[#allocation2 + $0xd0] sm:$0xff]
        %v867 = vld [vmem:[#allocation2 + $0xd8] sm:$0xff]
        %v868 = vld [vmem:[#allocation2 + $0xe0] sm:$0xff]
        %v869 = vld [vmem:[#allocation2 + $0xe8] sm:$0xff]
        %v870 = vld [vmem:[#allocation2 + $0xf0] sm:$0xff]
        %v871 = vld [vmem:[#allocation2 + $0xf8] sm:$0xff]
        %v872 = vlaneseq
        %v873 = vshrl.u32 %v872, 7
        %v874 = vsub.s32 0, %v873
        %v875 = vrot.slane %v822, %v874
        %v876 = vlaneseq
        %v877 = vshrl.u32 %v876, 7
        %v878 = vsub.s32 0, %v877
        %v879 = vrot.slane %v823, %v878
        %v912 = vunpack.c.l.b16 %v840
        %v913 = vunpack.c.h.b16 %v840
        %v914 = vunpack.c.l.b16 %v841
        %v915 = vunpack.c.h.b16 %v841
        %v916 = vunpack.c.l.b16 %v842
        %v917 = vunpack.c.h.b16 %v842
        %v918 = vunpack.c.l.b16 %v843
        %v919 = vunpack.c.h.b16 %v843
        %v920 = vunpack.c.l.b16 %v844
        %v921 = vunpack.c.h.b16 %v844
        %v922 = vunpack.c.l.b16 %v845
        %v923 = vunpack.c.h.b16 %v845
        %v924 = vunpack.c.l.b16 %v846
        %v925 = vunpack.c.h.b16 %v846
        %v926 = vunpack.c.l.b16 %v847
        %v927 = vunpack.c.h.b16 %v847
        %v928 = vunpack.c.l.b16 %v848
        %v929 = vunpack.c.h.b16 %v848
        %v930 = vunpack.c.l.b16 %v849
        %v931 = vunpack.c.h.b16 %v849
        %v932 = vunpack.c.l.b16 %v850
        %v933 = vunpack.c.h.b16 %v850
        %v934 = vunpack.c.l.b16 %v851
        %v935 = vunpack.c.h.b16 %v851
        %v936 = vunpack.c.l.b16 %v852
        %v937 = vunpack.c.h.b16 %v852
        %v938 = vunpack.c.l.b16 %v853
        %v939 = vunpack.c.h.b16 %v853
        %v940 = vunpack.c.l.b16 %v854
        %v941 = vunpack.c.h.b16 %v854
        %v942 = vunpack.c.l.b16 %v855
        %v943 = vunpack.c.h.b16 %v855
        %v944 = vunpack.c.l.b16 %v856
        %v945 = vunpack.c.h.b16 %v856
        %v946 = vunpack.c.l.b16 %v857
        %v947 = vunpack.c.h.b16 %v857
        %v948 = vunpack.c.l.b16 %v858
        %v949 = vunpack.c.h.b16 %v858
        %v950 = vunpack.c.l.b16 %v859
        %v951 = vunpack.c.h.b16 %v859
        %v952 = vunpack.c.l.b16 %v860
        %v953 = vunpack.c.h.b16 %v860
        %v954 = vunpack.c.l.b16 %v861
        %v955 = vunpack.c.h.b16 %v861
        %v956 = vunpack.c.l.b16 %v862
        %v957 = vunpack.c.h.b16 %v862
        %v958 = vunpack.c.l.b16 %v863
        %v959 = vunpack.c.h.b16 %v863
        %v960 = vunpack.c.l.b16 %v864
        %v961 = vunpack.c.h.b16 %v864
        %v962 = vunpack.c.l.b16 %v865
        %v963 = vunpack.c.h.b16 %v865
        %v964 = vunpack.c.l.b16 %v866
        %v965 = vunpack.c.h.b16 %v866
        %v966 = vunpack.c.l.b16 %v867
        %v967 = vunpack.c.h.b16 %v867
        %v968 = vunpack.c.l.b16 %v868
        %v969 = vunpack.c.h.b16 %v868
        %v970 = vunpack.c.l.b16 %v869
        %v971 = vunpack.c.h.b16 %v869
        %v972 = vunpack.c.l.b16 %v870
        %v973 = vunpack.c.h.b16 %v870
        %v974 = vunpack.c.l.b16 %v871
        %v975 = vunpack.c.h.b16 %v871
        %v976 = vpack.c.b16 %v914, %v912
        %v977 = vpack.c.b16 %v915, %v913
        %v978 = vpack.c.b16 %v918, %v916
        %v979 = vpack.c.b16 %v919, %v917
        %v980 = vpack.c.b16 %v922, %v920
        %v981 = vpack.c.b16 %v923, %v921
        %v982 = vpack.c.b16 %v926, %v924
        %v983 = vpack.c.b16 %v927, %v925
        %v984 = vpack.c.b16 %v930, %v928
        %v985 = vpack.c.b16 %v931, %v929
        %v986 = vpack.c.b16 %v934, %v932
        %v987 = vpack.c.b16 %v935, %v933
        %v988 = vpack.c.b16 %v938, %v936
        %v989 = vpack.c.b16 %v939, %v937
        %v990 = vpack.c.b16 %v942, %v940
        %v991 = vpack.c.b16 %v943, %v941
        %v992 = vpack.c.b16 %v946, %v944
        %v993 = vpack.c.b16 %v947, %v945
        %v994 = vpack.c.b16 %v950, %v948
        %v995 = vpack.c.b16 %v951, %v949
        %v996 = vpack.c.b16 %v954, %v952
        %v997 = vpack.c.b16 %v955, %v953
        %v998 = vpack.c.b16 %v958, %v956
        %v999 = vpack.c.b16 %v959, %v957
        %v1000 = vpack.c.b16 %v962, %v960
        %v1001 = vpack.c.b16 %v963, %v961
        %v1002 = vpack.c.b16 %v966, %v964
        %v1003 = vpack.c.b16 %v967, %v965
        %v1004 = vpack.c.b16 %v970, %v968
        %v1005 = vpack.c.b16 %v971, %v969
        %v1006 = vpack.c.b16 %v974, %v972
        %v1007 = vpack.c.b16 %v975, %v973
        %1040 = vmatprep.subr.bf16.mxu0 %v977
        %1041 = vmatpush1.bf16.msra.mxu0 %v976
        %1042 = vmatprep.subr.bf16.mxu0 %v979
        %1043 = vmatpush1.bf16.msra.mxu0 %v978
        %1044 = vmatprep.subr.bf16.mxu0 %v981
        %1045 = vmatpush1.bf16.msra.mxu0 %v980
        %1046 = vmatprep.subr.bf16.mxu0 %v983
        %1047 = vmatpush1.bf16.msra.mxu0 %v982
        %1048 = vmatprep.subr.bf16.mxu0 %v985
        %1049 = vmatpush1.bf16.msra.mxu0 %v984
        %1050 = vmatprep.subr.bf16.mxu0 %v987
        %1051 = vmatpush1.bf16.msra.mxu0 %v986
        %1052 = vmatprep.subr.bf16.mxu0 %v989
        %1053 = vmatpush1.bf16.msra.mxu0 %v988
        %1054 = vmatprep.subr.bf16.mxu0 %v991
        %1055 = vmatpush1.bf16.msra.mxu0 %v990
        %1056 = vmatprep.subr.bf16.mxu0 %v993
        %1057 = vmatpush1.bf16.msra.mxu0 %v992
        %1058 = vmatprep.subr.bf16.mxu0 %v995
        %1059 = vmatpush1.bf16.msra.mxu0 %v994
        %1060 = vmatprep.subr.bf16.mxu0 %v997
        %1061 = vmatpush1.bf16.msra.mxu0 %v996
        %1062 = vmatprep.subr.bf16.mxu0 %v999
        %1063 = vmatpush1.bf16.msra.mxu0 %v998
        %1064 = vmatprep.subr.bf16.mxu0 %v1001
        %1065 = vmatpush1.bf16.msra.mxu0 %v1000
        %1066 = vmatprep.subr.bf16.mxu0 %v1003
        %1067 = vmatpush1.bf16.msra.mxu0 %v1002
        %1068 = vmatprep.subr.bf16.mxu0 %v1005
        %1069 = vmatpush1.bf16.msra.mxu0 %v1004
        %1070 = vmatprep.subr.bf16.mxu0 %v1007
        %1071 = vmatpush1.bf16.msra.mxu0 %v1006
        %1072 = vmatprep.mubr.bf16.mxu0 %v825
        %1073 = vmatmul.mubr.bf16.gmra.mrb[0].mxu0 %v824
        %v1074 = vpop.f32.mrb[0].mxu0
        %v1075 = vadd.f32 %v875, %v1074
        %v1076 = vpop.f32.mrb[0].mxu0
        %v1077 = vadd.f32 %v879, %v1076
        %v1078 = vpop.f32.mrb[0].mxu0
        %v1079 = vadd.f32 %v875, %v1078
        %v1080 = vpop.f32.mrb[0].mxu0
        %v1081 = vadd.f32 %v879, %v1080
        %1082 = vmatprep.mubr.bf16.mxu0 %v827
        %1083 = vmatmul.mubr.bf16.gmra.mrb[0].mxu0 %v826
        %v1084 = vpop.f32.mrb[0].mxu0
        %v1085 = vadd.f32 %v875, %v1084
        %v1086 = vpop.f32.mrb[0].mxu0
        %v1087 = vadd.f32 %v879, %v1086
        %v1088 = vpop.f32.mrb[0].mxu0
        %v1089 = vadd.f32 %v875, %v1088
        %v1090 = vpop.f32.mrb[0].mxu0
        %v1091 = vadd.f32 %v879, %v1090
        %1092 = vmatprep.mubr.bf16.mxu0 %v829
        %1093 = vmatmul.mubr.bf16.gmra.mrb[0].mxu0 %v828
        %v1094 = vpop.f32.mrb[0].mxu0
        %v1095 = vadd.f32 %v875, %v1094
        %v1096 = vpop.f32.mrb[0].mxu0
        %v1097 = vadd.f32 %v879, %v1096
        %v1098 = vpop.f32.mrb[0].mxu0
        %v1099 = vadd.f32 %v875, %v1098
        %v1100 = vpop.f32.mrb[0].mxu0
        %v1101 = vadd.f32 %v879, %v1100
        %1102 = vmatprep.mubr.bf16.mxu0 %v831
        %1103 = vmatmul.mubr.bf16.gmra.mrb[0].mxu0 %v830
        %v1104 = vpop.f32.mrb[0].mxu0
        %v1105 = vadd.f32 %v875, %v1104
        %v1106 = vpop.f32.mrb[0].mxu0
        %v1107 = vadd.f32 %v879, %v1106
        %v1108 = vpop.f32.mrb[0].mxu0
        %v1109 = vadd.f32 %v875, %v1108
        %v1110 = vpop.f32.mrb[0].mxu0
        %v1111 = vadd.f32 %v879, %v1110
        %1112 = vmatprep.mubr.bf16.mxu0 %v833
        %1113 = vmatmul.mubr.bf16.gmra.mrb[0].mxu0 %v832
        %v1114 = vpop.f32.mrb[0].mxu0
        %v1115 = vadd.f32 %v875, %v1114
        %v1116 = vpop.f32.mrb[0].mxu0
        %v1117 = vadd.f32 %v879, %v1116
        %v1118 = vpop.f32.mrb[0].mxu0
        %v1119 = vadd.f32 %v875, %v1118
        %v1120 = vpop.f32.mrb[0].mxu0
        %v1121 = vadd.f32 %v879, %v1120
        %1122 = vmatprep.mubr.bf16.mxu0 %v835
        %1123 = vmatmul.mubr.bf16.gmra.mrb[0].mxu0 %v834
        %v1124 = vpop.f32.mrb[0].mxu0
        %v1125 = vadd.f32 %v875, %v1124
        %v1126 = vpop.f32.mrb[0].mxu0
        %v1127 = vadd.f32 %v879, %v1126
        %v1128 = vpop.f32.mrb[0].mxu0
        %v1129 = vadd.f32 %v875, %v1128
        %v1130 = vpop.f32.mrb[0].mxu0
        %v1131 = vadd.f32 %v879, %v1130
        %1132 = vmatprep.mubr.bf16.mxu0 %v837
        %1133 = vmatmul.mubr.bf16.gmra.mrb[0].mxu0 %v836
        %v1134 = vpop.f32.mrb[0].mxu0
        %v1135 = vadd.f32 %v875, %v1134
        %v1136 = vpop.f32.mrb[0].mxu0
        %v1137 = vadd.f32 %v879, %v1136
        %v1138 = vpop.f32.mrb[0].mxu0
        %v1139 = vadd.f32 %v875, %v1138
        %v1140 = vpop.f32.mrb[0].mxu0
        %v1141 = vadd.f32 %v879, %v1140
        %1142 = vmatprep.mubr.bf16.mxu0 %v839
        %1143 = vmatmul.mubr.bf16.gmra.mrb[0].mxu0 %v838
        %v1144 = vpop.f32.mrb[0].mxu0
        %v1145 = vadd.f32 %v875, %v1144
        %v1146 = vpop.f32.mrb[0].mxu0
        %v1147 = vadd.f32 %v879, %v1146
        %v1148 = vpop.f32.mrb[0].mxu0
        %v1149 = vadd.f32 %v875, %v1148
        %v1150 = vpop.f32.mrb[0].mxu0
        %v1151 = vadd.f32 %v879, %v1150
        %1152 = vdwg.mxu0
        %v1153 = vadd.f32 %v1075, %v1077
        %1154 = vadd.xlane.f32.xlu0 %v1153
        %v1155 = vpop.xlane.xlu0 %1154
        %v1156 = vadd.f32 %v1079, %v1081
        %1157 = vadd.xlane.f32.xlu0 %v1156
        %v1158 = vpop.xlane.xlu0 %1157
        %v1159 = vadd.f32 %v1085, %v1087
        %1160 = vadd.xlane.f32.xlu0 %v1159
        %v1161 = vpop.xlane.xlu0 %1160
        %v1162 = vadd.f32 %v1089, %v1091
        %1163 = vadd.xlane.f32.xlu0 %v1162
        %v1164 = vpop.xlane.xlu0 %1163
        %v1165 = vadd.f32 %v1095, %v1097
        %1166 = vadd.xlane.f32.xlu0 %v1165
        %v1167 = vpop.xlane.xlu0 %1166
        %v1168 = vadd.f32 %v1099, %v1101
        %1169 = vadd.xlane.f32.xlu0 %v1168
        %v1170 = vpop.xlane.xlu0 %1169
        %v1171 = vadd.f32 %v1105, %v1107
        %1172 = vadd.xlane.f32.xlu0 %v1171
        %v1173 = vpop.xlane.xlu0 %1172
        %v1174 = vadd.f32 %v1109, %v1111
        %1175 = vadd.xlane.f32.xlu0 %v1174
        %v1176 = vpop.xlane.xlu0 %1175
        %v1177 = vadd.f32 %v1115, %v1117
        %1178 = vadd.xlane.f32.xlu0 %v1177
        %v1179 = vpop.xlane.xlu0 %1178
        %v1180 = vadd.f32 %v1119, %v1121
        %1181 = vadd.xlane.f32.xlu0 %v1180
        %v1182 = vpop.xlane.xlu0 %1181
        %v1183 = vadd.f32 %v1125, %v1127
        %1184 = vadd.xlane.f32.xlu0 %v1183
        %v1185 = vpop.xlane.xlu0 %1184
        %v1186 = vadd.f32 %v1129, %v1131
        %1187 = vadd.xlane.f32.xlu0 %v1186
        %v1188 = vpop.xlane.xlu0 %1187
        %v1189 = vadd.f32 %v1135, %v1137
        %1190 = vadd.xlane.f32.xlu0 %v1189
        %v1191 = vpop.xlane.xlu0 %1190
        %v1192 = vadd.f32 %v1139, %v1141
        %1193 = vadd.xlane.f32.xlu0 %v1192
        %v1194 = vpop.xlane.xlu0 %1193
        %v1195 = vadd.f32 %v1145, %v1147
        %1196 = vadd.xlane.f32.xlu0 %v1195
        %v1197 = vpop.xlane.xlu0 %1196
        %v1198 = vadd.f32 %v1149, %v1151
        %1199 = vadd.xlane.f32.xlu0 %v1198
        %v1200 = vpop.xlane.xlu0 %1199
        %v1201 = vmul.f32 %v1155, %v533
        %v1202 = vmul.f32 %v1158, %v533
        %v1203 = vmul.f32 %v1161, %v533
        %v1204 = vmul.f32 %v1164, %v533
        %v1205 = vmul.f32 %v1167, %v533
        %v1206 = vmul.f32 %v1170, %v533
        %v1207 = vmul.f32 %v1173, %v533
        %v1208 = vmul.f32 %v1176, %v533
        %v1209 = vmul.f32 %v1179, %v533
        %v1210 = vmul.f32 %v1182, %v533
        %v1211 = vmul.f32 %v1185, %v533
        %v1212 = vmul.f32 %v1188, %v533
        %v1213 = vmul.f32 %v1191, %v533
        %v1214 = vmul.f32 %v1194, %v533
        %v1215 = vmul.f32 %v1197, %v533
        %v1216 = vmul.f32 %v1200, %v533
        %v1217 = vmul.f32 %v1075, %v1075
        %v1218 = vmul.f32 %v1077, %v1077
        %v1219 = vmul.f32 %v1079, %v1079
        %v1220 = vmul.f32 %v1081, %v1081
        %v1221 = vmul.f32 %v1085, %v1085
        %v1222 = vmul.f32 %v1087, %v1087
        %v1223 = vmul.f32 %v1089, %v1089
        %v1224 = vmul.f32 %v1091, %v1091
        %v1225 = vmul.f32 %v1095, %v1095
        %v1226 = vmul.f32 %v1097, %v1097
        %v1227 = vmul.f32 %v1099, %v1099
        %v1228 = vmul.f32 %v1101, %v1101
        %v1229 = vmul.f32 %v1105, %v1105
        %v1230 = vmul.f32 %v1107, %v1107
        %v1231 = vmul.f32 %v1109, %v1109
        %v1232 = vmul.f32 %v1111, %v1111
        %v1233 = vmul.f32 %v1115, %v1115
        %v1234 = vmul.f32 %v1117, %v1117
        %v1235 = vmul.f32 %v1119, %v1119
        %v1236 = vmul.f32 %v1121, %v1121
        %v1237 = vmul.f32 %v1125, %v1125
        %v1238 = vmul.f32 %v1127, %v1127
        %v1239 = vmul.f32 %v1129, %v1129
        %v1240 = vmul.f32 %v1131, %v1131
        %v1241 = vmul.f32 %v1135, %v1135
        %v1242 = vmul.f32 %v1137, %v1137
        %v1243 = vmul.f32 %v1139, %v1139
        %v1244 = vmul.f32 %v1141, %v1141
        %v1245 = vmul.f32 %v1145, %v1145
        %v1246 = vmul.f32 %v1147, %v1147
        %v1247 = vmul.f32 %v1149, %v1149
        %v1248 = vmul.f32 %v1151, %v1151
        %v1249 = vadd.f32 %v1217, %v1218
        %1250 = vadd.xlane.f32.xlu0 %v1249
        %v1251 = vpop.xlane.xlu0 %1250
        %v1252 = vadd.f32 %v1219, %v1220
        %1253 = vadd.xlane.f32.xlu0 %v1252
        %v1254 = vpop.xlane.xlu0 %1253
        %v1255 = vadd.f32 %v1221, %v1222
        %1256 = vadd.xlane.f32.xlu0 %v1255
        %v1257 = vpop.xlane.xlu0 %1256
        %v1258 = vadd.f32 %v1223, %v1224
        %1259 = vadd.xlane.f32.xlu0 %v1258
        %v1260 = vpop.xlane.xlu0 %1259
        %v1261 = vadd.f32 %v1225, %v1226
        %1262 = vadd.xlane.f32.xlu0 %v1261
        %v1263 = vpop.xlane.xlu0 %1262
        %v1264 = vadd.f32 %v1227, %v1228
        %1265 = vadd.xlane.f32.xlu0 %v1264
        %v1266 = vpop.xlane.xlu0 %1265
        %v1267 = vadd.f32 %v1229, %v1230
        %1268 = vadd.xlane.f32.xlu0 %v1267
        %v1269 = vpop.xlane.xlu0 %1268
        %v1270 = vadd.f32 %v1231, %v1232
        %1271 = vadd.xlane.f32.xlu0 %v1270
        %v1272 = vpop.xlane.xlu0 %1271
        %v1273 = vadd.f32 %v1233, %v1234
        %1274 = vadd.xlane.f32.xlu0 %v1273
        %v1275 = vpop.xlane.xlu0 %1274
        %v1276 = vadd.f32 %v1235, %v1236
        %1277 = vadd.xlane.f32.xlu0 %v1276
        %v1278 = vpop.xlane.xlu0 %1277
        %v1279 = vadd.f32 %v1237, %v1238
        %1280 = vadd.xlane.f32.xlu0 %v1279
        %v1281 = vpop.xlane.xlu0 %1280
        %v1282 = vadd.f32 %v1239, %v1240
        %1283 = vadd.xlane.f32.xlu0 %v1282
        %v1284 = vpop.xlane.xlu0 %1283
        %v1285 = vadd.f32 %v1241, %v1242
        %1286 = vadd.xlane.f32.xlu0 %v1285
        %v1287 = vpop.xlane.xlu0 %1286
        %v1288 = vadd.f32 %v1243, %v1244
        %1289 = vadd.xlane.f32.xlu0 %v1288
        %v1290 = vpop.xlane.xlu0 %1289
        %v1291 = vadd.f32 %v1245, %v1246
        %1292 = vadd.xlane.f32.xlu0 %v1291
        %v1293 = vpop.xlane.xlu0 %1292
        %v1294 = vadd.f32 %v1247, %v1248
        %1295 = vadd.xlane.f32.xlu0 %v1294
        %v1296 = vpop.xlane.xlu0 %1295
        %v1297 = vmul.f32 %v1251, %v533
        %v1298 = vmul.f32 %v1254, %v533
        %v1299 = vmul.f32 %v1257, %v533
        %v1300 = vmul.f32 %v1260, %v533
        %v1301 = vmul.f32 %v1263, %v533
        %v1302 = vmul.f32 %v1266, %v533
        %v1303 = vmul.f32 %v1269, %v533
        %v1304 = vmul.f32 %v1272, %v533
        %v1305 = vmul.f32 %v1275, %v533
        %v1306 = vmul.f32 %v1278, %v533
        %v1307 = vmul.f32 %v1281, %v533
        %v1308 = vmul.f32 %v1284, %v533
        %v1309 = vmul.f32 %v1287, %v533
        %v1310 = vmul.f32 %v1290, %v533
        %v1311 = vmul.f32 %v1293, %v533
        %v1312 = vmul.f32 %v1296, %v533
        %v1313 = vmul.f32 %v1201, %v1201
        %v1314 = vmul.f32 %v1202, %v1202
        %v1315 = vmul.f32 %v1203, %v1203
        %v1316 = vmul.f32 %v1204, %v1204
        %v1317 = vmul.f32 %v1205, %v1205
        %v1318 = vmul.f32 %v1206, %v1206
        %v1319 = vmul.f32 %v1207, %v1207
        %v1320 = vmul.f32 %v1208, %v1208
        %v1321 = vmul.f32 %v1209, %v1209
        %v1322 = vmul.f32 %v1210, %v1210
        %v1323 = vmul.f32 %v1211, %v1211
        %v1324 = vmul.f32 %v1212, %v1212
        %v1325 = vmul.f32 %v1213, %v1213
        %v1326 = vmul.f32 %v1214, %v1214
        %v1327 = vmul.f32 %v1215, %v1215
        %v1328 = vmul.f32 %v1216, %v1216
        %v1329 = vsub.f32 %v1297, %v1313
        %v1330 = vsub.f32 %v1298, %v1314
        %v1331 = vsub.f32 %v1299, %v1315
        %v1332 = vsub.f32 %v1300, %v1316
        %v1333 = vsub.f32 %v1301, %v1317
        %v1334 = vsub.f32 %v1302, %v1318
        %v1335 = vsub.f32 %v1303, %v1319
        %v1336 = vsub.f32 %v1304, %v1320
        %v1337 = vsub.f32 %v1305, %v1321
        %v1338 = vsub.f32 %v1306, %v1322
        %v1339 = vsub.f32 %v1307, %v1323
        %v1340 = vsub.f32 %v1308, %v1324
        %v1341 = vsub.f32 %v1309, %v1325
        %v1342 = vsub.f32 %v1310, %v1326
        %v1343 = vsub.f32 %v1311, %v1327
        %v1344 = vsub.f32 %v1312, %v1328
        %v1345 = vmax.f32 %v1329, 0.0
        %v1346 = vmax.f32 %v1330, 0.0
        %v1347 = vmax.f32 %v1331, 0.0
        %v1348 = vmax.f32 %v1332, 0.0
        %v1349 = vmax.f32 %v1333, 0.0
        %v1350 = vmax.f32 %v1334, 0.0
        %v1351 = vmax.f32 %v1335, 0.0
        %v1352 = vmax.f32 %v1336, 0.0
        %v1353 = vmax.f32 %v1337, 0.0
        %v1354 = vmax.f32 %v1338, 0.0
        %v1355 = vmax.f32 %v1339, 0.0
        %v1356 = vmax.f32 %v1340, 0.0
        %v1357 = vmax.f32 %v1341, 0.0
        %v1358 = vmax.f32 %v1342, 0.0
        %v1359 = vmax.f32 %v1343, 0.0
        %v1360 = vmax.f32 %v1344, 0.0
        %v1361 = vsub.f32 %v1075, %v1201
        %v1362 = vsub.f32 %v1077, %v1201
        %v1363 = vsub.f32 %v1079, %v1202
        %v1364 = vsub.f32 %v1081, %v1202
        %v1365 = vsub.f32 %v1085, %v1203
        %v1366 = vsub.f32 %v1087, %v1203
        %v1367 = vsub.f32 %v1089, %v1204
        %v1368 = vsub.f32 %v1091, %v1204
        %v1369 = vsub.f32 %v1095, %v1205
        %v1370 = vsub.f32 %v1097, %v1205
        %v1371 = vsub.f32 %v1099, %v1206
        %v1372 = vsub.f32 %v1101, %v1206
        %v1373 = vsub.f32 %v1105, %v1207
        %v1374 = vsub.f32 %v1107, %v1207
        %v1375 = vsub.f32 %v1109, %v1208
        %v1376 = vsub.f32 %v1111, %v1208
        %v1377 = vsub.f32 %v1115, %v1209
        %v1378 = vsub.f32 %v1117, %v1209
        %v1379 = vsub.f32 %v1119, %v1210
        %v1380 = vsub.f32 %v1121, %v1210
        %v1381 = vsub.f32 %v1125, %v1211
        %v1382 = vsub.f32 %v1127, %v1211
        %v1383 = vsub.f32 %v1129, %v1212
        %v1384 = vsub.f32 %v1131, %v1212
        %v1385 = vsub.f32 %v1135, %v1213
        %v1386 = vsub.f32 %v1137, %v1213
        %v1387 = vsub.f32 %v1139, %v1214
        %v1388 = vsub.f32 %v1141, %v1214
        %v1389 = vsub.f32 %v1145, %v1215
        %v1390 = vsub.f32 %v1147, %v1215
        %v1391 = vsub.f32 %v1149, %v1216
        %v1392 = vsub.f32 %v1151, %v1216
        %v1393 = vadd.f32 %v1345, 1e-05
        %v1394 = vadd.f32 %v1346, 1e-05
        %v1395 = vadd.f32 %v1347, 1e-05
        %v1396 = vadd.f32 %v1348, 1e-05
        %v1397 = vadd.f32 %v1349, 1e-05
        %v1398 = vadd.f32 %v1350, 1e-05
        %v1399 = vadd.f32 %v1351, 1e-05
        %v1400 = vadd.f32 %v1352, 1e-05
        %v1401 = vadd.f32 %v1353, 1e-05
        %v1402 = vadd.f32 %v1354, 1e-05
        %v1403 = vadd.f32 %v1355, 1e-05
        %v1404 = vadd.f32 %v1356, 1e-05
        %v1405 = vadd.f32 %v1357, 1e-05
        %v1406 = vadd.f32 %v1358, 1e-05
        %v1407 = vadd.f32 %v1359, 1e-05
        %v1408 = vadd.f32 %v1360, 1e-05
        %v1409 = vrsqrt.pop %v1393
        %v1410 = vrsqrt.pop %v1394
        %v1411 = vrsqrt.pop %v1395
        %v1412 = vrsqrt.pop %v1396
        %v1413 = vrsqrt.pop %v1397
        %v1414 = vrsqrt.pop %v1398
        %v1415 = vrsqrt.pop %v1399
        %v1416 = vrsqrt.pop %v1400
        %v1417 = vrsqrt.pop %v1401
        %v1418 = vrsqrt.pop %v1402
        %v1419 = vrsqrt.pop %v1403
        %v1420 = vrsqrt.pop %v1404
        %v1421 = vrsqrt.pop %v1405
        %v1422 = vrsqrt.pop %v1406
        %v1423 = vrsqrt.pop %v1407
        %v1424 = vrsqrt.pop %v1408
        %v1425 = vmul.f32 %v1361, %v1409
        %v1426 = vmul.f32 %v1362, %v1409
        %v1427 = vmul.f32 %v1363, %v1410
        %v1428 = vmul.f32 %v1364, %v1410
        %v1429 = vmul.f32 %v1365, %v1411
        %v1430 = vmul.f32 %v1366, %v1411
        %v1431 = vmul.f32 %v1367, %v1412
        %v1432 = vmul.f32 %v1368, %v1412
        %v1433 = vmul.f32 %v1369, %v1413
        %v1434 = vmul.f32 %v1370, %v1413
        %v1435 = vmul.f32 %v1371, %v1414
        %v1436 = vmul.f32 %v1372, %v1414
        %v1437 = vmul.f32 %v1373, %v1415
        %v1438 = vmul.f32 %v1374, %v1415
        %v1439 = vmul.f32 %v1375, %v1416
        %v1440 = vmul.f32 %v1376, %v1416
        %v1441 = vmul.f32 %v1377, %v1417
        %v1442 = vmul.f32 %v1378, %v1417
        %v1443 = vmul.f32 %v1379, %v1418
        %v1444 = vmul.f32 %v1380, %v1418
        %v1445 = vmul.f32 %v1381, %v1419
        %v1446 = vmul.f32 %v1382, %v1419
        %v1447 = vmul.f32 %v1383, %v1420
        %v1448 = vmul.f32 %v1384, %v1420
        %v1449 = vmul.f32 %v1385, %v1421
        %v1450 = vmul.f32 %v1386, %v1421
        %v1451 = vmul.f32 %v1387, %v1422
        %v1452 = vmul.f32 %v1388, %v1422
        %v1453 = vmul.f32 %v1389, %v1423
        %v1454 = vmul.f32 %v1390, %v1423
        %v1455 = vmul.f32 %v1391, %v1424
        %v1456 = vmul.f32 %v1392, %v1424
        %v1457 = vmax.f32 %v1425, 0.0
        %v1458 = vmax.f32 %v1426, 0.0
        %v1459 = vmax.f32 %v1427, 0.0
        %v1460 = vmax.f32 %v1428, 0.0
        %v1461 = vmax.f32 %v1429, 0.0
        %v1462 = vmax.f32 %v1430, 0.0
        %v1463 = vmax.f32 %v1431, 0.0
        %v1464 = vmax.f32 %v1432, 0.0
        %v1465 = vmax.f32 %v1433, 0.0
        %v1466 = vmax.f32 %v1434, 0.0
        %v1467 = vmax.f32 %v1435, 0.0
        %v1468 = vmax.f32 %v1436, 0.0
        %v1469 = vmax.f32 %v1437, 0.0
        %v1470 = vmax.f32 %v1438, 0.0
        %v1471 = vmax.f32 %v1439, 0.0
        %v1472 = vmax.f32 %v1440, 0.0
        %v1473 = vmax.f32 %v1441, 0.0
        %v1474 = vmax.f32 %v1442, 0.0
        %v1475 = vmax.f32 %v1443, 0.0
        %v1476 = vmax.f32 %v1444, 0.0
        %v1477 = vmax.f32 %v1445, 0.0
        %v1478 = vmax.f32 %v1446, 0.0
        %v1479 = vmax.f32 %v1447, 0.0
        %v1480 = vmax.f32 %v1448, 0.0
        %v1481 = vmax.f32 %v1449, 0.0
        %v1482 = vmax.f32 %v1450, 0.0
        %v1483 = vmax.f32 %v1451, 0.0
        %v1484 = vmax.f32 %v1452, 0.0
        %v1485 = vmax.f32 %v1453, 0.0
        %v1486 = vmax.f32 %v1454, 0.0
        %v1487 = vmax.f32 %v1455, 0.0
        %v1488 = vmax.f32 %v1456, 0.0
        %v1489 = vpack.c.bf16 %v1459, %v1457
        %v1490 = vpack.c.bf16 %v1460, %v1458
        %v1491 = vpack.c.bf16 %v1463, %v1461
        %v1492 = vpack.c.bf16 %v1464, %v1462
        %v1493 = vpack.c.bf16 %v1467, %v1465
        %v1494 = vpack.c.bf16 %v1468, %v1466
        %v1495 = vpack.c.bf16 %v1471, %v1469
        %v1496 = vpack.c.bf16 %v1472, %v1470
        %v1497 = vpack.c.bf16 %v1475, %v1473
        %v1498 = vpack.c.bf16 %v1476, %v1474
        %v1499 = vpack.c.bf16 %v1479, %v1477
        %v1500 = vpack.c.bf16 %v1480, %v1478
        %v1501 = vpack.c.bf16 %v1483, %v1481
        %v1502 = vpack.c.bf16 %v1484, %v1482
        %v1503 = vpack.c.bf16 %v1487, %v1485
        %v1504 = vpack.c.bf16 %v1488, %v1486
        %s1505 = scalar_lea.vmem [#allocation2], 256
        %v1506 = vld [vmem:[%s1505] sm:$0xff]
        %v1507 = vld [vmem:[%s1505 + $0x8] sm:$0xff]
        %v1508 = vld [vmem:[%s1505 + $0x10] sm:$0xff]
        %v1509 = vld [vmem:[%s1505 + $0x18] sm:$0xff]
        %v1510 = vld [vmem:[%s1505 + $0x20] sm:$0xff]
        %v1511 = vld [vmem:[%s1505 + $0x28] sm:$0xff]
        %v1512 = vld [vmem:[%s1505 + $0x30] sm:$0xff]
        %v1513 = vld [vmem:[%s1505 + $0x38] sm:$0xff]
        %v1514 = vld [vmem:[%s1505 + $0x40] sm:$0xff]
        %v1515 = vld [vmem:[%s1505 + $0x48] sm:$0xff]
        %v1516 = vld [vmem:[%s1505 + $0x50] sm:$0xff]
        %v1517 = vld [vmem:[%s1505 + $0x58] sm:$0xff]
        %v1518 = vld [vmem:[%s1505 + $0x60] sm:$0xff]
        %v1519 = vld [vmem:[%s1505 + $0x68] sm:$0xff]
        %v1520 = vld [vmem:[%s1505 + $0x70] sm:$0xff]
        %v1521 = vld [vmem:[%s1505 + $0x78] sm:$0xff]
        %v1522 = vld [vmem:[%s1505 + $0x80] sm:$0xff]
        %v1523 = vld [vmem:[%s1505 + $0x88] sm:$0xff]
        %v1524 = vld [vmem:[%s1505 + $0x90] sm:$0xff]
        %v1525 = vld [vmem:[%s1505 + $0x98] sm:$0xff]
        %v1526 = vld [vmem:[%s1505 + $0xa0] sm:$0xff]
        %v1527 = vld [vmem:[%s1505 + $0xa8] sm:$0xff]
        %v1528 = vld [vmem:[%s1505 + $0xb0] sm:$0xff]
        %v1529 = vld [vmem:[%s1505 + $0xb8] sm:$0xff]
        %v1530 = vld [vmem:[%s1505 + $0xc0] sm:$0xff]
        %v1531 = vld [vmem:[%s1505 + $0xc8] sm:$0xff]
        %v1532 = vld [vmem:[%s1505 + $0xd0] sm:$0xff]
        %v1533 = vld [vmem:[%s1505 + $0xd8] sm:$0xff]
        %v1534 = vld [vmem:[%s1505 + $0xe0] sm:$0xff]
        %v1535 = vld [vmem:[%s1505 + $0xe8] sm:$0xff]
        %v1536 = vld [vmem:[%s1505 + $0xf0] sm:$0xff]
        %v1537 = vld [vmem:[%s1505 + $0xf8] sm:$0xff]
        %v1538 = vlaneseq
        %v1539 = vshrl.u32 %v1538, 7
        %v1540 = vsub.s32 1, %v1539
        %v1541 = vrot.slane %v822, %v1540
        %v1542 = vlaneseq
        %v1543 = vshrl.u32 %v1542, 7
        %v1544 = vsub.s32 1, %v1543
        %v1545 = vrot.slane %v823, %v1544
        %v1578 = vunpack.c.l.b16 %v1506
        %v1579 = vunpack.c.h.b16 %v1506
        %v1580 = vunpack.c.l.b16 %v1507
        %v1581 = vunpack.c.h.b16 %v1507
        %v1582 = vunpack.c.l.b16 %v1508
        %v1583 = vunpack.c.h.b16 %v1508
        %v1584 = vunpack.c.l.b16 %v1509
        %v1585 = vunpack.c.h.b16 %v1509
        %v1586 = vunpack.c.l.b16 %v1510
        %v1587 = vunpack.c.h.b16 %v1510
        %v1588 = vunpack.c.l.b16 %v1511
        %v1589 = vunpack.c.h.b16 %v1511
        %v1590 = vunpack.c.l.b16 %v1512
        %v1591 = vunpack.c.h.b16 %v1512
        %v1592 = vunpack.c.l.b16 %v1513
        %v1593 = vunpack.c.h.b16 %v1513
        %v1594 = vunpack.c.l.b16 %v1514
        %v1595 = vunpack.c.h.b16 %v1514
        %v1596 = vunpack.c.l.b16 %v1515
        %v1597 = vunpack.c.h.b16 %v1515
        %v1598 = vunpack.c.l.b16 %v1516
        %v1599 = vunpack.c.h.b16 %v1516
        %v1600 = vunpack.c.l.b16 %v1517
        %v1601 = vunpack.c.h.b16 %v1517
        %v1602 = vunpack.c.l.b16 %v1518
        %v1603 = vunpack.c.h.b16 %v1518
        %v1604 = vunpack.c.l.b16 %v1519
        %v1605 = vunpack.c.h.b16 %v1519
        %v1606 = vunpack.c.l.b16 %v1520
        %v1607 = vunpack.c.h.b16 %v1520
        %v1608 = vunpack.c.l.b16 %v1521
        %v1609 = vunpack.c.h.b16 %v1521
        %v1610 = vunpack.c.l.b16 %v1522
        %v1611 = vunpack.c.h.b16 %v1522
        %v1612 = vunpack.c.l.b16 %v1523
        %v1613 = vunpack.c.h.b16 %v1523
        %v1614 = vunpack.c.l.b16 %v1524
        %v1615 = vunpack.c.h.b16 %v1524
        %v1616 = vunpack.c.l.b16 %v1525
        %v1617 = vunpack.c.h.b16 %v1525
        %v1618 = vunpack.c.l.b16 %v1526
        %v1619 = vunpack.c.h.b16 %v1526
        %v1620 = vunpack.c.l.b16 %v1527
        %v1621 = vunpack.c.h.b16 %v1527
        %v1622 = vunpack.c.l.b16 %v1528
        %v1623 = vunpack.c.h.b16 %v1528
        %v1624 = vunpack.c.l.b16 %v1529
        %v1625 = vunpack.c.h.b16 %v1529
        %v1626 = vunpack.c.l.b16 %v1530
        %v1627 = vunpack.c.h.b16 %v1530
        %v1628 = vunpack.c.l.b16 %v1531
        %v1629 = vunpack.c.h.b16 %v1531
        %v1630 = vunpack.c.l.b16 %v1532
        %v1631 = vunpack.c.h.b16 %v1532
        %v1632 = vunpack.c.l.b16 %v1533
        %v1633 = vunpack.c.h.b16 %v1533
        %v1634 = vunpack.c.l.b16 %v1534
        %v1635 = vunpack.c.h.b16 %v1534
        %v1636 = vunpack.c.l.b16 %v1535
        %v1637 = vunpack.c.h.b16 %v1535
        %v1638 = vunpack.c.l.b16 %v1536
        %v1639 = vunpack.c.h.b16 %v1536
        %v1640 = vunpack.c.l.b16 %v1537
        %v1641 = vunpack.c.h.b16 %v1537
        %v1642 = vpack.c.b16 %v1580, %v1578
        %v1643 = vpack.c.b16 %v1581, %v1579
        %v1644 = vpack.c.b16 %v1584, %v1582
        %v1645 = vpack.c.b16 %v1585, %v1583
        %v1646 = vpack.c.b16 %v1588, %v1586
        %v1647 = vpack.c.b16 %v1589, %v1587
        %v1648 = vpack.c.b16 %v1592, %v1590
        %v1649 = vpack.c.b16 %v1593, %v1591
        %v1650 = vpack.c.b16 %v1596, %v1594
        %v1651 = vpack.c.b16 %v1597, %v1595
        %v1652 = vpack.c.b16 %v1600, %v1598
        %v1653 = vpack.c.b16 %v1601, %v1599
        %v1654 = vpack.c.b16 %v1604, %v1602
        %v1655 = vpack.c.b16 %v1605, %v1603
        %v1656 = vpack.c.b16 %v1608, %v1606
        %v1657 = vpack.c.b16 %v1609, %v1607
        %v1658 = vpack.c.b16 %v1612, %v1610
        %v1659 = vpack.c.b16 %v1613, %v1611
        %v1660 = vpack.c.b16 %v1616, %v1614
        %v1661 = vpack.c.b16 %v1617, %v1615
        %v1662 = vpack.c.b16 %v1620, %v1618
        %v1663 = vpack.c.b16 %v1621, %v1619
        %v1664 = vpack.c.b16 %v1624, %v1622
        %v1665 = vpack.c.b16 %v1625, %v1623
        %v1666 = vpack.c.b16 %v1628, %v1626
        %v1667 = vpack.c.b16 %v1629, %v1627
        %v1668 = vpack.c.b16 %v1632, %v1630
        %v1669 = vpack.c.b16 %v1633, %v1631
        %v1670 = vpack.c.b16 %v1636, %v1634
        %v1671 = vpack.c.b16 %v1637, %v1635
        %v1672 = vpack.c.b16 %v1640, %v1638
        %v1673 = vpack.c.b16 %v1641, %v1639
        %1706 = vmatprep.subr.bf16.mxu0 %v1643
        %1707 = vmatpush1.bf16.msra.mxu0 %v1642
        %1708 = vmatprep.subr.bf16.mxu0 %v1645
        %1709 = vmatpush1.bf16.msra.mxu0 %v1644
        %1710 = vmatprep.subr.bf16.mxu0 %v1647
        %1711 = vmatpush1.bf16.msra.mxu0 %v1646
        %1712 = vmatprep.subr.bf16.mxu0 %v1649
        %1713 = vmatpush1.bf16.msra.mxu0 %v1648
        %1714 = vmatprep.subr.bf16.mxu0 %v1651
        %1715 = vmatpush1.bf16.msra.mxu0 %v1650
        %1716 = vmatprep.subr.bf16.mxu0 %v1653
        %1717 = vmatpush1.bf16.msra.mxu0 %v1652
        %1718 = vmatprep.subr.bf16.mxu0 %v1655
        %1719 = vmatpush1.bf16.msra.mxu0 %v1654
        %1720 = vmatprep.subr.bf16.mxu0 %v1657
        %1721 = vmatpush1.bf16.msra.mxu0 %v1656
        %1722 = vmatprep.subr.bf16.mxu0 %v1659
        %1723 = vmatpush1.bf16.msra.mxu0 %v1658
        %1724 = vmatprep.subr.bf16.mxu0 %v1661
        %1725 = vmatpush1.bf16.msra.mxu0 %v1660
        %1726 = vmatprep.subr.bf16.mxu0 %v1663
        %1727 = vmatpush1.bf16.msra.mxu0 %v1662
        %1728 = vmatprep.subr.bf16.mxu0 %v1665
        %1729 = vmatpush1.bf16.msra.mxu0 %v1664
        %1730 = vmatprep.subr.bf16.mxu0 %v1667
        %1731 = vmatpush1.bf16.msra.mxu0 %v1666
        %1732 = vmatprep.subr.bf16.mxu0 %v1669
        %1733 = vmatpush1.bf16.msra.mxu0 %v1668
        %1734 = vmatprep.subr.bf16.mxu0 %v1671
        %1735 = vmatpush1.bf16.msra.mxu0 %v1670
        %1736 = vmatprep.subr.bf16.mxu0 %v1673
        %1737 = vmatpush1.bf16.msra.mxu0 %v1672
        %1738 = vmatprep.mubr.bf16.mxu0 %v1490
        %1739 = vmatmul.mubr.bf16.gmra.mrb[0].mxu0 %v1489
        %v1740 = vpop.f32.mrb[0].mxu0
        %v1741 = vadd.f32 %v1541, %v1740
        %v1742 = vpop.f32.mrb[0].mxu0
        %v1743 = vadd.f32 %v1545, %v1742
        %v1744 = vpop.f32.mrb[0].mxu0
        %v1745 = vadd.f32 %v1541, %v1744
        %v1746 = vpop.f32.mrb[0].mxu0
        %v1747 = vadd.f32 %v1545, %v1746
        %1748 = vmatprep.mubr.bf16.mxu0 %v1492
        %1749 = vmatmul.mubr.bf16.gmra.mrb[0].mxu0 %v1491
        %v1750 = vpop.f32.mrb[0].mxu0
        %v1751 = vadd.f32 %v1541, %v1750
        %v1752 = vpop.f32.mrb[0].mxu0
        %v1753 = vadd.f32 %v1545, %v1752
        %v1754 = vpop.f32.mrb[0].mxu0
        %v1755 = vadd.f32 %v1541, %v1754
        %v1756 = vpop.f32.mrb[0].mxu0
        %v1757 = vadd.f32 %v1545, %v1756
        %1758 = vmatprep.mubr.bf16.mxu0 %v1494
        %1759 = vmatmul.mubr.bf16.gmra.mrb[0].mxu0 %v1493
        %v1760 = vpop.f32.mrb[0].mxu0
        %v1761 = vadd.f32 %v1541, %v1760
        %v1762 = vpop.f32.mrb[0].mxu0
        %v1763 = vadd.f32 %v1545, %v1762
        %v1764 = vpop.f32.mrb[0].mxu0
        %v1765 = vadd.f32 %v1541, %v1764
        %v1766 = vpop.f32.mrb[0].mxu0
        %v1767 = vadd.f32 %v1545, %v1766
        %1768 = vmatprep.mubr.bf16.mxu0 %v1496
        %1769 = vmatmul.mubr.bf16.gmra.mrb[0].mxu0 %v1495
        %v1770 = vpop.f32.mrb[0].mxu0
        %v1771 = vadd.f32 %v1541, %v1770
        %v1772 = vpop.f32.mrb[0].mxu0
        %v1773 = vadd.f32 %v1545, %v1772
        %v1774 = vpop.f32.mrb[0].mxu0
        %v1775 = vadd.f32 %v1541, %v1774
        %v1776 = vpop.f32.mrb[0].mxu0
        %v1777 = vadd.f32 %v1545, %v1776
        %1778 = vmatprep.mubr.bf16.mxu0 %v1498
        %1779 = vmatmul.mubr.bf16.gmra.mrb[0].mxu0 %v1497
        %v1780 = vpop.f32.mrb[0].mxu0
        %v1781 = vadd.f32 %v1541, %v1780
        %v1782 = vpop.f32.mrb[0].mxu0
        %v1783 = vadd.f32 %v1545, %v1782
        %v1784 = vpop.f32.mrb[0].mxu0
        %v1785 = vadd.f32 %v1541, %v1784
        %v1786 = vpop.f32.mrb[0].mxu0
        %v1787 = vadd.f32 %v1545, %v1786
        %1788 = vmatprep.mubr.bf16.mxu0 %v1500
        %1789 = vmatmul.mubr.bf16.gmra.mrb[0].mxu0 %v1499
        %v1790 = vpop.f32.mrb[0].mxu0
        %v1791 = vadd.f32 %v1541, %v1790
        %v1792 = vpop.f32.mrb[0].mxu0
        %v1793 = vadd.f32 %v1545, %v1792
        %v1794 = vpop.f32.mrb[0].mxu0
        %v1795 = vadd.f32 %v1541, %v1794
        %v1796 = vpop.f32.mrb[0].mxu0
        %v1797 = vadd.f32 %v1545, %v1796
        %1798 = vmatprep.mubr.bf16.mxu0 %v1502
        %1799 = vmatmul.mubr.bf16.gmra.mrb[0].mxu0 %v1501
        %v1800 = vpop.f32.mrb[0].mxu0
        %v1801 = vadd.f32 %v1541, %v1800
        %v1802 = vpop.f32.mrb[0].mxu0
        %v1803 = vadd.f32 %v1545, %v1802
        %v1804 = vpop.f32.mrb[0].mxu0
        %v1805 = vadd.f32 %v1541, %v1804
        %v1806 = vpop.f32.mrb[0].mxu0
        %v1807 = vadd.f32 %v1545, %v1806
        %1808 = vmatprep.mubr.bf16.mxu0 %v1504
        %1809 = vmatmul.mubr.bf16.gmra.mrb[0].mxu0 %v1503
        %v1810 = vpop.f32.mrb[0].mxu0
        %v1811 = vadd.f32 %v1541, %v1810
        %v1812 = vpop.f32.mrb[0].mxu0
        %v1813 = vadd.f32 %v1545, %v1812
        %v1814 = vpop.f32.mrb[0].mxu0
        %v1815 = vadd.f32 %v1541, %v1814
        %v1816 = vpop.f32.mrb[0].mxu0
        %v1817 = vadd.f32 %v1545, %v1816
        %1818 = vdwg.mxu0
        %v1819 = vadd.f32 %v1741, %v1743
        %1820 = vadd.xlane.f32.xlu0 %v1819
        %v1821 = vpop.xlane.xlu0 %1820
        %v1822 = vadd.f32 %v1745, %v1747
        %1823 = vadd.xlane.f32.xlu0 %v1822
        %v1824 = vpop.xlane.xlu0 %1823
        %v1825 = vadd.f32 %v1751, %v1753
        %1826 = vadd.xlane.f32.xlu0 %v1825
        %v1827 = vpop.xlane.xlu0 %1826
        %v1828 = vadd.f32 %v1755, %v1757
        %1829 = vadd.xlane.f32.xlu0 %v1828
        %v1830 = vpop.xlane.xlu0 %1829
        %v1831 = vadd.f32 %v1761, %v1763
        %1832 = vadd.xlane.f32.xlu0 %v1831
        %v1833 = vpop.xlane.xlu0 %1832
        %v1834 = vadd.f32 %v1765, %v1767
        %1835 = vadd.xlane.f32.xlu0 %v1834
        %v1836 = vpop.xlane.xlu0 %1835
        %v1837 = vadd.f32 %v1771, %v1773
        %1838 = vadd.xlane.f32.xlu0 %v1837
        %v1839 = vpop.xlane.xlu0 %1838
        %v1840 = vadd.f32 %v1775, %v1777
        %1841 = vadd.xlane.f32.xlu0 %v1840
        %v1842 = vpop.xlane.xlu0 %1841
        %v1843 = vadd.f32 %v1781, %v1783
        %1844 = vadd.xlane.f32.xlu0 %v1843
        %v1845 = vpop.xlane.xlu0 %1844
        %v1846 = vadd.f32 %v1785, %v1787
        %1847 = vadd.xlane.f32.xlu0 %v1846
        %v1848 = vpop.xlane.xlu0 %1847
        %v1849 = vadd.f32 %v1791, %v1793
        %1850 = vadd.xlane.f32.xlu0 %v1849
        %v1851 = vpop.xlane.xlu0 %1850
        %v1852 = vadd.f32 %v1795, %v1797
        %1853 = vadd.xlane.f32.xlu0 %v1852
        %v1854 = vpop.xlane.xlu0 %1853
        %v1855 = vadd.f32 %v1801, %v1803
        %1856 = vadd.xlane.f32.xlu0 %v1855
        %v1857 = vpop.xlane.xlu0 %1856
        %v1858 = vadd.f32 %v1805, %v1807
        %1859 = vadd.xlane.f32.xlu0 %v1858
        %v1860 = vpop.xlane.xlu0 %1859
        %v1861 = vadd.f32 %v1811, %v1813
        %1862 = vadd.xlane.f32.xlu0 %v1861
        %v1863 = vpop.xlane.xlu0 %1862
        %v1864 = vadd.f32 %v1815, %v1817
        %1865 = vadd.xlane.f32.xlu0 %v1864
        %v1866 = vpop.xlane.xlu0 %1865
        %v1867 = vmul.f32 %v1821, %v533
        %v1868 = vmul.f32 %v1824, %v533
        %v1869 = vmul.f32 %v1827, %v533
        %v1870 = vmul.f32 %v1830, %v533
        %v1871 = vmul.f32 %v1833, %v533
        %v1872 = vmul.f32 %v1836, %v533
        %v1873 = vmul.f32 %v1839, %v533
        %v1874 = vmul.f32 %v1842, %v533
        %v1875 = vmul.f32 %v1845, %v533
        %v1876 = vmul.f32 %v1848, %v533
        %v1877 = vmul.f32 %v1851, %v533
        %v1878 = vmul.f32 %v1854, %v533
        %v1879 = vmul.f32 %v1857, %v533
        %v1880 = vmul.f32 %v1860, %v533
        %v1881 = vmul.f32 %v1863, %v533
        %v1882 = vmul.f32 %v1866, %v533
        %v1883 = vmul.f32 %v1741, %v1741
        %v1884 = vmul.f32 %v1743, %v1743
        %v1885 = vmul.f32 %v1745, %v1745
        %v1886 = vmul.f32 %v1747, %v1747
        %v1887 = vmul.f32 %v1751, %v1751
        %v1888 = vmul.f32 %v1753, %v1753
        %v1889 = vmul.f32 %v1755, %v1755
        %v1890 = vmul.f32 %v1757, %v1757
        %v1891 = vmul.f32 %v1761, %v1761
        %v1892 = vmul.f32 %v1763, %v1763
        %v1893 = vmul.f32 %v1765, %v1765
        %v1894 = vmul.f32 %v1767, %v1767
        %v1895 = vmul.f32 %v1771, %v1771
        %v1896 = vmul.f32 %v1773, %v1773
        %v1897 = vmul.f32 %v1775, %v1775
        %v1898 = vmul.f32 %v1777, %v1777
        %v1899 = vmul.f32 %v1781, %v1781
        %v1900 = vmul.f32 %v1783, %v1783
        %v1901 = vmul.f32 %v1785, %v1785
        %v1902 = vmul.f32 %v1787, %v1787
        %v1903 = vmul.f32 %v1791, %v1791
        %v1904 = vmul.f32 %v1793, %v1793
        %v1905 = vmul.f32 %v1795, %v1795
        %v1906 = vmul.f32 %v1797, %v1797
        %v1907 = vmul.f32 %v1801, %v1801
        %v1908 = vmul.f32 %v1803, %v1803
        %v1909 = vmul.f32 %v1805, %v1805
        %v1910 = vmul.f32 %v1807, %v1807
        %v1911 = vmul.f32 %v1811, %v1811
        %v1912 = vmul.f32 %v1813, %v1813
        %v1913 = vmul.f32 %v1815, %v1815
        %v1914 = vmul.f32 %v1817, %v1817
        %v1915 = vadd.f32 %v1883, %v1884
        %1916 = vadd.xlane.f32.xlu0 %v1915
        %v1917 = vpop.xlane.xlu0 %1916
        %v1918 = vadd.f32 %v1885, %v1886
        %1919 = vadd.xlane.f32.xlu0 %v1918
        %v1920 = vpop.xlane.xlu0 %1919
        %v1921 = vadd.f32 %v1887, %v1888
        %1922 = vadd.xlane.f32.xlu0 %v1921
        %v1923 = vpop.xlane.xlu0 %1922
        %v1924 = vadd.f32 %v1889, %v1890
        %1925 = vadd.xlane.f32.xlu0 %v1924
        %v1926 = vpop.xlane.xlu0 %1925
        %v1927 = vadd.f32 %v1891, %v1892
        %1928 = vadd.xlane.f32.xlu0 %v1927
        %v1929 = vpop.xlane.xlu0 %1928
        %v1930 = vadd.f32 %v1893, %v1894
        %1931 = vadd.xlane.f32.xlu0 %v1930
        %v1932 = vpop.xlane.xlu0 %1931
        %v1933 = vadd.f32 %v1895, %v1896
        %1934 = vadd.xlane.f32.xlu0 %v1933
        %v1935 = vpop.xlane.xlu0 %1934
        %v1936 = vadd.f32 %v1897, %v1898
        %1937 = vadd.xlane.f32.xlu0 %v1936
        %v1938 = vpop.xlane.xlu0 %1937
        %v1939 = vadd.f32 %v1899, %v1900
        %1940 = vadd.xlane.f32.xlu0 %v1939
        %v1941 = vpop.xlane.xlu0 %1940
        %v1942 = vadd.f32 %v1901, %v1902
        %1943 = vadd.xlane.f32.xlu0 %v1942
        %v1944 = vpop.xlane.xlu0 %1943
        %v1945 = vadd.f32 %v1903, %v1904
        %1946 = vadd.xlane.f32.xlu0 %v1945
        %v1947 = vpop.xlane.xlu0 %1946
        %v1948 = vadd.f32 %v1905, %v1906
        %1949 = vadd.xlane.f32.xlu0 %v1948
        %v1950 = vpop.xlane.xlu0 %1949
        %v1951 = vadd.f32 %v1907, %v1908
        %1952 = vadd.xlane.f32.xlu0 %v1951
        %v1953 = vpop.xlane.xlu0 %1952
        %v1954 = vadd.f32 %v1909, %v1910
        %1955 = vadd.xlane.f32.xlu0 %v1954
        %v1956 = vpop.xlane.xlu0 %1955
        %v1957 = vadd.f32 %v1911, %v1912
        %1958 = vadd.xlane.f32.xlu0 %v1957
        %v1959 = vpop.xlane.xlu0 %1958
        %v1960 = vadd.f32 %v1913, %v1914
        %1961 = vadd.xlane.f32.xlu0 %v1960
        %v1962 = vpop.xlane.xlu0 %1961
        %v1963 = vmul.f32 %v1917, %v533
        %v1964 = vmul.f32 %v1920, %v533
        %v1965 = vmul.f32 %v1923, %v533
        %v1966 = vmul.f32 %v1926, %v533
        %v1967 = vmul.f32 %v1929, %v533
        %v1968 = vmul.f32 %v1932, %v533
        %v1969 = vmul.f32 %v1935, %v533
        %v1970 = vmul.f32 %v1938, %v533
        %v1971 = vmul.f32 %v1941, %v533
        %v1972 = vmul.f32 %v1944, %v533
        %v1973 = vmul.f32 %v1947, %v533
        %v1974 = vmul.f32 %v1950, %v533
        %v1975 = vmul.f32 %v1953, %v533
        %v1976 = vmul.f32 %v1956, %v533
        %v1977 = vmul.f32 %v1959, %v533
        %v1978 = vmul.f32 %v1962, %v533
        %v1979 = vmul.f32 %v1867, %v1867
        %v1980 = vmul.f32 %v1868, %v1868
        %v1981 = vmul.f32 %v1869, %v1869
        %v1982 = vmul.f32 %v1870, %v1870
        %v1983 = vmul.f32 %v1871, %v1871
        %v1984 = vmul.f32 %v1872, %v1872
        %v1985 = vmul.f32 %v1873, %v1873
        %v1986 = vmul.f32 %v1874, %v1874
        %v1987 = vmul.f32 %v1875, %v1875
        %v1988 = vmul.f32 %v1876, %v1876
        %v1989 = vmul.f32 %v1877, %v1877
        %v1990 = vmul.f32 %v1878, %v1878
        %v1991 = vmul.f32 %v1879, %v1879
        %v1992 = vmul.f32 %v1880, %v1880
        %v1993 = vmul.f32 %v1881, %v1881
        %v1994 = vmul.f32 %v1882, %v1882
        %v1995 = vsub.f32 %v1963, %v1979
        %v1996 = vsub.f32 %v1964, %v1980
        %v1997 = vsub.f32 %v1965, %v1981
        %v1998 = vsub.f32 %v1966, %v1982
        %v1999 = vsub.f32 %v1967, %v1983
        %v2000 = vsub.f32 %v1968, %v1984
        %v2001 = vsub.f32 %v1969, %v1985
        %v2002 = vsub.f32 %v1970, %v1986
        %v2003 = vsub.f32 %v1971, %v1987
        %v2004 = vsub.f32 %v1972, %v1988
        %v2005 = vsub.f32 %v1973, %v1989
        %v2006 = vsub.f32 %v1974, %v1990
        %v2007 = vsub.f32 %v1975, %v1991
        %v2008 = vsub.f32 %v1976, %v1992
        %v2009 = vsub.f32 %v1977, %v1993
        %v2010 = vsub.f32 %v1978, %v1994
        %v2011 = vmax.f32 %v1995, 0.0
        %v2012 = vmax.f32 %v1996, 0.0
        %v2013 = vmax.f32 %v1997, 0.0
        %v2014 = vmax.f32 %v1998, 0.0
        %v2015 = vmax.f32 %v1999, 0.0
        %v2016 = vmax.f32 %v2000, 0.0
        %v2017 = vmax.f32 %v2001, 0.0
        %v2018 = vmax.f32 %v2002, 0.0
        %v2019 = vmax.f32 %v2003, 0.0
        %v2020 = vmax.f32 %v2004, 0.0
        %v2021 = vmax.f32 %v2005, 0.0
        %v2022 = vmax.f32 %v2006, 0.0
        %v2023 = vmax.f32 %v2007, 0.0
        %v2024 = vmax.f32 %v2008, 0.0
        %v2025 = vmax.f32 %v2009, 0.0
        %v2026 = vmax.f32 %v2010, 0.0
        %v2027 = vsub.f32 %v1741, %v1867
        %v2028 = vsub.f32 %v1743, %v1867
        %v2029 = vsub.f32 %v1745, %v1868
        %v2030 = vsub.f32 %v1747, %v1868
        %v2031 = vsub.f32 %v1751, %v1869
        %v2032 = vsub.f32 %v1753, %v1869
        %v2033 = vsub.f32 %v1755, %v1870
        %v2034 = vsub.f32 %v1757, %v1870
        %v2035 = vsub.f32 %v1761, %v1871
        %v2036 = vsub.f32 %v1763, %v1871
        %v2037 = vsub.f32 %v1765, %v1872
        %v2038 = vsub.f32 %v1767, %v1872
        %v2039 = vsub.f32 %v1771, %v1873
        %v2040 = vsub.f32 %v1773, %v1873
        %v2041 = vsub.f32 %v1775, %v1874
        %v2042 = vsub.f32 %v1777, %v1874
        %v2043 = vsub.f32 %v1781, %v1875
        %v2044 = vsub.f32 %v1783, %v1875
        %v2045 = vsub.f32 %v1785, %v1876
        %v2046 = vsub.f32 %v1787, %v1876
        %v2047 = vsub.f32 %v1791, %v1877
        %v2048 = vsub.f32 %v1793, %v1877
        %v2049 = vsub.f32 %v1795, %v1878
        %v2050 = vsub.f32 %v1797, %v1878
        %v2051 = vsub.f32 %v1801, %v1879
        %v2052 = vsub.f32 %v1803, %v1879
        %v2053 = vsub.f32 %v1805, %v1880
        %v2054 = vsub.f32 %v1807, %v1880
        %v2055 = vsub.f32 %v1811, %v1881
        %v2056 = vsub.f32 %v1813, %v1881
        %v2057 = vsub.f32 %v1815, %v1882
        %v2058 = vsub.f32 %v1817, %v1882
        %v2059 = vadd.f32 %v2011, 1e-05
        %v2060 = vadd.f32 %v2012, 1e-05
        %v2061 = vadd.f32 %v2013, 1e-05
        %v2062 = vadd.f32 %v2014, 1e-05
        %v2063 = vadd.f32 %v2015, 1e-05
        %v2064 = vadd.f32 %v2016, 1e-05
        %v2065 = vadd.f32 %v2017, 1e-05
        %v2066 = vadd.f32 %v2018, 1e-05
        %v2067 = vadd.f32 %v2019, 1e-05
        %v2068 = vadd.f32 %v2020, 1e-05
        %v2069 = vadd.f32 %v2021, 1e-05
        %v2070 = vadd.f32 %v2022, 1e-05
        %v2071 = vadd.f32 %v2023, 1e-05
        %v2072 = vadd.f32 %v2024, 1e-05
        %v2073 = vadd.f32 %v2025, 1e-05
        %v2074 = vadd.f32 %v2026, 1e-05
        %v2075 = vrsqrt.pop %v2059
        %v2076 = vrsqrt.pop %v2060
        %v2077 = vrsqrt.pop %v2061
        %v2078 = vrsqrt.pop %v2062
        %v2079 = vrsqrt.pop %v2063
        %v2080 = vrsqrt.pop %v2064
        %v2081 = vrsqrt.pop %v2065
        %v2082 = vrsqrt.pop %v2066
        %v2083 = vrsqrt.pop %v2067
        %v2084 = vrsqrt.pop %v2068
        %v2085 = vrsqrt.pop %v2069
        %v2086 = vrsqrt.pop %v2070
        %v2087 = vrsqrt.pop %v2071
        %v2088 = vrsqrt.pop %v2072
        %v2089 = vrsqrt.pop %v2073
        %v2090 = vrsqrt.pop %v2074
        %v2091 = vmul.f32 %v2027, %v2075
        %v2092 = vmul.f32 %v2028, %v2075
        %v2093 = vmul.f32 %v2029, %v2076
        %v2094 = vmul.f32 %v2030, %v2076
        %v2095 = vmul.f32 %v2031, %v2077
        %v2096 = vmul.f32 %v2032, %v2077
        %v2097 = vmul.f32 %v2033, %v2078
        %v2098 = vmul.f32 %v2034, %v2078
        %v2099 = vmul.f32 %v2035, %v2079
        %v2100 = vmul.f32 %v2036, %v2079
        %v2101 = vmul.f32 %v2037, %v2080
        %v2102 = vmul.f32 %v2038, %v2080
        %v2103 = vmul.f32 %v2039, %v2081
        %v2104 = vmul.f32 %v2040, %v2081
        %v2105 = vmul.f32 %v2041, %v2082
        %v2106 = vmul.f32 %v2042, %v2082
        %v2107 = vmul.f32 %v2043, %v2083
        %v2108 = vmul.f32 %v2044, %v2083
        %v2109 = vmul.f32 %v2045, %v2084
        %v2110 = vmul.f32 %v2046, %v2084
        %v2111 = vmul.f32 %v2047, %v2085
        %v2112 = vmul.f32 %v2048, %v2085
        %v2113 = vmul.f32 %v2049, %v2086
        %v2114 = vmul.f32 %v2050, %v2086
        %v2115 = vmul.f32 %v2051, %v2087
        %v2116 = vmul.f32 %v2052, %v2087
        %v2117 = vmul.f32 %v2053, %v2088
        %v2118 = vmul.f32 %v2054, %v2088
        %v2119 = vmul.f32 %v2055, %v2089
        %v2120 = vmul.f32 %v2056, %v2089
        %v2121 = vmul.f32 %v2057, %v2090
        %v2122 = vmul.f32 %v2058, %v2090
        %v2123 = vmax.f32 %v2091, 0.0
        %v2124 = vmax.f32 %v2092, 0.0
        %v2125 = vmax.f32 %v2093, 0.0
        %v2126 = vmax.f32 %v2094, 0.0
        %v2127 = vmax.f32 %v2095, 0.0
        %v2128 = vmax.f32 %v2096, 0.0
        %v2129 = vmax.f32 %v2097, 0.0
        %v2130 = vmax.f32 %v2098, 0.0
        %v2131 = vmax.f32 %v2099, 0.0
        %v2132 = vmax.f32 %v2100, 0.0
        %v2133 = vmax.f32 %v2101, 0.0
        %v2134 = vmax.f32 %v2102, 0.0
        %v2135 = vmax.f32 %v2103, 0.0
        %v2136 = vmax.f32 %v2104, 0.0
        %v2137 = vmax.f32 %v2105, 0.0
        %v2138 = vmax.f32 %v2106, 0.0
        %v2139 = vmax.f32 %v2107, 0.0
        %v2140 = vmax.f32 %v2108, 0.0
        %v2141 = vmax.f32 %v2109, 0.0
        %v2142 = vmax.f32 %v2110, 0.0
        %v2143 = vmax.f32 %v2111, 0.0
        %v2144 = vmax.f32 %v2112, 0.0
        %v2145 = vmax.f32 %v2113, 0.0
        %v2146 = vmax.f32 %v2114, 0.0
        %v2147 = vmax.f32 %v2115, 0.0
        %v2148 = vmax.f32 %v2116, 0.0
        %v2149 = vmax.f32 %v2117, 0.0
        %v2150 = vmax.f32 %v2118, 0.0
        %v2151 = vmax.f32 %v2119, 0.0
        %v2152 = vmax.f32 %v2120, 0.0
        %v2153 = vmax.f32 %v2121, 0.0
        %v2154 = vmax.f32 %v2122, 0.0
        %v2155 = vpack.c.bf16 %v2125, %v2123
        %v2156 = vpack.c.bf16 %v2126, %v2124
        %v2157 = vpack.c.bf16 %v2129, %v2127
        %v2158 = vpack.c.bf16 %v2130, %v2128
        %v2159 = vpack.c.bf16 %v2133, %v2131
        %v2160 = vpack.c.bf16 %v2134, %v2132
        %v2161 = vpack.c.bf16 %v2137, %v2135
        %v2162 = vpack.c.bf16 %v2138, %v2136
        %v2163 = vpack.c.bf16 %v2141, %v2139
        %v2164 = vpack.c.bf16 %v2142, %v2140
        %v2165 = vpack.c.bf16 %v2145, %v2143
        %v2166 = vpack.c.bf16 %v2146, %v2144
        %v2167 = vpack.c.bf16 %v2149, %v2147
        %v2168 = vpack.c.bf16 %v2150, %v2148
        %v2169 = vpack.c.bf16 %v2153, %v2151
        %v2170 = vpack.c.bf16 %v2154, %v2152
        %s2171 = scalar_lea.vmem [#allocation2], 512
        %v2172 = vld [vmem:[%s2171] sm:$0xff]
        %v2173 = vld [vmem:[%s2171 + $0x8] sm:$0xff]
        %v2174 = vld [vmem:[%s2171 + $0x10] sm:$0xff]
        %v2175 = vld [vmem:[%s2171 + $0x18] sm:$0xff]
        %v2176 = vld [vmem:[%s2171 + $0x20] sm:$0xff]
        %v2177 = vld [vmem:[%s2171 + $0x28] sm:$0xff]
        %v2178 = vld [vmem:[%s2171 + $0x30] sm:$0xff]
        %v2179 = vld [vmem:[%s2171 + $0x38] sm:$0xff]
        %v2180 = vld [vmem:[%s2171 + $0x40] sm:$0xff]
        %v2181 = vld [vmem:[%s2171 + $0x48] sm:$0xff]
        %v2182 = vld [vmem:[%s2171 + $0x50] sm:$0xff]
        %v2183 = vld [vmem:[%s2171 + $0x58] sm:$0xff]
        %v2184 = vld [vmem:[%s2171 + $0x60] sm:$0xff]
        %v2185 = vld [vmem:[%s2171 + $0x68] sm:$0xff]
        %v2186 = vld [vmem:[%s2171 + $0x70] sm:$0xff]
        %v2187 = vld [vmem:[%s2171 + $0x78] sm:$0xff]
        %v2188 = vld [vmem:[%s2171 + $0x80] sm:$0xff]
        %v2189 = vld [vmem:[%s2171 + $0x88] sm:$0xff]
        %v2190 = vld [vmem:[%s2171 + $0x90] sm:$0xff]
        %v2191 = vld [vmem:[%s2171 + $0x98] sm:$0xff]
        %v2192 = vld [vmem:[%s2171 + $0xa0] sm:$0xff]
        %v2193 = vld [vmem:[%s2171 + $0xa8] sm:$0xff]
        %v2194 = vld [vmem:[%s2171 + $0xb0] sm:$0xff]
        %v2195 = vld [vmem:[%s2171 + $0xb8] sm:$0xff]
        %v2196 = vld [vmem:[%s2171 + $0xc0] sm:$0xff]
        %v2197 = vld [vmem:[%s2171 + $0xc8] sm:$0xff]
        %v2198 = vld [vmem:[%s2171 + $0xd0] sm:$0xff]
        %v2199 = vld [vmem:[%s2171 + $0xd8] sm:$0xff]
        %v2200 = vld [vmem:[%s2171 + $0xe0] sm:$0xff]
        %v2201 = vld [vmem:[%s2171 + $0xe8] sm:$0xff]
        %v2202 = vld [vmem:[%s2171 + $0xf0] sm:$0xff]
        %v2203 = vld [vmem:[%s2171 + $0xf8] sm:$0xff]
        %v2204 = vlaneseq
        %v2205 = vshrl.u32 %v2204, 7
        %v2206 = vsub.s32 2, %v2205
        %v2207 = vrot.slane %v822, %v2206
        %v2208 = vlaneseq
        %v2209 = vshrl.u32 %v2208, 7
        %v2210 = vsub.s32 2, %v2209
        %v2211 = vrot.slane %v823, %v2210
        %v2244 = vunpack.c.l.b16 %v2172
        %v2245 = vunpack.c.h.b16 %v2172
        %v2246 = vunpack.c.l.b16 %v2173
        %v2247 = vunpack.c.h.b16 %v2173
        %v2248 = vunpack.c.l.b16 %v2174
        %v2249 = vunpack.c.h.b16 %v2174
        %v2250 = vunpack.c.l.b16 %v2175
        %v2251 = vunpack.c.h.b16 %v2175
        %v2252 = vunpack.c.l.b16 %v2176
        %v2253 = vunpack.c.h.b16 %v2176
        %v2254 = vunpack.c.l.b16 %v2177
        %v2255 = vunpack.c.h.b16 %v2177
        %v2256 = vunpack.c.l.b16 %v2178
        %v2257 = vunpack.c.h.b16 %v2178
        %v2258 = vunpack.c.l.b16 %v2179
        %v2259 = vunpack.c.h.b16 %v2179
        %v2260 = vunpack.c.l.b16 %v2180
        %v2261 = vunpack.c.h.b16 %v2180
        %v2262 = vunpack.c.l.b16 %v2181
        %v2263 = vunpack.c.h.b16 %v2181
        %v2264 = vunpack.c.l.b16 %v2182
        %v2265 = vunpack.c.h.b16 %v2182
        %v2266 = vunpack.c.l.b16 %v2183
        %v2267 = vunpack.c.h.b16 %v2183
        %v2268 = vunpack.c.l.b16 %v2184
        %v2269 = vunpack.c.h.b16 %v2184
        %v2270 = vunpack.c.l.b16 %v2185
        %v2271 = vunpack.c.h.b16 %v2185
        %v2272 = vunpack.c.l.b16 %v2186
        %v2273 = vunpack.c.h.b16 %v2186
        %v2274 = vunpack.c.l.b16 %v2187
        %v2275 = vunpack.c.h.b16 %v2187
        %v2276 = vunpack.c.l.b16 %v2188
        %v2277 = vunpack.c.h.b16 %v2188
        %v2278 = vunpack.c.l.b16 %v2189
        %v2279 = vunpack.c.h.b16 %v2189
        %v2280 = vunpack.c.l.b16 %v2190
        %v2281 = vunpack.c.h.b16 %v2190
        %v2282 = vunpack.c.l.b16 %v2191
        %v2283 = vunpack.c.h.b16 %v2191
        %v2284 = vunpack.c.l.b16 %v2192
        %v2285 = vunpack.c.h.b16 %v2192
        %v2286 = vunpack.c.l.b16 %v2193
        %v2287 = vunpack.c.h.b16 %v2193
        %v2288 = vunpack.c.l.b16 %v2194
        %v2289 = vunpack.c.h.b16 %v2194
        %v2290 = vunpack.c.l.b16 %v2195
        %v2291 = vunpack.c.h.b16 %v2195
        %v2292 = vunpack.c.l.b16 %v2196
        %v2293 = vunpack.c.h.b16 %v2196
        %v2294 = vunpack.c.l.b16 %v2197
        %v2295 = vunpack.c.h.b16 %v2197
        %v2296 = vunpack.c.l.b16 %v2198
        %v2297 = vunpack.c.h.b16 %v2198
        %v2298 = vunpack.c.l.b16 %v2199
        %v2299 = vunpack.c.h.b16 %v2199
        %v2300 = vunpack.c.l.b16 %v2200
        %v2301 = vunpack.c.h.b16 %v2200
        %v2302 = vunpack.c.l.b16 %v2201
        %v2303 = vunpack.c.h.b16 %v2201
        %v2304 = vunpack.c.l.b16 %v2202
        %v2305 = vunpack.c.h.b16 %v2202
        %v2306 = vunpack.c.l.b16 %v2203
        %v2307 = vunpack.c.h.b16 %v2203
        %v2308 = vpack.c.b16 %v2246, %v2244
        %v2309 = vpack.c.b16 %v2247, %v2245
        %v2310 = vpack.c.b16 %v2250, %v2248
        %v2311 = vpack.c.b16 %v2251, %v2249
        %v2312 = vpack.c.b16 %v2254, %v2252
        %v2313 = vpack.c.b16 %v2255, %v2253
        %v2314 = vpack.c.b16 %v2258, %v2256
        %v2315 = vpack.c.b16 %v2259, %v2257
        %v2316 = vpack.c.b16 %v2262, %v2260
        %v2317 = vpack.c.b16 %v2263, %v2261
        %v2318 = vpack.c.b16 %v2266, %v2264
        %v2319 = vpack.c.b16 %v2267, %v2265
        %v2320 = vpack.c.b16 %v2270, %v2268
        %v2321 = vpack.c.b16 %v2271, %v2269
        %v2322 = vpack.c.b16 %v2274, %v2272
        %v2323 = vpack.c.b16 %v2275, %v2273
        %v2324 = vpack.c.b16 %v2278, %v2276
        %v2325 = vpack.c.b16 %v2279, %v2277
        %v2326 = vpack.c.b16 %v2282, %v2280
        %v2327 = vpack.c.b16 %v2283, %v2281
        %v2328 = vpack.c.b16 %v2286, %v2284
        %v2329 = vpack.c.b16 %v2287, %v2285
        %v2330 = vpack.c.b16 %v2290, %v2288
        %v2331 = vpack.c.b16 %v2291, %v2289
        %v2332 = vpack.c.b16 %v2294, %v2292
        %v2333 = vpack.c.b16 %v2295, %v2293
        %v2334 = vpack.c.b16 %v2298, %v2296
        %v2335 = vpack.c.b16 %v2299, %v2297
        %v2336 = vpack.c.b16 %v2302, %v2300
        %v2337 = vpack.c.b16 %v2303, %v2301
        %v2338 = vpack.c.b16 %v2306, %v2304
        %v2339 = vpack.c.b16 %v2307, %v2305
        %2372 = vmatprep.subr.bf16.mxu0 %v2309
        %2373 = vmatpush1.bf16.msra.mxu0 %v2308
        %2374 = vmatprep.subr.bf16.mxu0 %v2311
        %2375 = vmatpush1.bf16.msra.mxu0 %v2310
        %2376 = vmatprep.subr.bf16.mxu0 %v2313
        %2377 = vmatpush1.bf16.msra.mxu0 %v2312
        %2378 = vmatprep.subr.bf16.mxu0 %v2315
        %2379 = vmatpush1.bf16.msra.mxu0 %v2314
        %2380 = vmatprep.subr.bf16.mxu0 %v2317
        %2381 = vmatpush1.bf16.msra.mxu0 %v2316
        %2382 = vmatprep.subr.bf16.mxu0 %v2319
        %2383 = vmatpush1.bf16.msra.mxu0 %v2318
        %2384 = vmatprep.subr.bf16.mxu0 %v2321
        %2385 = vmatpush1.bf16.msra.mxu0 %v2320
        %2386 = vmatprep.subr.bf16.mxu0 %v2323
        %2387 = vmatpush1.bf16.msra.mxu0 %v2322
        %2388 = vmatprep.subr.bf16.mxu0 %v2325
        %2389 = vmatpush1.bf16.msra.mxu0 %v2324
        %2390 = vmatprep.subr.bf16.mxu0 %v2327
        %2391 = vmatpush1.bf16.msra.mxu0 %v2326
        %2392 = vmatprep.subr.bf16.mxu0 %v2329
        %2393 = vmatpush1.bf16.msra.mxu0 %v2328
        %2394 = vmatprep.subr.bf16.mxu0 %v2331
        %2395 = vmatpush1.bf16.msra.mxu0 %v2330
        %2396 = vmatprep.subr.bf16.mxu0 %v2333
        %2397 = vmatpush1.bf16.msra.mxu0 %v2332
        %2398 = vmatprep.subr.bf16.mxu0 %v2335
        %2399 = vmatpush1.bf16.msra.mxu0 %v2334
        %2400 = vmatprep.subr.bf16.mxu0 %v2337
        %2401 = vmatpush1.bf16.msra.mxu0 %v2336
        %2402 = vmatprep.subr.bf16.mxu0 %v2339
        %2403 = vmatpush1.bf16.msra.mxu0 %v2338
        %2404 = vmatprep.mubr.bf16.mxu0 %v2156
        %2405 = vmatmul.mubr.bf16.gmra.mrb[0].mxu0 %v2155
        %v2406 = vpop.f32.mrb[0].mxu0
        %v2407 = vadd.f32 %v2207, %v2406
        %v2408 = vpop.f32.mrb[0].mxu0
        %v2409 = vadd.f32 %v2211, %v2408
        %v2410 = vpop.f32.mrb[0].mxu0
        %v2411 = vadd.f32 %v2207, %v2410
        %v2412 = vpop.f32.mrb[0].mxu0
        %v2413 = vadd.f32 %v2211, %v2412
        %2414 = vmatprep.mubr.bf16.mxu0 %v2158
        %2415 = vmatmul.mubr.bf16.gmra.mrb[0].mxu0 %v2157
        %v2416 = vpop.f32.mrb[0].mxu0
        %v2417 = vadd.f32 %v2207, %v2416
        %v2418 = vpop.f32.mrb[0].mxu0
        %v2419 = vadd.f32 %v2211, %v2418
        %v2420 = vpop.f32.mrb[0].mxu0
        %v2421 = vadd.f32 %v2207, %v2420
        %v2422 = vpop.f32.mrb[0].mxu0
        %v2423 = vadd.f32 %v2211, %v2422
        %2424 = vmatprep.mubr.bf16.mxu0 %v2160
        %2425 = vmatmul.mubr.bf16.gmra.mrb[0].mxu0 %v2159
        %v2426 = vpop.f32.mrb[0].mxu0
        %v2427 = vadd.f32 %v2207, %v2426
        %v2428 = vpop.f32.mrb[0].mxu0
        %v2429 = vadd.f32 %v2211, %v2428
        %v2430 = vpop.f32.mrb[0].mxu0
        %v2431 = vadd.f32 %v2207, %v2430
        %v2432 = vpop.f32.mrb[0].mxu0
        %v2433 = vadd.f32 %v2211, %v2432
        %2434 = vmatprep.mubr.bf16.mxu0 %v2162
        %2435 = vmatmul.mubr.bf16.gmra.mrb[0].mxu0 %v2161
        %v2436 = vpop.f32.mrb[0].mxu0
        %v2437 = vadd.f32 %v2207, %v2436
        %v2438 = vpop.f32.mrb[0].mxu0
        %v2439 = vadd.f32 %v2211, %v2438
        %v2440 = vpop.f32.mrb[0].mxu0
        %v2441 = vadd.f32 %v2207, %v2440
        %v2442 = vpop.f32.mrb[0].mxu0
        %v2443 = vadd.f32 %v2211, %v2442
        %2444 = vmatprep.mubr.bf16.mxu0 %v2164
        %2445 = vmatmul.mubr.bf16.gmra.mrb[0].mxu0 %v2163
        %v2446 = vpop.f32.mrb[0].mxu0
        %v2447 = vadd.f32 %v2207, %v2446
        %v2448 = vpop.f32.mrb[0].mxu0
        %v2449 = vadd.f32 %v2211, %v2448
        %v2450 = vpop.f32.mrb[0].mxu0
        %v2451 = vadd.f32 %v2207, %v2450
        %v2452 = vpop.f32.mrb[0].mxu0
        %v2453 = vadd.f32 %v2211, %v2452
        %2454 = vmatprep.mubr.bf16.mxu0 %v2166
        %2455 = vmatmul.mubr.bf16.gmra.mrb[0].mxu0 %v2165
        %v2456 = vpop.f32.mrb[0].mxu0
        %v2457 = vadd.f32 %v2207, %v2456
        %v2458 = vpop.f32.mrb[0].mxu0
        %v2459 = vadd.f32 %v2211, %v2458
        %v2460 = vpop.f32.mrb[0].mxu0
        %v2461 = vadd.f32 %v2207, %v2460
        %v2462 = vpop.f32.mrb[0].mxu0
        %v2463 = vadd.f32 %v2211, %v2462
        %2464 = vmatprep.mubr.bf16.mxu0 %v2168
        %2465 = vmatmul.mubr.bf16.gmra.mrb[0].mxu0 %v2167
        %v2466 = vpop.f32.mrb[0].mxu0
        %v2467 = vadd.f32 %v2207, %v2466
        %v2468 = vpop.f32.mrb[0].mxu0
        %v2469 = vadd.f32 %v2211, %v2468
        %v2470 = vpop.f32.mrb[0].mxu0
        %v2471 = vadd.f32 %v2207, %v2470
        %v2472 = vpop.f32.mrb[0].mxu0
        %v2473 = vadd.f32 %v2211, %v2472
        %2474 = vmatprep.mubr.bf16.mxu0 %v2170
        %2475 = vmatmul.mubr.bf16.gmra.mrb[0].mxu0 %v2169
        %v2476 = vpop.f32.mrb[0].mxu0
        %v2477 = vadd.f32 %v2207, %v2476
        %v2478 = vpop.f32.mrb[0].mxu0
        %v2479 = vadd.f32 %v2211, %v2478
        %v2480 = vpop.f32.mrb[0].mxu0
        %v2481 = vadd.f32 %v2207, %v2480
        %v2482 = vpop.f32.mrb[0].mxu0
        %v2483 = vadd.f32 %v2211, %v2482
        %2484 = vdwg.mxu0
        %v2485 = vadd.f32 %v2407, %v2409
        %2486 = vadd.xlane.f32.xlu0 %v2485
        %v2487 = vpop.xlane.xlu0 %2486
        %v2488 = vadd.f32 %v2411, %v2413
        %2489 = vadd.xlane.f32.xlu0 %v2488
        %v2490 = vpop.xlane.xlu0 %2489
        %v2491 = vadd.f32 %v2417, %v2419
        %2492 = vadd.xlane.f32.xlu0 %v2491
        %v2493 = vpop.xlane.xlu0 %2492
        %v2494 = vadd.f32 %v2421, %v2423
        %2495 = vadd.xlane.f32.xlu0 %v2494
        %v2496 = vpop.xlane.xlu0 %2495
        %v2497 = vadd.f32 %v2427, %v2429
        %2498 = vadd.xlane.f32.xlu0 %v2497
        %v2499 = vpop.xlane.xlu0 %2498
        %v2500 = vadd.f32 %v2431, %v2433
        %2501 = vadd.xlane.f32.xlu0 %v2500
        %v2502 = vpop.xlane.xlu0 %2501
        %v2503 = vadd.f32 %v2437, %v2439
        %2504 = vadd.xlane.f32.xlu0 %v2503
        %v2505 = vpop.xlane.xlu0 %2504
        %v2506 = vadd.f32 %v2441, %v2443
        %2507 = vadd.xlane.f32.xlu0 %v2506
        %v2508 = vpop.xlane.xlu0 %2507
        %v2509 = vadd.f32 %v2447, %v2449
        %2510 = vadd.xlane.f32.xlu0 %v2509
        %v2511 = vpop.xlane.xlu0 %2510
        %v2512 = vadd.f32 %v2451, %v2453
        %2513 = vadd.xlane.f32.xlu0 %v2512
        %v2514 = vpop.xlane.xlu0 %2513
        %v2515 = vadd.f32 %v2457, %v2459
        %2516 = vadd.xlane.f32.xlu0 %v2515
        %v2517 = vpop.xlane.xlu0 %2516
        %v2518 = vadd.f32 %v2461, %v2463
        %2519 = vadd.xlane.f32.xlu0 %v2518
        %v2520 = vpop.xlane.xlu0 %2519
        %v2521 = vadd.f32 %v2467, %v2469
        %2522 = vadd.xlane.f32.xlu0 %v2521
        %v2523 = vpop.xlane.xlu0 %2522
        %v2524 = vadd.f32 %v2471, %v2473
        %2525 = vadd.xlane.f32.xlu0 %v2524
        %v2526 = vpop.xlane.xlu0 %2525
        %v2527 = vadd.f32 %v2477, %v2479
        %2528 = vadd.xlane.f32.xlu0 %v2527
        %v2529 = vpop.xlane.xlu0 %2528
        %v2530 = vadd.f32 %v2481, %v2483
        %2531 = vadd.xlane.f32.xlu0 %v2530
        %v2532 = vpop.xlane.xlu0 %2531
        %v2533 = vmul.f32 %v2487, %v533
        %v2534 = vmul.f32 %v2490, %v533
        %v2535 = vmul.f32 %v2493, %v533
        %v2536 = vmul.f32 %v2496, %v533
        %v2537 = vmul.f32 %v2499, %v533
        %v2538 = vmul.f32 %v2502, %v533
        %v2539 = vmul.f32 %v2505, %v533
        %v2540 = vmul.f32 %v2508, %v533
        %v2541 = vmul.f32 %v2511, %v533
        %v2542 = vmul.f32 %v2514, %v533
        %v2543 = vmul.f32 %v2517, %v533
        %v2544 = vmul.f32 %v2520, %v533
        %v2545 = vmul.f32 %v2523, %v533
        %v2546 = vmul.f32 %v2526, %v533
        %v2547 = vmul.f32 %v2529, %v533
        %v2548 = vmul.f32 %v2532, %v533
        %v2549 = vmul.f32 %v2407, %v2407
        %v2550 = vmul.f32 %v2409, %v2409
        %v2551 = vmul.f32 %v2411, %v2411
        %v2552 = vmul.f32 %v2413, %v2413
        %v2553 = vmul.f32 %v2417, %v2417
        %v2554 = vmul.f32 %v2419, %v2419
        %v2555 = vmul.f32 %v2421, %v2421
        %v2556 = vmul.f32 %v2423, %v2423
        %v2557 = vmul.f32 %v2427, %v2427
        %v2558 = vmul.f32 %v2429, %v2429
        %v2559 = vmul.f32 %v2431, %v2431
        %v2560 = vmul.f32 %v2433, %v2433
        %v2561 = vmul.f32 %v2437, %v2437
        %v2562 = vmul.f32 %v2439, %v2439
        %v2563 = vmul.f32 %v2441, %v2441
        %v2564 = vmul.f32 %v2443, %v2443
        %v2565 = vmul.f32 %v2447, %v2447
        %v2566 = vmul.f32 %v2449, %v2449
        %v2567 = vmul.f32 %v2451, %v2451
        %v2568 = vmul.f32 %v2453, %v2453
        %v2569 = vmul.f32 %v2457, %v2457
        %v2570 = vmul.f32 %v2459, %v2459
        %v2571 = vmul.f32 %v2461, %v2461
        %v2572 = vmul.f32 %v2463, %v2463
        %v2573 = vmul.f32 %v2467, %v2467
        %v2574 = vmul.f32 %v2469, %v2469
        %v2575 = vmul.f32 %v2471, %v2471
        %v2576 = vmul.f32 %v2473, %v2473
        %v2577 = vmul.f32 %v2477, %v2477
        %v2578 = vmul.f32 %v2479, %v2479
        %v2579 = vmul.f32 %v2481, %v2481
        %v2580 = vmul.f32 %v2483, %v2483
        %v2581 = vadd.f32 %v2549, %v2550
        %2582 = vadd.xlane.f32.xlu0 %v2581
        %v2583 = vpop.xlane.xlu0 %2582
        %v2584 = vadd.f32 %v2551, %v2552
        %2585 = vadd.xlane.f32.xlu0 %v2584
        %v2586 = vpop.xlane.xlu0 %2585
        %v2587 = vadd.f32 %v2553, %v2554
        %2588 = vadd.xlane.f32.xlu0 %v2587
        %v2589 = vpop.xlane.xlu0 %2588
        %v2590 = vadd.f32 %v2555, %v2556
        %2591 = vadd.xlane.f32.xlu0 %v2590
        %v2592 = vpop.xlane.xlu0 %2591
        %v2593 = vadd.f32 %v2557, %v2558
        %2594 = vadd.xlane.f32.xlu0 %v2593
        %v2595 = vpop.xlane.xlu0 %2594
        %v2596 = vadd.f32 %v2559, %v2560
        %2597 = vadd.xlane.f32.xlu0 %v2596
        %v2598 = vpop.xlane.xlu0 %2597
        %v2599 = vadd.f32 %v2561, %v2562
        %2600 = vadd.xlane.f32.xlu0 %v2599
        %v2601 = vpop.xlane.xlu0 %2600
        %v2602 = vadd.f32 %v2563, %v2564
        %2603 = vadd.xlane.f32.xlu0 %v2602
        %v2604 = vpop.xlane.xlu0 %2603
        %v2605 = vadd.f32 %v2565, %v2566
        %2606 = vadd.xlane.f32.xlu0 %v2605
        %v2607 = vpop.xlane.xlu0 %2606
        %v2608 = vadd.f32 %v2567, %v2568
        %2609 = vadd.xlane.f32.xlu0 %v2608
        %v2610 = vpop.xlane.xlu0 %2609
        %v2611 = vadd.f32 %v2569, %v2570
        %2612 = vadd.xlane.f32.xlu0 %v2611
        %v2613 = vpop.xlane.xlu0 %2612
        %v2614 = vadd.f32 %v2571, %v2572
        %2615 = vadd.xlane.f32.xlu0 %v2614
        %v2616 = vpop.xlane.xlu0 %2615
        %v2617 = vadd.f32 %v2573, %v2574
        %2618 = vadd.xlane.f32.xlu0 %v2617
        %v2619 = vpop.xlane.xlu0 %2618
        %v2620 = vadd.f32 %v2575, %v2576
        %2621 = vadd.xlane.f32.xlu0 %v2620
        %v2622 = vpop.xlane.xlu0 %2621
        %v2623 = vadd.f32 %v2577, %v2578
        %2624 = vadd.xlane.f32.xlu0 %v2623
        %v2625 = vpop.xlane.xlu0 %2624
        %v2626 = vadd.f32 %v2579, %v2580
        %2627 = vadd.xlane.f32.xlu0 %v2626
        %v2628 = vpop.xlane.xlu0 %2627
        %v2629 = vmul.f32 %v2583, %v533
        %v2630 = vmul.f32 %v2586, %v533
        %v2631 = vmul.f32 %v2589, %v533
        %v2632 = vmul.f32 %v2592, %v533
        %v2633 = vmul.f32 %v2595, %v533
        %v2634 = vmul.f32 %v2598, %v533
        %v2635 = vmul.f32 %v2601, %v533
        %v2636 = vmul.f32 %v2604, %v533
        %v2637 = vmul.f32 %v2607, %v533
        %v2638 = vmul.f32 %v2610, %v533
        %v2639 = vmul.f32 %v2613, %v533
        %v2640 = vmul.f32 %v2616, %v533
        %v2641 = vmul.f32 %v2619, %v533
        %v2642 = vmul.f32 %v2622, %v533
        %v2643 = vmul.f32 %v2625, %v533
        %v2644 = vmul.f32 %v2628, %v533
        %v2645 = vmul.f32 %v2533, %v2533
        %v2646 = vmul.f32 %v2534, %v2534
        %v2647 = vmul.f32 %v2535, %v2535
        %v2648 = vmul.f32 %v2536, %v2536
        %v2649 = vmul.f32 %v2537, %v2537
        %v2650 = vmul.f32 %v2538, %v2538
        %v2651 = vmul.f32 %v2539, %v2539
        %v2652 = vmul.f32 %v2540, %v2540
        %v2653 = vmul.f32 %v2541, %v2541
        %v2654 = vmul.f32 %v2542, %v2542
        %v2655 = vmul.f32 %v2543, %v2543
        %v2656 = vmul.f32 %v2544, %v2544
        %v2657 = vmul.f32 %v2545, %v2545
        %v2658 = vmul.f32 %v2546, %v2546
        %v2659 = vmul.f32 %v2547, %v2547
        %v2660 = vmul.f32 %v2548, %v2548
        %v2661 = vsub.f32 %v2629, %v2645
        %v2662 = vsub.f32 %v2630, %v2646
        %v2663 = vsub.f32 %v2631, %v2647
        %v2664 = vsub.f32 %v2632, %v2648
        %v2665 = vsub.f32 %v2633, %v2649
        %v2666 = vsub.f32 %v2634, %v2650
        %v2667 = vsub.f32 %v2635, %v2651
        %v2668 = vsub.f32 %v2636, %v2652
        %v2669 = vsub.f32 %v2637, %v2653
        %v2670 = vsub.f32 %v2638, %v2654
        %v2671 = vsub.f32 %v2639, %v2655
        %v2672 = vsub.f32 %v2640, %v2656
        %v2673 = vsub.f32 %v2641, %v2657
        %v2674 = vsub.f32 %v2642, %v2658
        %v2675 = vsub.f32 %v2643, %v2659
        %v2676 = vsub.f32 %v2644, %v2660
        %v2677 = vmax.f32 %v2661, 0.0
        %v2678 = vmax.f32 %v2662, 0.0
        %v2679 = vmax.f32 %v2663, 0.0
        %v2680 = vmax.f32 %v2664, 0.0
        %v2681 = vmax.f32 %v2665, 0.0
        %v2682 = vmax.f32 %v2666, 0.0
        %v2683 = vmax.f32 %v2667, 0.0
        %v2684 = vmax.f32 %v2668, 0.0
        %v2685 = vmax.f32 %v2669, 0.0
        %v2686 = vmax.f32 %v2670, 0.0
        %v2687 = vmax.f32 %v2671, 0.0
        %v2688 = vmax.f32 %v2672, 0.0
        %v2689 = vmax.f32 %v2673, 0.0
        %v2690 = vmax.f32 %v2674, 0.0
        %v2691 = vmax.f32 %v2675, 0.0
        %v2692 = vmax.f32 %v2676, 0.0
        %v2693 = vsub.f32 %v2407, %v2533
        %v2694 = vsub.f32 %v2409, %v2533
        %v2695 = vsub.f32 %v2411, %v2534
        %v2696 = vsub.f32 %v2413, %v2534
        %v2697 = vsub.f32 %v2417, %v2535
        %v2698 = vsub.f32 %v2419, %v2535
        %v2699 = vsub.f32 %v2421, %v2536
        %v2700 = vsub.f32 %v2423, %v2536
        %v2701 = vsub.f32 %v2427, %v2537
        %v2702 = vsub.f32 %v2429, %v2537
        %v2703 = vsub.f32 %v2431, %v2538
        %v2704 = vsub.f32 %v2433, %v2538
        %v2705 = vsub.f32 %v2437, %v2539
        %v2706 = vsub.f32 %v2439, %v2539
        %v2707 = vsub.f32 %v2441, %v2540
        %v2708 = vsub.f32 %v2443, %v2540
        %v2709 = vsub.f32 %v2447, %v2541
        %v2710 = vsub.f32 %v2449, %v2541
        %v2711 = vsub.f32 %v2451, %v2542
        %v2712 = vsub.f32 %v2453, %v2542
        %v2713 = vsub.f32 %v2457, %v2543
        %v2714 = vsub.f32 %v2459, %v2543
        %v2715 = vsub.f32 %v2461, %v2544
        %v2716 = vsub.f32 %v2463, %v2544
        %v2717 = vsub.f32 %v2467, %v2545
        %v2718 = vsub.f32 %v2469, %v2545
        %v2719 = vsub.f32 %v2471, %v2546
        %v2720 = vsub.f32 %v2473, %v2546
        %v2721 = vsub.f32 %v2477, %v2547
        %v2722 = vsub.f32 %v2479, %v2547
        %v2723 = vsub.f32 %v2481, %v2548
        %v2724 = vsub.f32 %v2483, %v2548
        %v2725 = vadd.f32 %v2677, 1e-05
        %v2726 = vadd.f32 %v2678, 1e-05
        %v2727 = vadd.f32 %v2679, 1e-05
        %v2728 = vadd.f32 %v2680, 1e-05
        %v2729 = vadd.f32 %v2681, 1e-05
        %v2730 = vadd.f32 %v2682, 1e-05
        %v2731 = vadd.f32 %v2683, 1e-05
        %v2732 = vadd.f32 %v2684, 1e-05
        %v2733 = vadd.f32 %v2685, 1e-05
        %v2734 = vadd.f32 %v2686, 1e-05
        %v2735 = vadd.f32 %v2687, 1e-05
        %v2736 = vadd.f32 %v2688, 1e-05
        %v2737 = vadd.f32 %v2689, 1e-05
        %v2738 = vadd.f32 %v2690, 1e-05
        %v2739 = vadd.f32 %v2691, 1e-05
        %v2740 = vadd.f32 %v2692, 1e-05
        %v2741 = vrsqrt.pop %v2725
        %v2742 = vrsqrt.pop %v2726
        %v2743 = vrsqrt.pop %v2727
        %v2744 = vrsqrt.pop %v2728
        %v2745 = vrsqrt.pop %v2729
        %v2746 = vrsqrt.pop %v2730
        %v2747 = vrsqrt.pop %v2731
        %v2748 = vrsqrt.pop %v2732
        %v2749 = vrsqrt.pop %v2733
        %v2750 = vrsqrt.pop %v2734
        %v2751 = vrsqrt.pop %v2735
        %v2752 = vrsqrt.pop %v2736
        %v2753 = vrsqrt.pop %v2737
        %v2754 = vrsqrt.pop %v2738
        %v2755 = vrsqrt.pop %v2739
        %v2756 = vrsqrt.pop %v2740
        %v2757 = vmul.f32 %v2693, %v2741
        %v2758 = vmul.f32 %v2694, %v2741
        %v2759 = vmul.f32 %v2695, %v2742
        %v2760 = vmul.f32 %v2696, %v2742
        %v2761 = vmul.f32 %v2697, %v2743
        %v2762 = vmul.f32 %v2698, %v2743
        %v2763 = vmul.f32 %v2699, %v2744
        %v2764 = vmul.f32 %v2700, %v2744
        %v2765 = vmul.f32 %v2701, %v2745
        %v2766 = vmul.f32 %v2702, %v2745
        %v2767 = vmul.f32 %v2703, %v2746
        %v2768 = vmul.f32 %v2704, %v2746
        %v2769 = vmul.f32 %v2705, %v2747
        %v2770 = vmul.f32 %v2706, %v2747
        %v2771 = vmul.f32 %v2707, %v2748
        %v2772 = vmul.f32 %v2708, %v2748
        %v2773 = vmul.f32 %v2709, %v2749
        %v2774 = vmul.f32 %v2710, %v2749
        %v2775 = vmul.f32 %v2711, %v2750
        %v2776 = vmul.f32 %v2712, %v2750
        %v2777 = vmul.f32 %v2713, %v2751
        %v2778 = vmul.f32 %v2714, %v2751
        %v2779 = vmul.f32 %v2715, %v2752
        %v2780 = vmul.f32 %v2716, %v2752
        %v2781 = vmul.f32 %v2717, %v2753
        %v2782 = vmul.f32 %v2718, %v2753
        %v2783 = vmul.f32 %v2719, %v2754
        %v2784 = vmul.f32 %v2720, %v2754
        %v2785 = vmul.f32 %v2721, %v2755
        %v2786 = vmul.f32 %v2722, %v2755
        %v2787 = vmul.f32 %v2723, %v2756
        %v2788 = vmul.f32 %v2724, %v2756
        %v2789 = vmax.f32 %v2757, 0.0
        %v2790 = vmax.f32 %v2758, 0.0
        %v2791 = vmax.f32 %v2759, 0.0
        %v2792 = vmax.f32 %v2760, 0.0
        %v2793 = vmax.f32 %v2761, 0.0
        %v2794 = vmax.f32 %v2762, 0.0
        %v2795 = vmax.f32 %v2763, 0.0
        %v2796 = vmax.f32 %v2764, 0.0
        %v2797 = vmax.f32 %v2765, 0.0
        %v2798 = vmax.f32 %v2766, 0.0
        %v2799 = vmax.f32 %v2767, 0.0
        %v2800 = vmax.f32 %v2768, 0.0
        %v2801 = vmax.f32 %v2769, 0.0
        %v2802 = vmax.f32 %v2770, 0.0
        %v2803 = vmax.f32 %v2771, 0.0
        %v2804 = vmax.f32 %v2772, 0.0
        %v2805 = vmax.f32 %v2773, 0.0
        %v2806 = vmax.f32 %v2774, 0.0
        %v2807 = vmax.f32 %v2775, 0.0
        %v2808 = vmax.f32 %v2776, 0.0
        %v2809 = vmax.f32 %v2777, 0.0
        %v2810 = vmax.f32 %v2778, 0.0
        %v2811 = vmax.f32 %v2779, 0.0
        %v2812 = vmax.f32 %v2780, 0.0
        %v2813 = vmax.f32 %v2781, 0.0
        %v2814 = vmax.f32 %v2782, 0.0
        %v2815 = vmax.f32 %v2783, 0.0
        %v2816 = vmax.f32 %v2784, 0.0
        %v2817 = vmax.f32 %v2785, 0.0
        %v2818 = vmax.f32 %v2786, 0.0
        %v2819 = vmax.f32 %v2787, 0.0
        %v2820 = vmax.f32 %v2788, 0.0
        %v2821 = vpack.c.bf16 %v2791, %v2789
        %v2822 = vpack.c.bf16 %v2792, %v2790
        %v2823 = vpack.c.bf16 %v2795, %v2793
        %v2824 = vpack.c.bf16 %v2796, %v2794
        %v2825 = vpack.c.bf16 %v2799, %v2797
        %v2826 = vpack.c.bf16 %v2800, %v2798
        %v2827 = vpack.c.bf16 %v2803, %v2801
        %v2828 = vpack.c.bf16 %v2804, %v2802
        %v2829 = vpack.c.bf16 %v2807, %v2805
        %v2830 = vpack.c.bf16 %v2808, %v2806
        %v2831 = vpack.c.bf16 %v2811, %v2809
        %v2832 = vpack.c.bf16 %v2812, %v2810
        %v2833 = vpack.c.bf16 %v2815, %v2813
        %v2834 = vpack.c.bf16 %v2816, %v2814
        %v2835 = vpack.c.bf16 %v2819, %v2817
        %v2836 = vpack.c.bf16 %v2820, %v2818
        %s2837 = scalar_lea.vmem [#allocation2], 768
        %v2838 = vld [vmem:[%s2837] sm:$0xff]
        %v2839 = vld [vmem:[%s2837 + $0x8] sm:$0xff]
        %v2840 = vld [vmem:[%s2837 + $0x10] sm:$0xff]
        %v2841 = vld [vmem:[%s2837 + $0x18] sm:$0xff]
        %v2842 = vld [vmem:[%s2837 + $0x20] sm:$0xff]
        %v2843 = vld [vmem:[%s2837 + $0x28] sm:$0xff]
        %v2844 = vld [vmem:[%s2837 + $0x30] sm:$0xff]
        %v2845 = vld [vmem:[%s2837 + $0x38] sm:$0xff]
        %v2846 = vld [vmem:[%s2837 + $0x40] sm:$0xff]
        %v2847 = vld [vmem:[%s2837 + $0x48] sm:$0xff]
        %v2848 = vld [vmem:[%s2837 + $0x50] sm:$0xff]
        %v2849 = vld [vmem:[%s2837 + $0x58] sm:$0xff]
        %v2850 = vld [vmem:[%s2837 + $0x60] sm:$0xff]
        %v2851 = vld [vmem:[%s2837 + $0x68] sm:$0xff]
        %v2852 = vld [vmem:[%s2837 + $0x70] sm:$0xff]
        %v2853 = vld [vmem:[%s2837 + $0x78] sm:$0xff]
        %v2854 = vld [vmem:[%s2837 + $0x80] sm:$0xff]
        %v2855 = vld [vmem:[%s2837 + $0x88] sm:$0xff]
        %v2856 = vld [vmem:[%s2837 + $0x90] sm:$0xff]
        %v2857 = vld [vmem:[%s2837 + $0x98] sm:$0xff]
        %v2858 = vld [vmem:[%s2837 + $0xa0] sm:$0xff]
        %v2859 = vld [vmem:[%s2837 + $0xa8] sm:$0xff]
        %v2860 = vld [vmem:[%s2837 + $0xb0] sm:$0xff]
        %v2861 = vld [vmem:[%s2837 + $0xb8] sm:$0xff]
        %v2862 = vld [vmem:[%s2837 + $0xc0] sm:$0xff]
        %v2863 = vld [vmem:[%s2837 + $0xc8] sm:$0xff]
        %v2864 = vld [vmem:[%s2837 + $0xd0] sm:$0xff]
        %v2865 = vld [vmem:[%s2837 + $0xd8] sm:$0xff]
        %v2866 = vld [vmem:[%s2837 + $0xe0] sm:$0xff]
        %v2867 = vld [vmem:[%s2837 + $0xe8] sm:$0xff]
        %v2868 = vld [vmem:[%s2837 + $0xf0] sm:$0xff]
        %v2869 = vld [vmem:[%s2837 + $0xf8] sm:$0xff]
        %v2870 = vlaneseq
        %v2871 = vshrl.u32 %v2870, 7
        %v2872 = vsub.s32 3, %v2871
        %v2873 = vrot.slane %v822, %v2872
        %v2874 = vlaneseq
        %v2875 = vshrl.u32 %v2874, 7
        %v2876 = vsub.s32 3, %v2875
        %v2877 = vrot.slane %v823, %v2876
        %v2910 = vunpack.c.l.b16 %v2838
        %v2911 = vunpack.c.h.b16 %v2838
        %v2912 = vunpack.c.l.b16 %v2839
        %v2913 = vunpack.c.h.b16 %v2839
        %v2914 = vunpack.c.l.b16 %v2840
        %v2915 = vunpack.c.h.b16 %v2840
        %v2916 = vunpack.c.l.b16 %v2841
        %v2917 = vunpack.c.h.b16 %v2841
        %v2918 = vunpack.c.l.b16 %v2842
        %v2919 = vunpack.c.h.b16 %v2842
        %v2920 = vunpack.c.l.b16 %v2843
        %v2921 = vunpack.c.h.b16 %v2843
        %v2922 = vunpack.c.l.b16 %v2844
        %v2923 = vunpack.c.h.b16 %v2844
        %v2924 = vunpack.c.l.b16 %v2845
        %v2925 = vunpack.c.h.b16 %v2845
        %v2926 = vunpack.c.l.b16 %v2846
        %v2927 = vunpack.c.h.b16 %v2846
        %v2928 = vunpack.c.l.b16 %v2847
        %v2929 = vunpack.c.h.b16 %v2847
        %v2930 = vunpack.c.l.b16 %v2848
        %v2931 = vunpack.c.h.b16 %v2848
        %v2932 = vunpack.c.l.b16 %v2849
        %v2933 = vunpack.c.h.b16 %v2849
        %v2934 = vunpack.c.l.b16 %v2850
        %v2935 = vunpack.c.h.b16 %v2850
        %v2936 = vunpack.c.l.b16 %v2851
        %v2937 = vunpack.c.h.b16 %v2851
        %v2938 = vunpack.c.l.b16 %v2852
        %v2939 = vunpack.c.h.b16 %v2852
        %v2940 = vunpack.c.l.b16 %v2853
        %v2941 = vunpack.c.h.b16 %v2853
        %v2942 = vunpack.c.l.b16 %v2854
        %v2943 = vunpack.c.h.b16 %v2854
        %v2944 = vunpack.c.l.b16 %v2855
        %v2945 = vunpack.c.h.b16 %v2855
        %v2946 = vunpack.c.l.b16 %v2856
        %v2947 = vunpack.c.h.b16 %v2856
        %v2948 = vunpack.c.l.b16 %v2857
        %v2949 = vunpack.c.h.b16 %v2857
        %v2950 = vunpack.c.l.b16 %v2858
        %v2951 = vunpack.c.h.b16 %v2858
        %v2952 = vunpack.c.l.b16 %v2859
        %v2953 = vunpack.c.h.b16 %v2859
        %v2954 = vunpack.c.l.b16 %v2860
        %v2955 = vunpack.c.h.b16 %v2860
        %v2956 = vunpack.c.l.b16 %v2861
        %v2957 = vunpack.c.h.b16 %v2861
        %v2958 = vunpack.c.l.b16 %v2862
        %v2959 = vunpack.c.h.b16 %v2862
        %v2960 = vunpack.c.l.b16 %v2863
        %v2961 = vunpack.c.h.b16 %v2863
        %v2962 = vunpack.c.l.b16 %v2864
        %v2963 = vunpack.c.h.b16 %v2864
        %v2964 = vunpack.c.l.b16 %v2865
        %v2965 = vunpack.c.h.b16 %v2865
        %v2966 = vunpack.c.l.b16 %v2866
        %v2967 = vunpack.c.h.b16 %v2866
        %v2968 = vunpack.c.l.b16 %v2867
        %v2969 = vunpack.c.h.b16 %v2867
        %v2970 = vunpack.c.l.b16 %v2868
        %v2971 = vunpack.c.h.b16 %v2868
        %v2972 = vunpack.c.l.b16 %v2869
        %v2973 = vunpack.c.h.b16 %v2869
        %v2974 = vpack.c.b16 %v2912, %v2910
        %v2975 = vpack.c.b16 %v2913, %v2911
        %v2976 = vpack.c.b16 %v2916, %v2914
        %v2977 = vpack.c.b16 %v2917, %v2915
        %v2978 = vpack.c.b16 %v2920, %v2918
        %v2979 = vpack.c.b16 %v2921, %v2919
        %v2980 = vpack.c.b16 %v2924, %v2922
        %v2981 = vpack.c.b16 %v2925, %v2923
        %v2982 = vpack.c.b16 %v2928, %v2926
        %v2983 = vpack.c.b16 %v2929, %v2927
        %v2984 = vpack.c.b16 %v2932, %v2930
        %v2985 = vpack.c.b16 %v2933, %v2931
        %v2986 = vpack.c.b16 %v2936, %v2934
        %v2987 = vpack.c.b16 %v2937, %v2935
        %v2988 = vpack.c.b16 %v2940, %v2938
        %v2989 = vpack.c.b16 %v2941, %v2939
        %v2990 = vpack.c.b16 %v2944, %v2942
        %v2991 = vpack.c.b16 %v2945, %v2943
        %v2992 = vpack.c.b16 %v2948, %v2946
        %v2993 = vpack.c.b16 %v2949, %v2947
        %v2994 = vpack.c.b16 %v2952, %v2950
        %v2995 = vpack.c.b16 %v2953, %v2951
        %v2996 = vpack.c.b16 %v2956, %v2954
        %v2997 = vpack.c.b16 %v2957, %v2955
        %v2998 = vpack.c.b16 %v2960, %v2958
        %v2999 = vpack.c.b16 %v2961, %v2959
        %v3000 = vpack.c.b16 %v2964, %v2962
        %v3001 = vpack.c.b16 %v2965, %v2963
        %v3002 = vpack.c.b16 %v2968, %v2966
        %v3003 = vpack.c.b16 %v2969, %v2967
        %v3004 = vpack.c.b16 %v2972, %v2970
        %v3005 = vpack.c.b16 %v2973, %v2971
        %3038 = vmatprep.subr.bf16.mxu0 %v2975
        %3039 = vmatpush1.bf16.msra.mxu0 %v2974
        %3040 = vmatprep.subr.bf16.mxu0 %v2977
        %3041 = vmatpush1.bf16.msra.mxu0 %v2976
        %3042 = vmatprep.subr.bf16.mxu0 %v2979
        %3043 = vmatpush1.bf16.msra.mxu0 %v2978
        %3044 = vmatprep.subr.bf16.mxu0 %v2981
        %3045 = vmatpush1.bf16.msra.mxu0 %v2980
        %3046 = vmatprep.subr.bf16.mxu0 %v2983
        %3047 = vmatpush1.bf16.msra.mxu0 %v2982
        %3048 = vmatprep.subr.bf16.mxu0 %v2985
        %3049 = vmatpush1.bf16.msra.mxu0 %v2984
        %3050 = vmatprep.subr.bf16.mxu0 %v2987
        %3051 = vmatpush1.bf16.msra.mxu0 %v2986
        %3052 = vmatprep.subr.bf16.mxu0 %v2989
        %3053 = vmatpush1.bf16.msra.mxu0 %v2988
        %3054 = vmatprep.subr.bf16.mxu0 %v2991
        %3055 = vmatpush1.bf16.msra.mxu0 %v2990
        %3056 = vmatprep.subr.bf16.mxu0 %v2993
        %3057 = vmatpush1.bf16.msra.mxu0 %v2992
        %3058 = vmatprep.subr.bf16.mxu0 %v2995
        %3059 = vmatpush1.bf16.msra.mxu0 %v2994
        %3060 = vmatprep.subr.bf16.mxu0 %v2997
        %3061 = vmatpush1.bf16.msra.mxu0 %v2996
        %3062 = vmatprep.subr.bf16.mxu0 %v2999
        %3063 = vmatpush1.bf16.msra.mxu0 %v2998
        %3064 = vmatprep.subr.bf16.mxu0 %v3001
        %3065 = vmatpush1.bf16.msra.mxu0 %v3000
        %3066 = vmatprep.subr.bf16.mxu0 %v3003
        %3067 = vmatpush1.bf16.msra.mxu0 %v3002
        %3068 = vmatprep.subr.bf16.mxu0 %v3005
        %3069 = vmatpush1.bf16.msra.mxu0 %v3004
        %3070 = vmatprep.mubr.bf16.mxu0 %v2822
        %3071 = vmatmul.mubr.bf16.gmra.mrb[0].mxu0 %v2821
        %v3072 = vpop.f32.mrb[0].mxu0
        %v3073 = vadd.f32 %v2873, %v3072
        %v3074 = vpop.f32.mrb[0].mxu0
        %v3075 = vadd.f32 %v2877, %v3074
        %v3076 = vpop.f32.mrb[0].mxu0
        %v3077 = vadd.f32 %v2873, %v3076
        %v3078 = vpop.f32.mrb[0].mxu0
        %v3079 = vadd.f32 %v2877, %v3078
        %3080 = vmatprep.mubr.bf16.mxu0 %v2824
        %3081 = vmatmul.mubr.bf16.gmra.mrb[0].mxu0 %v2823
        %v3082 = vpop.f32.mrb[0].mxu0
        %v3083 = vadd.f32 %v2873, %v3082
        %v3084 = vpop.f32.mrb[0].mxu0
        %v3085 = vadd.f32 %v2877, %v3084
        %v3086 = vpop.f32.mrb[0].mxu0
        %v3087 = vadd.f32 %v2873, %v3086
        %v3088 = vpop.f32.mrb[0].mxu0
        %v3089 = vadd.f32 %v2877, %v3088
        %3090 = vmatprep.mubr.bf16.mxu0 %v2826
        %3091 = vmatmul.mubr.bf16.gmra.mrb[0].mxu0 %v2825
        %v3092 = vpop.f32.mrb[0].mxu0
        %v3093 = vadd.f32 %v2873, %v3092
        %v3094 = vpop.f32.mrb[0].mxu0
        %v3095 = vadd.f32 %v2877, %v3094
        %v3096 = vpop.f32.mrb[0].mxu0
        %v3097 = vadd.f32 %v2873, %v3096
        %v3098 = vpop.f32.mrb[0].mxu0
        %v3099 = vadd.f32 %v2877, %v3098
        %3100 = vmatprep.mubr.bf16.mxu0 %v2828
        %3101 = vmatmul.mubr.bf16.gmra.mrb[0].mxu0 %v2827
        %v3102 = vpop.f32.mrb[0].mxu0
        %v3103 = vadd.f32 %v2873, %v3102
        %v3104 = vpop.f32.mrb[0].mxu0
        %v3105 = vadd.f32 %v2877, %v3104
        %v3106 = vpop.f32.mrb[0].mxu0
        %v3107 = vadd.f32 %v2873, %v3106
        %v3108 = vpop.f32.mrb[0].mxu0
        %v3109 = vadd.f32 %v2877, %v3108
        %3110 = vmatprep.mubr.bf16.mxu0 %v2830
        %3111 = vmatmul.mubr.bf16.gmra.mrb[0].mxu0 %v2829
        %v3112 = vpop.f32.mrb[0].mxu0
        %v3113 = vadd.f32 %v2873, %v3112
        %v3114 = vpop.f32.mrb[0].mxu0
        %v3115 = vadd.f32 %v2877, %v3114
        %v3116 = vpop.f32.mrb[0].mxu0
        %v3117 = vadd.f32 %v2873, %v3116
        %v3118 = vpop.f32.mrb[0].mxu0
        %v3119 = vadd.f32 %v2877, %v3118
        %3120 = vmatprep.mubr.bf16.mxu0 %v2832
        %3121 = vmatmul.mubr.bf16.gmra.mrb[0].mxu0 %v2831
        %v3122 = vpop.f32.mrb[0].mxu0
        %v3123 = vadd.f32 %v2873, %v3122
        %v3124 = vpop.f32.mrb[0].mxu0
        %v3125 = vadd.f32 %v2877, %v3124
        %v3126 = vpop.f32.mrb[0].mxu0
        %v3127 = vadd.f32 %v2873, %v3126
        %v3128 = vpop.f32.mrb[0].mxu0
        %v3129 = vadd.f32 %v2877, %v3128
        %3130 = vmatprep.mubr.bf16.mxu0 %v2834
        %3131 = vmatmul.mubr.bf16.gmra.mrb[0].mxu0 %v2833
        %v3132 = vpop.f32.mrb[0].mxu0
        %v3133 = vadd.f32 %v2873, %v3132
        %v3134 = vpop.f32.mrb[0].mxu0
        %v3135 = vadd.f32 %v2877, %v3134
        %v3136 = vpop.f32.mrb[0].mxu0
        %v3137 = vadd.f32 %v2873, %v3136
        %v3138 = vpop.f32.mrb[0].mxu0
        %v3139 = vadd.f32 %v2877, %v3138
        %3140 = vmatprep.mubr.bf16.mxu0 %v2836
        %3141 = vmatmul.mubr.bf16.gmra.mrb[0].mxu0 %v2835
        %v3142 = vpop.f32.mrb[0].mxu0
        %v3143 = vadd.f32 %v2873, %v3142
        %v3144 = vpop.f32.mrb[0].mxu0
        %v3145 = vadd.f32 %v2877, %v3144
        %v3146 = vpop.f32.mrb[0].mxu0
        %v3147 = vadd.f32 %v2873, %v3146
        %v3148 = vpop.f32.mrb[0].mxu0
        %v3149 = vadd.f32 %v2877, %v3148
        %3150 = vdwg.mxu0
        %v3151 = vadd.f32 %v3073, %v3075
        %3152 = vadd.xlane.f32.xlu0 %v3151
        %v3153 = vpop.xlane.xlu0 %3152
        %v3154 = vadd.f32 %v3077, %v3079
        %3155 = vadd.xlane.f32.xlu0 %v3154
        %v3156 = vpop.xlane.xlu0 %3155
        %v3157 = vadd.f32 %v3083, %v3085
        %3158 = vadd.xlane.f32.xlu0 %v3157
        %v3159 = vpop.xlane.xlu0 %3158
        %v3160 = vadd.f32 %v3087, %v3089
        %3161 = vadd.xlane.f32.xlu0 %v3160
        %v3162 = vpop.xlane.xlu0 %3161
        %v3163 = vadd.f32 %v3093, %v3095
        %3164 = vadd.xlane.f32.xlu0 %v3163
        %v3165 = vpop.xlane.xlu0 %3164
        %v3166 = vadd.f32 %v3097, %v3099
        %3167 = vadd.xlane.f32.xlu0 %v3166
        %v3168 = vpop.xlane.xlu0 %3167
        %v3169 = vadd.f32 %v3103, %v3105
        %3170 = vadd.xlane.f32.xlu0 %v3169
        %v3171 = vpop.xlane.xlu0 %3170
        %v3172 = vadd.f32 %v3107, %v3109
        %3173 = vadd.xlane.f32.xlu0 %v3172
        %v3174 = vpop.xlane.xlu0 %3173
        %v3175 = vadd.f32 %v3113, %v3115
        %3176 = vadd.xlane.f32.xlu0 %v3175
        %v3177 = vpop.xlane.xlu0 %3176
        %v3178 = vadd.f32 %v3117, %v3119
        %3179 = vadd.xlane.f32.xlu0 %v3178
        %v3180 = vpop.xlane.xlu0 %3179
        %v3181 = vadd.f32 %v3123, %v3125
        %3182 = vadd.xlane.f32.xlu0 %v3181
        %v3183 = vpop.xlane.xlu0 %3182
        %v3184 = vadd.f32 %v3127, %v3129
        %3185 = vadd.xlane.f32.xlu0 %v3184
        %v3186 = vpop.xlane.xlu0 %3185
        %v3187 = vadd.f32 %v3133, %v3135
        %3188 = vadd.xlane.f32.xlu0 %v3187
        %v3189 = vpop.xlane.xlu0 %3188
        %v3190 = vadd.f32 %v3137, %v3139
        %3191 = vadd.xlane.f32.xlu0 %v3190
        %v3192 = vpop.xlane.xlu0 %3191
        %v3193 = vadd.f32 %v3143, %v3145
        %3194 = vadd.xlane.f32.xlu0 %v3193
        %v3195 = vpop.xlane.xlu0 %3194
        %v3196 = vadd.f32 %v3147, %v3149
        %3197 = vadd.xlane.f32.xlu0 %v3196
        %v3198 = vpop.xlane.xlu0 %3197
        %v3199 = vmul.f32 %v3153, %v533
        %v3200 = vmul.f32 %v3156, %v533
        %v3201 = vmul.f32 %v3159, %v533
        %v3202 = vmul.f32 %v3162, %v533
        %v3203 = vmul.f32 %v3165, %v533
        %v3204 = vmul.f32 %v3168, %v533
        %v3205 = vmul.f32 %v3171, %v533
        %v3206 = vmul.f32 %v3174, %v533
        %v3207 = vmul.f32 %v3177, %v533
        %v3208 = vmul.f32 %v3180, %v533
        %v3209 = vmul.f32 %v3183, %v533
        %v3210 = vmul.f32 %v3186, %v533
        %v3211 = vmul.f32 %v3189, %v533
        %v3212 = vmul.f32 %v3192, %v533
        %v3213 = vmul.f32 %v3195, %v533
        %v3214 = vmul.f32 %v3198, %v533
        %v3215 = vmul.f32 %v3073, %v3073
        %v3216 = vmul.f32 %v3075, %v3075
        %v3217 = vmul.f32 %v3077, %v3077
        %v3218 = vmul.f32 %v3079, %v3079
        %v3219 = vmul.f32 %v3083, %v3083
        %v3220 = vmul.f32 %v3085, %v3085
        %v3221 = vmul.f32 %v3087, %v3087
        %v3222 = vmul.f32 %v3089, %v3089
        %v3223 = vmul.f32 %v3093, %v3093
        %v3224 = vmul.f32 %v3095, %v3095
        %v3225 = vmul.f32 %v3097, %v3097
        %v3226 = vmul.f32 %v3099, %v3099
        %v3227 = vmul.f32 %v3103, %v3103
        %v3228 = vmul.f32 %v3105, %v3105
        %v3229 = vmul.f32 %v3107, %v3107
        %v3230 = vmul.f32 %v3109, %v3109
        %v3231 = vmul.f32 %v3113, %v3113
        %v3232 = vmul.f32 %v3115, %v3115
        %v3233 = vmul.f32 %v3117, %v3117
        %v3234 = vmul.f32 %v3119, %v3119
        %v3235 = vmul.f32 %v3123, %v3123
        %v3236 = vmul.f32 %v3125, %v3125
        %v3237 = vmul.f32 %v3127, %v3127
        %v3238 = vmul.f32 %v3129, %v3129
        %v3239 = vmul.f32 %v3133, %v3133
        %v3240 = vmul.f32 %v3135, %v3135
        %v3241 = vmul.f32 %v3137, %v3137
        %v3242 = vmul.f32 %v3139, %v3139
        %v3243 = vmul.f32 %v3143, %v3143
        %v3244 = vmul.f32 %v3145, %v3145
        %v3245 = vmul.f32 %v3147, %v3147
        %v3246 = vmul.f32 %v3149, %v3149
        %v3247 = vadd.f32 %v3215, %v3216
        %3248 = vadd.xlane.f32.xlu0 %v3247
        %v3249 = vpop.xlane.xlu0 %3248
        %v3250 = vadd.f32 %v3217, %v3218
        %3251 = vadd.xlane.f32.xlu0 %v3250
        %v3252 = vpop.xlane.xlu0 %3251
        %v3253 = vadd.f32 %v3219, %v3220
        %3254 = vadd.xlane.f32.xlu0 %v3253
        %v3255 = vpop.xlane.xlu0 %3254
        %v3256 = vadd.f32 %v3221, %v3222
        %3257 = vadd.xlane.f32.xlu0 %v3256
        %v3258 = vpop.xlane.xlu0 %3257
        %v3259 = vadd.f32 %v3223, %v3224
        %3260 = vadd.xlane.f32.xlu0 %v3259
        %v3261 = vpop.xlane.xlu0 %3260
        %v3262 = vadd.f32 %v3225, %v3226
        %3263 = vadd.xlane.f32.xlu0 %v3262
        %v3264 = vpop.xlane.xlu0 %3263
        %v3265 = vadd.f32 %v3227, %v3228
        %3266 = vadd.xlane.f32.xlu0 %v3265
        %v3267 = vpop.xlane.xlu0 %3266
        %v3268 = vadd.f32 %v3229, %v3230
        %3269 = vadd.xlane.f32.xlu0 %v3268
        %v3270 = vpop.xlane.xlu0 %3269
        %v3271 = vadd.f32 %v3231, %v3232
        %3272 = vadd.xlane.f32.xlu0 %v3271
        %v3273 = vpop.xlane.xlu0 %3272
        %v3274 = vadd.f32 %v3233, %v3234
        %3275 = vadd.xlane.f32.xlu0 %v3274
        %v3276 = vpop.xlane.xlu0 %3275
        %v3277 = vadd.f32 %v3235, %v3236
        %3278 = vadd.xlane.f32.xlu0 %v3277
        %v3279 = vpop.xlane.xlu0 %3278
        %v3280 = vadd.f32 %v3237, %v3238
        %3281 = vadd.xlane.f32.xlu0 %v3280
        %v3282 = vpop.xlane.xlu0 %3281
        %v3283 = vadd.f32 %v3239, %v3240
        %3284 = vadd.xlane.f32.xlu0 %v3283
        %v3285 = vpop.xlane.xlu0 %3284
        %v3286 = vadd.f32 %v3241, %v3242
        %3287 = vadd.xlane.f32.xlu0 %v3286
        %v3288 = vpop.xlane.xlu0 %3287
        %v3289 = vadd.f32 %v3243, %v3244
        %3290 = vadd.xlane.f32.xlu0 %v3289
        %v3291 = vpop.xlane.xlu0 %3290
        %v3292 = vadd.f32 %v3245, %v3246
        %3293 = vadd.xlane.f32.xlu0 %v3292
        %v3294 = vpop.xlane.xlu0 %3293
        %v3295 = vmul.f32 %v3249, %v533
        %v3296 = vmul.f32 %v3252, %v533
        %v3297 = vmul.f32 %v3255, %v533
        %v3298 = vmul.f32 %v3258, %v533
        %v3299 = vmul.f32 %v3261, %v533
        %v3300 = vmul.f32 %v3264, %v533
        %v3301 = vmul.f32 %v3267, %v533
        %v3302 = vmul.f32 %v3270, %v533
        %v3303 = vmul.f32 %v3273, %v533
        %v3304 = vmul.f32 %v3276, %v533
        %v3305 = vmul.f32 %v3279, %v533
        %v3306 = vmul.f32 %v3282, %v533
        %v3307 = vmul.f32 %v3285, %v533
        %v3308 = vmul.f32 %v3288, %v533
        %v3309 = vmul.f32 %v3291, %v533
        %v3310 = vmul.f32 %v3294, %v533
        %v3311 = vmul.f32 %v3199, %v3199
        %v3312 = vmul.f32 %v3200, %v3200
        %v3313 = vmul.f32 %v3201, %v3201
        %v3314 = vmul.f32 %v3202, %v3202
        %v3315 = vmul.f32 %v3203, %v3203
        %v3316 = vmul.f32 %v3204, %v3204
        %v3317 = vmul.f32 %v3205, %v3205
        %v3318 = vmul.f32 %v3206, %v3206
        %v3319 = vmul.f32 %v3207, %v3207
        %v3320 = vmul.f32 %v3208, %v3208
        %v3321 = vmul.f32 %v3209, %v3209
        %v3322 = vmul.f32 %v3210, %v3210
        %v3323 = vmul.f32 %v3211, %v3211
        %v3324 = vmul.f32 %v3212, %v3212
        %v3325 = vmul.f32 %v3213, %v3213
        %v3326 = vmul.f32 %v3214, %v3214
        %v3327 = vsub.f32 %v3295, %v3311
        %v3328 = vsub.f32 %v3296, %v3312
        %v3329 = vsub.f32 %v3297, %v3313
        %v3330 = vsub.f32 %v3298, %v3314
        %v3331 = vsub.f32 %v3299, %v3315
        %v3332 = vsub.f32 %v3300, %v3316
        %v3333 = vsub.f32 %v3301, %v3317
        %v3334 = vsub.f32 %v3302, %v3318
        %v3335 = vsub.f32 %v3303, %v3319
        %v3336 = vsub.f32 %v3304, %v3320
        %v3337 = vsub.f32 %v3305, %v3321
        %v3338 = vsub.f32 %v3306, %v3322
        %v3339 = vsub.f32 %v3307, %v3323
        %v3340 = vsub.f32 %v3308, %v3324
        %v3341 = vsub.f32 %v3309, %v3325
        %v3342 = vsub.f32 %v3310, %v3326
        %v3343 = vmax.f32 %v3327, 0.0
        %v3344 = vmax.f32 %v3328, 0.0
        %v3345 = vmax.f32 %v3329, 0.0
        %v3346 = vmax.f32 %v3330, 0.0
        %v3347 = vmax.f32 %v3331, 0.0
        %v3348 = vmax.f32 %v3332, 0.0
        %v3349 = vmax.f32 %v3333, 0.0
        %v3350 = vmax.f32 %v3334, 0.0
        %v3351 = vmax.f32 %v3335, 0.0
        %v3352 = vmax.f32 %v3336, 0.0
        %v3353 = vmax.f32 %v3337, 0.0
        %v3354 = vmax.f32 %v3338, 0.0
        %v3355 = vmax.f32 %v3339, 0.0
        %v3356 = vmax.f32 %v3340, 0.0
        %v3357 = vmax.f32 %v3341, 0.0
        %v3358 = vmax.f32 %v3342, 0.0
        %v3359 = vsub.f32 %v3073, %v3199
        %v3360 = vsub.f32 %v3075, %v3199
        %v3361 = vsub.f32 %v3077, %v3200
        %v3362 = vsub.f32 %v3079, %v3200
        %v3363 = vsub.f32 %v3083, %v3201
        %v3364 = vsub.f32 %v3085, %v3201
        %v3365 = vsub.f32 %v3087, %v3202
        %v3366 = vsub.f32 %v3089, %v3202
        %v3367 = vsub.f32 %v3093, %v3203
        %v3368 = vsub.f32 %v3095, %v3203
        %v3369 = vsub.f32 %v3097, %v3204
        %v3370 = vsub.f32 %v3099, %v3204
        %v3371 = vsub.f32 %v3103, %v3205
        %v3372 = vsub.f32 %v3105, %v3205
        %v3373 = vsub.f32 %v3107, %v3206
        %v3374 = vsub.f32 %v3109, %v3206
        %v3375 = vsub.f32 %v3113, %v3207
        %v3376 = vsub.f32 %v3115, %v3207
        %v3377 = vsub.f32 %v3117, %v3208
        %v3378 = vsub.f32 %v3119, %v3208
        %v3379 = vsub.f32 %v3123, %v3209
        %v3380 = vsub.f32 %v3125, %v3209
        %v3381 = vsub.f32 %v3127, %v3210
        %v3382 = vsub.f32 %v3129, %v3210
        %v3383 = vsub.f32 %v3133, %v3211
        %v3384 = vsub.f32 %v3135, %v3211
        %v3385 = vsub.f32 %v3137, %v3212
        %v3386 = vsub.f32 %v3139, %v3212
        %v3387 = vsub.f32 %v3143, %v3213
        %v3388 = vsub.f32 %v3145, %v3213
        %v3389 = vsub.f32 %v3147, %v3214
        %v3390 = vsub.f32 %v3149, %v3214
        %v3391 = vadd.f32 %v3343, 1e-05
        %v3392 = vadd.f32 %v3344, 1e-05
        %v3393 = vadd.f32 %v3345, 1e-05
        %v3394 = vadd.f32 %v3346, 1e-05
        %v3395 = vadd.f32 %v3347, 1e-05
        %v3396 = vadd.f32 %v3348, 1e-05
        %v3397 = vadd.f32 %v3349, 1e-05
        %v3398 = vadd.f32 %v3350, 1e-05
        %v3399 = vadd.f32 %v3351, 1e-05
        %v3400 = vadd.f32 %v3352, 1e-05
        %v3401 = vadd.f32 %v3353, 1e-05
        %v3402 = vadd.f32 %v3354, 1e-05
        %v3403 = vadd.f32 %v3355, 1e-05
        %v3404 = vadd.f32 %v3356, 1e-05
        %v3405 = vadd.f32 %v3357, 1e-05
        %v3406 = vadd.f32 %v3358, 1e-05
        %v3407 = vrsqrt.pop %v3391
        %v3408 = vrsqrt.pop %v3392
        %v3409 = vrsqrt.pop %v3393
        %v3410 = vrsqrt.pop %v3394
        %v3411 = vrsqrt.pop %v3395
        %v3412 = vrsqrt.pop %v3396
        %v3413 = vrsqrt.pop %v3397
        %v3414 = vrsqrt.pop %v3398
        %v3415 = vrsqrt.pop %v3399
        %v3416 = vrsqrt.pop %v3400
        %v3417 = vrsqrt.pop %v3401
        %v3418 = vrsqrt.pop %v3402
        %v3419 = vrsqrt.pop %v3403
        %v3420 = vrsqrt.pop %v3404
        %v3421 = vrsqrt.pop %v3405
        %v3422 = vrsqrt.pop %v3406
        %v3423 = vmul.f32 %v3359, %v3407
        %v3424 = vmul.f32 %v3360, %v3407
        %v3425 = vmul.f32 %v3361, %v3408
        %v3426 = vmul.f32 %v3362, %v3408
        %v3427 = vmul.f32 %v3363, %v3409
        %v3428 = vmul.f32 %v3364, %v3409
        %v3429 = vmul.f32 %v3365, %v3410
        %v3430 = vmul.f32 %v3366, %v3410
        %v3431 = vmul.f32 %v3367, %v3411
        %v3432 = vmul.f32 %v3368, %v3411
        %v3433 = vmul.f32 %v3369, %v3412
        %v3434 = vmul.f32 %v3370, %v3412
        %v3435 = vmul.f32 %v3371, %v3413
        %v3436 = vmul.f32 %v3372, %v3413
        %v3437 = vmul.f32 %v3373, %v3414
        %v3438 = vmul.f32 %v3374, %v3414
        %v3439 = vmul.f32 %v3375, %v3415
        %v3440 = vmul.f32 %v3376, %v3415
        %v3441 = vmul.f32 %v3377, %v3416
        %v3442 = vmul.f32 %v3378, %v3416
        %v3443 = vmul.f32 %v3379, %v3417
        %v3444 = vmul.f32 %v3380, %v3417
        %v3445 = vmul.f32 %v3381, %v3418
        %v3446 = vmul.f32 %v3382, %v3418
        %v3447 = vmul.f32 %v3383, %v3419
        %v3448 = vmul.f32 %v3384, %v3419
        %v3449 = vmul.f32 %v3385, %v3420
        %v3450 = vmul.f32 %v3386, %v3420
        %v3451 = vmul.f32 %v3387, %v3421
        %v3452 = vmul.f32 %v3388, %v3421
        %v3453 = vmul.f32 %v3389, %v3422
        %v3454 = vmul.f32 %v3390, %v3422
        %v3455 = vmax.f32 %v3423, 0.0
        %v3456 = vmax.f32 %v3424, 0.0
        %v3457 = vmax.f32 %v3425, 0.0
        %v3458 = vmax.f32 %v3426, 0.0
        %v3459 = vmax.f32 %v3427, 0.0
        %v3460 = vmax.f32 %v3428, 0.0
        %v3461 = vmax.f32 %v3429, 0.0
        %v3462 = vmax.f32 %v3430, 0.0
        %v3463 = vmax.f32 %v3431, 0.0
        %v3464 = vmax.f32 %v3432, 0.0
        %v3465 = vmax.f32 %v3433, 0.0
        %v3466 = vmax.f32 %v3434, 0.0
        %v3467 = vmax.f32 %v3435, 0.0
        %v3468 = vmax.f32 %v3436, 0.0
        %v3469 = vmax.f32 %v3437, 0.0
        %v3470 = vmax.f32 %v3438, 0.0
        %v3471 = vmax.f32 %v3439, 0.0
        %v3472 = vmax.f32 %v3440, 0.0
        %v3473 = vmax.f32 %v3441, 0.0
        %v3474 = vmax.f32 %v3442, 0.0
        %v3475 = vmax.f32 %v3443, 0.0
        %v3476 = vmax.f32 %v3444, 0.0
        %v3477 = vmax.f32 %v3445, 0.0
        %v3478 = vmax.f32 %v3446, 0.0
        %v3479 = vmax.f32 %v3447, 0.0
        %v3480 = vmax.f32 %v3448, 0.0
        %v3481 = vmax.f32 %v3449, 0.0
        %v3482 = vmax.f32 %v3450, 0.0
        %v3483 = vmax.f32 %v3451, 0.0
        %v3484 = vmax.f32 %v3452, 0.0
        %v3485 = vmax.f32 %v3453, 0.0
        %v3486 = vmax.f32 %v3454, 0.0
        %v3487 = vpack.c.bf16 %v3457, %v3455
        %v3488 = vpack.c.bf16 %v3458, %v3456
        %v3489 = vpack.c.bf16 %v3461, %v3459
        %v3490 = vpack.c.bf16 %v3462, %v3460
        %v3491 = vpack.c.bf16 %v3465, %v3463
        %v3492 = vpack.c.bf16 %v3466, %v3464
        %v3493 = vpack.c.bf16 %v3469, %v3467
        %v3494 = vpack.c.bf16 %v3470, %v3468
        %v3495 = vpack.c.bf16 %v3473, %v3471
        %v3496 = vpack.c.bf16 %v3474, %v3472
        %v3497 = vpack.c.bf16 %v3477, %v3475
        %v3498 = vpack.c.bf16 %v3478, %v3476
        %v3499 = vpack.c.bf16 %v3481, %v3479
        %v3500 = vpack.c.bf16 %v3482, %v3480
        %v3501 = vpack.c.bf16 %v3485, %v3483
        %v3502 = vpack.c.bf16 %v3486, %v3484
        %s3503 = scalar_lea.vmem [#allocation2], 1024
        %v3504 = vld [vmem:[%s3503] sm:$0xff]
        %v3505 = vld [vmem:[%s3503 + $0x8] sm:$0xff]
        %v3506 = vld [vmem:[%s3503 + $0x10] sm:$0xff]
        %v3507 = vld [vmem:[%s3503 + $0x18] sm:$0xff]
        %v3508 = vld [vmem:[%s3503 + $0x20] sm:$0xff]
        %v3509 = vld [vmem:[%s3503 + $0x28] sm:$0xff]
        %v3510 = vld [vmem:[%s3503 + $0x30] sm:$0xff]
        %v3511 = vld [vmem:[%s3503 + $0x38] sm:$0xff]
        %v3512 = vld [vmem:[%s3503 + $0x40] sm:$0xff]
        %v3513 = vld [vmem:[%s3503 + $0x48] sm:$0xff]
        %v3514 = vld [vmem:[%s3503 + $0x50] sm:$0xff]
        %v3515 = vld [vmem:[%s3503 + $0x58] sm:$0xff]
        %v3516 = vld [vmem:[%s3503 + $0x60] sm:$0xff]
        %v3517 = vld [vmem:[%s3503 + $0x68] sm:$0xff]
        %v3518 = vld [vmem:[%s3503 + $0x70] sm:$0xff]
        %v3519 = vld [vmem:[%s3503 + $0x78] sm:$0xff]
        %v3520 = vld [vmem:[%s3503 + $0x80] sm:$0xff]
        %v3521 = vld [vmem:[%s3503 + $0x88] sm:$0xff]
        %v3522 = vld [vmem:[%s3503 + $0x90] sm:$0xff]
        %v3523 = vld [vmem:[%s3503 + $0x98] sm:$0xff]
        %v3524 = vld [vmem:[%s3503 + $0xa0] sm:$0xff]
        %v3525 = vld [vmem:[%s3503 + $0xa8] sm:$0xff]
        %v3526 = vld [vmem:[%s3503 + $0xb0] sm:$0xff]
        %v3527 = vld [vmem:[%s3503 + $0xb8] sm:$0xff]
        %v3528 = vld [vmem:[%s3503 + $0xc0] sm:$0xff]
        %v3529 = vld [vmem:[%s3503 + $0xc8] sm:$0xff]
        %v3530 = vld [vmem:[%s3503 + $0xd0] sm:$0xff]
        %v3531 = vld [vmem:[%s3503 + $0xd8] sm:$0xff]
        %v3532 = vld [vmem:[%s3503 + $0xe0] sm:$0xff]
        %v3533 = vld [vmem:[%s3503 + $0xe8] sm:$0xff]
        %v3534 = vld [vmem:[%s3503 + $0xf0] sm:$0xff]
        %v3535 = vld [vmem:[%s3503 + $0xf8] sm:$0xff]
        %v3536 = vlaneseq
        %v3537 = vshrl.u32 %v3536, 7
        %v3538 = vsub.s32 4, %v3537
        %v3539 = vrot.slane %v822, %v3538
        %v3540 = vlaneseq
        %v3541 = vshrl.u32 %v3540, 7
        %v3542 = vsub.s32 4, %v3541
        %v3543 = vrot.slane %v823, %v3542
        %v3576 = vunpack.c.l.b16 %v3504
        %v3577 = vunpack.c.h.b16 %v3504
        %v3578 = vunpack.c.l.b16 %v3505
        %v3579 = vunpack.c.h.b16 %v3505
        %v3580 = vunpack.c.l.b16 %v3506
        %v3581 = vunpack.c.h.b16 %v3506
        %v3582 = vunpack.c.l.b16 %v3507
        %v3583 = vunpack.c.h.b16 %v3507
        %v3584 = vunpack.c.l.b16 %v3508
        %v3585 = vunpack.c.h.b16 %v3508
        %v3586 = vunpack.c.l.b16 %v3509
        %v3587 = vunpack.c.h.b16 %v3509
        %v3588 = vunpack.c.l.b16 %v3510
        %v3589 = vunpack.c.h.b16 %v3510
        %v3590 = vunpack.c.l.b16 %v3511
        %v3591 = vunpack.c.h.b16 %v3511
        %v3592 = vunpack.c.l.b16 %v3512
        %v3593 = vunpack.c.h.b16 %v3512
        %v3594 = vunpack.c.l.b16 %v3513
        %v3595 = vunpack.c.h.b16 %v3513
        %v3596 = vunpack.c.l.b16 %v3514
        %v3597 = vunpack.c.h.b16 %v3514
        %v3598 = vunpack.c.l.b16 %v3515
        %v3599 = vunpack.c.h.b16 %v3515
        %v3600 = vunpack.c.l.b16 %v3516
        %v3601 = vunpack.c.h.b16 %v3516
        %v3602 = vunpack.c.l.b16 %v3517
        %v3603 = vunpack.c.h.b16 %v3517
        %v3604 = vunpack.c.l.b16 %v3518
        %v3605 = vunpack.c.h.b16 %v3518
        %v3606 = vunpack.c.l.b16 %v3519
        %v3607 = vunpack.c.h.b16 %v3519
        %v3608 = vunpack.c.l.b16 %v3520
        %v3609 = vunpack.c.h.b16 %v3520
        %v3610 = vunpack.c.l.b16 %v3521
        %v3611 = vunpack.c.h.b16 %v3521
        %v3612 = vunpack.c.l.b16 %v3522
        %v3613 = vunpack.c.h.b16 %v3522
        %v3614 = vunpack.c.l.b16 %v3523
        %v3615 = vunpack.c.h.b16 %v3523
        %v3616 = vunpack.c.l.b16 %v3524
        %v3617 = vunpack.c.h.b16 %v3524
        %v3618 = vunpack.c.l.b16 %v3525
        %v3619 = vunpack.c.h.b16 %v3525
        %v3620 = vunpack.c.l.b16 %v3526
        %v3621 = vunpack.c.h.b16 %v3526
        %v3622 = vunpack.c.l.b16 %v3527
        %v3623 = vunpack.c.h.b16 %v3527
        %v3624 = vunpack.c.l.b16 %v3528
        %v3625 = vunpack.c.h.b16 %v3528
        %v3626 = vunpack.c.l.b16 %v3529
        %v3627 = vunpack.c.h.b16 %v3529
        %v3628 = vunpack.c.l.b16 %v3530
        %v3629 = vunpack.c.h.b16 %v3530
        %v3630 = vunpack.c.l.b16 %v3531
        %v3631 = vunpack.c.h.b16 %v3531
        %v3632 = vunpack.c.l.b16 %v3532
        %v3633 = vunpack.c.h.b16 %v3532
        %v3634 = vunpack.c.l.b16 %v3533
        %v3635 = vunpack.c.h.b16 %v3533
        %v3636 = vunpack.c.l.b16 %v3534
        %v3637 = vunpack.c.h.b16 %v3534
        %v3638 = vunpack.c.l.b16 %v3535
        %v3639 = vunpack.c.h.b16 %v3535
        %v3640 = vpack.c.b16 %v3578, %v3576
        %v3641 = vpack.c.b16 %v3579, %v3577
        %v3642 = vpack.c.b16 %v3582, %v3580
        %v3643 = vpack.c.b16 %v3583, %v3581
        %v3644 = vpack.c.b16 %v3586, %v3584
        %v3645 = vpack.c.b16 %v3587, %v3585
        %v3646 = vpack.c.b16 %v3590, %v3588
        %v3647 = vpack.c.b16 %v3591, %v3589
        %v3648 = vpack.c.b16 %v3594, %v3592
        %v3649 = vpack.c.b16 %v3595, %v3593
        %v3650 = vpack.c.b16 %v3598, %v3596
        %v3651 = vpack.c.b16 %v3599, %v3597
        %v3652 = vpack.c.b16 %v3602, %v3600
        %v3653 = vpack.c.b16 %v3603, %v3601
        %v3654 = vpack.c.b16 %v3606, %v3604
        %v3655 = vpack.c.b16 %v3607, %v3605
        %v3656 = vpack.c.b16 %v3610, %v3608
        %v3657 = vpack.c.b16 %v3611, %v3609
        %v3658 = vpack.c.b16 %v3614, %v3612
        %v3659 = vpack.c.b16 %v3615, %v3613
        %v3660 = vpack.c.b16 %v3618, %v3616
        %v3661 = vpack.c.b16 %v3619, %v3617
        %v3662 = vpack.c.b16 %v3622, %v3620
        %v3663 = vpack.c.b16 %v3623, %v3621
        %v3664 = vpack.c.b16 %v3626, %v3624
        %v3665 = vpack.c.b16 %v3627, %v3625
        %v3666 = vpack.c.b16 %v3630, %v3628
        %v3667 = vpack.c.b16 %v3631, %v3629
        %v3668 = vpack.c.b16 %v3634, %v3632
        %v3669 = vpack.c.b16 %v3635, %v3633
        %v3670 = vpack.c.b16 %v3638, %v3636
        %v3671 = vpack.c.b16 %v3639, %v3637
        %3704 = vmatprep.subr.bf16.mxu0 %v3641
        %3705 = vmatpush1.bf16.msra.mxu0 %v3640
        %3706 = vmatprep.subr.bf16.mxu0 %v3643
        %3707 = vmatpush1.bf16.msra.mxu0 %v3642
        %3708 = vmatprep.subr.bf16.mxu0 %v3645
        %3709 = vmatpush1.bf16.msra.mxu0 %v3644
        %3710 = vmatprep.subr.bf16.mxu0 %v3647
        %3711 = vmatpush1.bf16.msra.mxu0 %v3646
        %3712 = vmatprep.subr.bf16.mxu0 %v3649
        %3713 = vmatpush1.bf16.msra.mxu0 %v3648
        %3714 = vmatprep.subr.bf16.mxu0 %v3651
        %3715 = vmatpush1.bf16.msra.mxu0 %v3650
        %3716 = vmatprep.subr.bf16.mxu0 %v3653
        %3717 = vmatpush1.bf16.msra.mxu0 %v3652
        %3718 = vmatprep.subr.bf16.mxu0 %v3655
        %3719 = vmatpush1.bf16.msra.mxu0 %v3654
        %3720 = vmatprep.subr.bf16.mxu0 %v3657
        %3721 = vmatpush1.bf16.msra.mxu0 %v3656
        %3722 = vmatprep.subr.bf16.mxu0 %v3659
        %3723 = vmatpush1.bf16.msra.mxu0 %v3658
        %3724 = vmatprep.subr.bf16.mxu0 %v3661
        %3725 = vmatpush1.bf16.msra.mxu0 %v3660
        %3726 = vmatprep.subr.bf16.mxu0 %v3663
        %3727 = vmatpush1.bf16.msra.mxu0 %v3662
        %3728 = vmatprep.subr.bf16.mxu0 %v3665
        %3729 = vmatpush1.bf16.msra.mxu0 %v3664
        %3730 = vmatprep.subr.bf16.mxu0 %v3667
        %3731 = vmatpush1.bf16.msra.mxu0 %v3666
        %3732 = vmatprep.subr.bf16.mxu0 %v3669
        %3733 = vmatpush1.bf16.msra.mxu0 %v3668
        %3734 = vmatprep.subr.bf16.mxu0 %v3671
        %3735 = vmatpush1.bf16.msra.mxu0 %v3670
        %3736 = vmatprep.mubr.bf16.mxu0 %v3488
        %3737 = vmatmul.mubr.bf16.gmra.mrb[0].mxu0 %v3487
        %v3738 = vpop.f32.mrb[0].mxu0
        %v3739 = vadd.f32 %v3539, %v3738
        %v3740 = vpop.f32.mrb[0].mxu0
        %v3741 = vadd.f32 %v3543, %v3740
        %v3742 = vpop.f32.mrb[0].mxu0
        %v3743 = vadd.f32 %v3539, %v3742
        %v3744 = vpop.f32.mrb[0].mxu0
        %v3745 = vadd.f32 %v3543, %v3744
        %3746 = vmatprep.mubr.bf16.mxu0 %v3490
        %3747 = vmatmul.mubr.bf16.gmra.mrb[0].mxu0 %v3489
        %v3748 = vpop.f32.mrb[0].mxu0
        %v3749 = vadd.f32 %v3539, %v3748
        %v3750 = vpop.f32.mrb[0].mxu0
        %v3751 = vadd.f32 %v3543, %v3750
        %v3752 = vpop.f32.mrb[0].mxu0
        %v3753 = vadd.f32 %v3539, %v3752
        %v3754 = vpop.f32.mrb[0].mxu0
        %v3755 = vadd.f32 %v3543, %v3754
        %3756 = vmatprep.mubr.bf16.mxu0 %v3492
        %3757 = vmatmul.mubr.bf16.gmra.mrb[0].mxu0 %v3491
        %v3758 = vpop.f32.mrb[0].mxu0
        %v3759 = vadd.f32 %v3539, %v3758
        %v3760 = vpop.f32.mrb[0].mxu0
        %v3761 = vadd.f32 %v3543, %v3760
        %v3762 = vpop.f32.mrb[0].mxu0
        %v3763 = vadd.f32 %v3539, %v3762
        %v3764 = vpop.f32.mrb[0].mxu0
        %v3765 = vadd.f32 %v3543, %v3764
        %3766 = vmatprep.mubr.bf16.mxu0 %v3494
        %3767 = vmatmul.mubr.bf16.gmra.mrb[0].mxu0 %v3493
        %v3768 = vpop.f32.mrb[0].mxu0
        %v3769 = vadd.f32 %v3539, %v3768
        %v3770 = vpop.f32.mrb[0].mxu0
        %v3771 = vadd.f32 %v3543, %v3770
        %v3772 = vpop.f32.mrb[0].mxu0
        %v3773 = vadd.f32 %v3539, %v3772
        %v3774 = vpop.f32.mrb[0].mxu0
        %v3775 = vadd.f32 %v3543, %v3774
        %3776 = vmatprep.mubr.bf16.mxu0 %v3496
        %3777 = vmatmul.mubr.bf16.gmra.mrb[0].mxu0 %v3495
        %v3778 = vpop.f32.mrb[0].mxu0
        %v3779 = vadd.f32 %v3539, %v3778
        %v3780 = vpop.f32.mrb[0].mxu0
        %v3781 = vadd.f32 %v3543, %v3780
        %v3782 = vpop.f32.mrb[0].mxu0
        %v3783 = vadd.f32 %v3539, %v3782
        %v3784 = vpop.f32.mrb[0].mxu0
        %v3785 = vadd.f32 %v3543, %v3784
        %3786 = vmatprep.mubr.bf16.mxu0 %v3498
        %3787 = vmatmul.mubr.bf16.gmra.mrb[0].mxu0 %v3497
        %v3788 = vpop.f32.mrb[0].mxu0
        %v3789 = vadd.f32 %v3539, %v3788
        %v3790 = vpop.f32.mrb[0].mxu0
        %v3791 = vadd.f32 %v3543, %v3790
        %v3792 = vpop.f32.mrb[0].mxu0
        %v3793 = vadd.f32 %v3539, %v3792
        %v3794 = vpop.f32.mrb[0].mxu0
        %v3795 = vadd.f32 %v3543, %v3794
        %3796 = vmatprep.mubr.bf16.mxu0 %v3500
        %3797 = vmatmul.mubr.bf16.gmra.mrb[0].mxu0 %v3499
        %v3798 = vpop.f32.mrb[0].mxu0
        %v3799 = vadd.f32 %v3539, %v3798
        %v3800 = vpop.f32.mrb[0].mxu0
        %v3801 = vadd.f32 %v3543, %v3800
        %v3802 = vpop.f32.mrb[0].mxu0
        %v3803 = vadd.f32 %v3539, %v3802
        %v3804 = vpop.f32.mrb[0].mxu0
        %v3805 = vadd.f32 %v3543, %v3804
        %3806 = vmatprep.mubr.bf16.mxu0 %v3502
        %3807 = vmatmul.mubr.bf16.gmra.mrb[0].mxu0 %v3501
        %v3808 = vpop.f32.mrb[0].mxu0
        %v3809 = vadd.f32 %v3539, %v3808
        %v3810 = vpop.f32.mrb[0].mxu0
        %v3811 = vadd.f32 %v3543, %v3810
        %v3812 = vpop.f32.mrb[0].mxu0
        %v3813 = vadd.f32 %v3539, %v3812
        %v3814 = vpop.f32.mrb[0].mxu0
        %v3815 = vadd.f32 %v3543, %v3814
        %3816 = vdwg.mxu0
        %v3817 = vadd.f32 %v3739, %v3741
        %3818 = vadd.xlane.f32.xlu0 %v3817
        %v3819 = vpop.xlane.xlu0 %3818
        %v3820 = vadd.f32 %v3743, %v3745
        %3821 = vadd.xlane.f32.xlu0 %v3820
        %v3822 = vpop.xlane.xlu0 %3821
        %v3823 = vadd.f32 %v3749, %v3751
        %3824 = vadd.xlane.f32.xlu0 %v3823
        %v3825 = vpop.xlane.xlu0 %3824
        %v3826 = vadd.f32 %v3753, %v3755
        %3827 = vadd.xlane.f32.xlu0 %v3826
        %v3828 = vpop.xlane.xlu0 %3827
        %v3829 = vadd.f32 %v3759, %v3761
        %3830 = vadd.xlane.f32.xlu0 %v3829
        %v3831 = vpop.xlane.xlu0 %3830
        %v3832 = vadd.f32 %v3763, %v3765
        %3833 = vadd.xlane.f32.xlu0 %v3832
        %v3834 = vpop.xlane.xlu0 %3833
        %v3835 = vadd.f32 %v3769, %v3771
        %3836 = vadd.xlane.f32.xlu0 %v3835
        %v3837 = vpop.xlane.xlu0 %3836
        %v3838 = vadd.f32 %v3773, %v3775
        %3839 = vadd.xlane.f32.xlu0 %v3838
        %v3840 = vpop.xlane.xlu0 %3839
        %v3841 = vadd.f32 %v3779, %v3781
        %3842 = vadd.xlane.f32.xlu0 %v3841
        %v3843 = vpop.xlane.xlu0 %3842
        %v3844 = vadd.f32 %v3783, %v3785
        %3845 = vadd.xlane.f32.xlu0 %v3844
        %v3846 = vpop.xlane.xlu0 %3845
        %v3847 = vadd.f32 %v3789, %v3791
        %3848 = vadd.xlane.f32.xlu0 %v3847
        %v3849 = vpop.xlane.xlu0 %3848
        %v3850 = vadd.f32 %v3793, %v3795
        %3851 = vadd.xlane.f32.xlu0 %v3850
        %v3852 = vpop.xlane.xlu0 %3851
        %v3853 = vadd.f32 %v3799, %v3801
        %3854 = vadd.xlane.f32.xlu0 %v3853
        %v3855 = vpop.xlane.xlu0 %3854
        %v3856 = vadd.f32 %v3803, %v3805
        %3857 = vadd.xlane.f32.xlu0 %v3856
        %v3858 = vpop.xlane.xlu0 %3857
        %v3859 = vadd.f32 %v3809, %v3811
        %3860 = vadd.xlane.f32.xlu0 %v3859
        %v3861 = vpop.xlane.xlu0 %3860
        %v3862 = vadd.f32 %v3813, %v3815
        %3863 = vadd.xlane.f32.xlu0 %v3862
        %v3864 = vpop.xlane.xlu0 %3863
        %v3865 = vmul.f32 %v3819, %v533
        %v3866 = vmul.f32 %v3822, %v533
        %v3867 = vmul.f32 %v3825, %v533
        %v3868 = vmul.f32 %v3828, %v533
        %v3869 = vmul.f32 %v3831, %v533
        %v3870 = vmul.f32 %v3834, %v533
        %v3871 = vmul.f32 %v3837, %v533
        %v3872 = vmul.f32 %v3840, %v533
        %v3873 = vmul.f32 %v3843, %v533
        %v3874 = vmul.f32 %v3846, %v533
        %v3875 = vmul.f32 %v3849, %v533
        %v3876 = vmul.f32 %v3852, %v533
        %v3877 = vmul.f32 %v3855, %v533
        %v3878 = vmul.f32 %v3858, %v533
        %v3879 = vmul.f32 %v3861, %v533
        %v3880 = vmul.f32 %v3864, %v533
        %v3881 = vmul.f32 %v3739, %v3739
        %v3882 = vmul.f32 %v3741, %v3741
        %v3883 = vmul.f32 %v3743, %v3743
        %v3884 = vmul.f32 %v3745, %v3745
        %v3885 = vmul.f32 %v3749, %v3749
        %v3886 = vmul.f32 %v3751, %v3751
        %v3887 = vmul.f32 %v3753, %v3753
        %v3888 = vmul.f32 %v3755, %v3755
        %v3889 = vmul.f32 %v3759, %v3759
        %v3890 = vmul.f32 %v3761, %v3761
        %v3891 = vmul.f32 %v3763, %v3763
        %v3892 = vmul.f32 %v3765, %v3765
        %v3893 = vmul.f32 %v3769, %v3769
        %v3894 = vmul.f32 %v3771, %v3771
        %v3895 = vmul.f32 %v3773, %v3773
        %v3896 = vmul.f32 %v3775, %v3775
        %v3897 = vmul.f32 %v3779, %v3779
        %v3898 = vmul.f32 %v3781, %v3781
        %v3899 = vmul.f32 %v3783, %v3783
        %v3900 = vmul.f32 %v3785, %v3785
        %v3901 = vmul.f32 %v3789, %v3789
        %v3902 = vmul.f32 %v3791, %v3791
        %v3903 = vmul.f32 %v3793, %v3793
        %v3904 = vmul.f32 %v3795, %v3795
        %v3905 = vmul.f32 %v3799, %v3799
        %v3906 = vmul.f32 %v3801, %v3801
        %v3907 = vmul.f32 %v3803, %v3803
        %v3908 = vmul.f32 %v3805, %v3805
        %v3909 = vmul.f32 %v3809, %v3809
        %v3910 = vmul.f32 %v3811, %v3811
        %v3911 = vmul.f32 %v3813, %v3813
        %v3912 = vmul.f32 %v3815, %v3815
        %v3913 = vadd.f32 %v3881, %v3882
        %3914 = vadd.xlane.f32.xlu0 %v3913
        %v3915 = vpop.xlane.xlu0 %3914
        %v3916 = vadd.f32 %v3883, %v3884
        %3917 = vadd.xlane.f32.xlu0 %v3916
        %v3918 = vpop.xlane.xlu0 %3917
        %v3919 = vadd.f32 %v3885, %v3886
        %3920 = vadd.xlane.f32.xlu0 %v3919
        %v3921 = vpop.xlane.xlu0 %3920
        %v3922 = vadd.f32 %v3887, %v3888
        %3923 = vadd.xlane.f32.xlu0 %v3922
        %v3924 = vpop.xlane.xlu0 %3923
        %v3925 = vadd.f32 %v3889, %v3890
        %3926 = vadd.xlane.f32.xlu0 %v3925
        %v3927 = vpop.xlane.xlu0 %3926
        %v3928 = vadd.f32 %v3891, %v3892
        %3929 = vadd.xlane.f32.xlu0 %v3928
        %v3930 = vpop.xlane.xlu0 %3929
        %v3931 = vadd.f32 %v3893, %v3894
        %3932 = vadd.xlane.f32.xlu0 %v3931
        %v3933 = vpop.xlane.xlu0 %3932
        %v3934 = vadd.f32 %v3895, %v3896
        %3935 = vadd.xlane.f32.xlu0 %v3934
        %v3936 = vpop.xlane.xlu0 %3935
        %v3937 = vadd.f32 %v3897, %v3898
        %3938 = vadd.xlane.f32.xlu0 %v3937
        %v3939 = vpop.xlane.xlu0 %3938
        %v3940 = vadd.f32 %v3899, %v3900
        %3941 = vadd.xlane.f32.xlu0 %v3940
        %v3942 = vpop.xlane.xlu0 %3941
        %v3943 = vadd.f32 %v3901, %v3902
        %3944 = vadd.xlane.f32.xlu0 %v3943
        %v3945 = vpop.xlane.xlu0 %3944
        %v3946 = vadd.f32 %v3903, %v3904
        %3947 = vadd.xlane.f32.xlu0 %v3946
        %v3948 = vpop.xlane.xlu0 %3947
        %v3949 = vadd.f32 %v3905, %v3906
        %3950 = vadd.xlane.f32.xlu0 %v3949
        %v3951 = vpop.xlane.xlu0 %3950
        %v3952 = vadd.f32 %v3907, %v3908
        %3953 = vadd.xlane.f32.xlu0 %v3952
        %v3954 = vpop.xlane.xlu0 %3953
        %v3955 = vadd.f32 %v3909, %v3910
        %3956 = vadd.xlane.f32.xlu0 %v3955
        %v3957 = vpop.xlane.xlu0 %3956
        %v3958 = vadd.f32 %v3911, %v3912
        %3959 = vadd.xlane.f32.xlu0 %v3958
        %v3960 = vpop.xlane.xlu0 %3959
        %v3961 = vmul.f32 %v3915, %v533
        %v3962 = vmul.f32 %v3918, %v533
        %v3963 = vmul.f32 %v3921, %v533
        %v3964 = vmul.f32 %v3924, %v533
        %v3965 = vmul.f32 %v3927, %v533
        %v3966 = vmul.f32 %v3930, %v533
        %v3967 = vmul.f32 %v3933, %v533
        %v3968 = vmul.f32 %v3936, %v533
        %v3969 = vmul.f32 %v3939, %v533
        %v3970 = vmul.f32 %v3942, %v533
        %v3971 = vmul.f32 %v3945, %v533
        %v3972 = vmul.f32 %v3948, %v533
        %v3973 = vmul.f32 %v3951, %v533
        %v3974 = vmul.f32 %v3954, %v533
        %v3975 = vmul.f32 %v3957, %v533
        %v3976 = vmul.f32 %v3960, %v533
        %v3977 = vmul.f32 %v3865, %v3865
        %v3978 = vmul.f32 %v3866, %v3866
        %v3979 = vmul.f32 %v3867, %v3867
        %v3980 = vmul.f32 %v3868, %v3868
        %v3981 = vmul.f32 %v3869, %v3869
        %v3982 = vmul.f32 %v3870, %v3870
        %v3983 = vmul.f32 %v3871, %v3871
        %v3984 = vmul.f32 %v3872, %v3872
        %v3985 = vmul.f32 %v3873, %v3873
        %v3986 = vmul.f32 %v3874, %v3874
        %v3987 = vmul.f32 %v3875, %v3875
        %v3988 = vmul.f32 %v3876, %v3876
        %v3989 = vmul.f32 %v3877, %v3877
        %v3990 = vmul.f32 %v3878, %v3878
        %v3991 = vmul.f32 %v3879, %v3879
        %v3992 = vmul.f32 %v3880, %v3880
        %v3993 = vsub.f32 %v3961, %v3977
        %v3994 = vsub.f32 %v3962, %v3978
        %v3995 = vsub.f32 %v3963, %v3979
        %v3996 = vsub.f32 %v3964, %v3980
        %v3997 = vsub.f32 %v3965, %v3981
        %v3998 = vsub.f32 %v3966, %v3982
        %v3999 = vsub.f32 %v3967, %v3983
        %v4000 = vsub.f32 %v3968, %v3984
        %v4001 = vsub.f32 %v3969, %v3985
        %v4002 = vsub.f32 %v3970, %v3986
        %v4003 = vsub.f32 %v3971, %v3987
        %v4004 = vsub.f32 %v3972, %v3988
        %v4005 = vsub.f32 %v3973, %v3989
        %v4006 = vsub.f32 %v3974, %v3990
        %v4007 = vsub.f32 %v3975, %v3991
        %v4008 = vsub.f32 %v3976, %v3992
        %v4009 = vmax.f32 %v3993, 0.0
        %v4010 = vmax.f32 %v3994, 0.0
        %v4011 = vmax.f32 %v3995, 0.0
        %v4012 = vmax.f32 %v3996, 0.0
        %v4013 = vmax.f32 %v3997, 0.0
        %v4014 = vmax.f32 %v3998, 0.0
        %v4015 = vmax.f32 %v3999, 0.0
        %v4016 = vmax.f32 %v4000, 0.0
        %v4017 = vmax.f32 %v4001, 0.0
        %v4018 = vmax.f32 %v4002, 0.0
        %v4019 = vmax.f32 %v4003, 0.0
        %v4020 = vmax.f32 %v4004, 0.0
        %v4021 = vmax.f32 %v4005, 0.0
        %v4022 = vmax.f32 %v4006, 0.0
        %v4023 = vmax.f32 %v4007, 0.0
        %v4024 = vmax.f32 %v4008, 0.0
        %v4025 = vsub.f32 %v3739, %v3865
        %v4026 = vsub.f32 %v3741, %v3865
        %v4027 = vsub.f32 %v3743, %v3866
        %v4028 = vsub.f32 %v3745, %v3866
        %v4029 = vsub.f32 %v3749, %v3867
        %v4030 = vsub.f32 %v3751, %v3867
        %v4031 = vsub.f32 %v3753, %v3868
        %v4032 = vsub.f32 %v3755, %v3868
        %v4033 = vsub.f32 %v3759, %v3869
        %v4034 = vsub.f32 %v3761, %v3869
        %v4035 = vsub.f32 %v3763, %v3870
        %v4036 = vsub.f32 %v3765, %v3870
        %v4037 = vsub.f32 %v3769, %v3871
        %v4038 = vsub.f32 %v3771, %v3871
        %v4039 = vsub.f32 %v3773, %v3872
        %v4040 = vsub.f32 %v3775, %v3872
        %v4041 = vsub.f32 %v3779, %v3873
        %v4042 = vsub.f32 %v3781, %v3873
        %v4043 = vsub.f32 %v3783, %v3874
        %v4044 = vsub.f32 %v3785, %v3874
        %v4045 = vsub.f32 %v3789, %v3875
        %v4046 = vsub.f32 %v3791, %v3875
        %v4047 = vsub.f32 %v3793, %v3876
        %v4048 = vsub.f32 %v3795, %v3876
        %v4049 = vsub.f32 %v3799, %v3877
        %v4050 = vsub.f32 %v3801, %v3877
        %v4051 = vsub.f32 %v3803, %v3878
        %v4052 = vsub.f32 %v3805, %v3878
        %v4053 = vsub.f32 %v3809, %v3879
        %v4054 = vsub.f32 %v3811, %v3879
        %v4055 = vsub.f32 %v3813, %v3880
        %v4056 = vsub.f32 %v3815, %v3880
        %v4057 = vadd.f32 %v4009, 1e-05
        %v4058 = vadd.f32 %v4010, 1e-05
        %v4059 = vadd.f32 %v4011, 1e-05
        %v4060 = vadd.f32 %v4012, 1e-05
        %v4061 = vadd.f32 %v4013, 1e-05
        %v4062 = vadd.f32 %v4014, 1e-05
        %v4063 = vadd.f32 %v4015, 1e-05
        %v4064 = vadd.f32 %v4016, 1e-05
        %v4065 = vadd.f32 %v4017, 1e-05
        %v4066 = vadd.f32 %v4018, 1e-05
        %v4067 = vadd.f32 %v4019, 1e-05
        %v4068 = vadd.f32 %v4020, 1e-05
        %v4069 = vadd.f32 %v4021, 1e-05
        %v4070 = vadd.f32 %v4022, 1e-05
        %v4071 = vadd.f32 %v4023, 1e-05
        %v4072 = vadd.f32 %v4024, 1e-05
        %v4073 = vrsqrt.pop %v4057
        %v4074 = vrsqrt.pop %v4058
        %v4075 = vrsqrt.pop %v4059
        %v4076 = vrsqrt.pop %v4060
        %v4077 = vrsqrt.pop %v4061
        %v4078 = vrsqrt.pop %v4062
        %v4079 = vrsqrt.pop %v4063
        %v4080 = vrsqrt.pop %v4064
        %v4081 = vrsqrt.pop %v4065
        %v4082 = vrsqrt.pop %v4066
        %v4083 = vrsqrt.pop %v4067
        %v4084 = vrsqrt.pop %v4068
        %v4085 = vrsqrt.pop %v4069
        %v4086 = vrsqrt.pop %v4070
        %v4087 = vrsqrt.pop %v4071
        %v4088 = vrsqrt.pop %v4072
        %v4089 = vmul.f32 %v4025, %v4073
        %v4090 = vmul.f32 %v4026, %v4073
        %v4091 = vmul.f32 %v4027, %v4074
        %v4092 = vmul.f32 %v4028, %v4074
        %v4093 = vmul.f32 %v4029, %v4075
        %v4094 = vmul.f32 %v4030, %v4075
        %v4095 = vmul.f32 %v4031, %v4076
        %v4096 = vmul.f32 %v4032, %v4076
        %v4097 = vmul.f32 %v4033, %v4077
        %v4098 = vmul.f32 %v4034, %v4077
        %v4099 = vmul.f32 %v4035, %v4078
        %v4100 = vmul.f32 %v4036, %v4078
        %v4101 = vmul.f32 %v4037, %v4079
        %v4102 = vmul.f32 %v4038, %v4079
        %v4103 = vmul.f32 %v4039, %v4080
        %v4104 = vmul.f32 %v4040, %v4080
        %v4105 = vmul.f32 %v4041, %v4081
        %v4106 = vmul.f32 %v4042, %v4081
        %v4107 = vmul.f32 %v4043, %v4082
        %v4108 = vmul.f32 %v4044, %v4082
        %v4109 = vmul.f32 %v4045, %v4083
        %v4110 = vmul.f32 %v4046, %v4083
        %v4111 = vmul.f32 %v4047, %v4084
        %v4112 = vmul.f32 %v4048, %v4084
        %v4113 = vmul.f32 %v4049, %v4085
        %v4114 = vmul.f32 %v4050, %v4085
        %v4115 = vmul.f32 %v4051, %v4086
        %v4116 = vmul.f32 %v4052, %v4086
        %v4117 = vmul.f32 %v4053, %v4087
        %v4118 = vmul.f32 %v4054, %v4087
        %v4119 = vmul.f32 %v4055, %v4088
        %v4120 = vmul.f32 %v4056, %v4088
        %v4121 = vmax.f32 %v4089, 0.0
        %v4122 = vmax.f32 %v4090, 0.0
        %v4123 = vmax.f32 %v4091, 0.0
        %v4124 = vmax.f32 %v4092, 0.0
        %v4125 = vmax.f32 %v4093, 0.0
        %v4126 = vmax.f32 %v4094, 0.0
        %v4127 = vmax.f32 %v4095, 0.0
        %v4128 = vmax.f32 %v4096, 0.0
        %v4129 = vmax.f32 %v4097, 0.0
        %v4130 = vmax.f32 %v4098, 0.0
        %v4131 = vmax.f32 %v4099, 0.0
        %v4132 = vmax.f32 %v4100, 0.0
        %v4133 = vmax.f32 %v4101, 0.0
        %v4134 = vmax.f32 %v4102, 0.0
        %v4135 = vmax.f32 %v4103, 0.0
        %v4136 = vmax.f32 %v4104, 0.0
        %v4137 = vmax.f32 %v4105, 0.0
        %v4138 = vmax.f32 %v4106, 0.0
        %v4139 = vmax.f32 %v4107, 0.0
        %v4140 = vmax.f32 %v4108, 0.0
        %v4141 = vmax.f32 %v4109, 0.0
        %v4142 = vmax.f32 %v4110, 0.0
        %v4143 = vmax.f32 %v4111, 0.0
        %v4144 = vmax.f32 %v4112, 0.0
        %v4145 = vmax.f32 %v4113, 0.0
        %v4146 = vmax.f32 %v4114, 0.0
        %v4147 = vmax.f32 %v4115, 0.0
        %v4148 = vmax.f32 %v4116, 0.0
        %v4149 = vmax.f32 %v4117, 0.0
        %v4150 = vmax.f32 %v4118, 0.0
        %v4151 = vmax.f32 %v4119, 0.0
        %v4152 = vmax.f32 %v4120, 0.0
        %v4153 = vpack.c.bf16 %v4123, %v4121
        %v4154 = vpack.c.bf16 %v4124, %v4122
        %v4155 = vpack.c.bf16 %v4127, %v4125
        %v4156 = vpack.c.bf16 %v4128, %v4126
        %v4157 = vpack.c.bf16 %v4131, %v4129
        %v4158 = vpack.c.bf16 %v4132, %v4130
        %v4159 = vpack.c.bf16 %v4135, %v4133
        %v4160 = vpack.c.bf16 %v4136, %v4134
        %v4161 = vpack.c.bf16 %v4139, %v4137
        %v4162 = vpack.c.bf16 %v4140, %v4138
        %v4163 = vpack.c.bf16 %v4143, %v4141
        %v4164 = vpack.c.bf16 %v4144, %v4142
        %v4165 = vpack.c.bf16 %v4147, %v4145
        %v4166 = vpack.c.bf16 %v4148, %v4146
        %v4167 = vpack.c.bf16 %v4151, %v4149
        %v4168 = vpack.c.bf16 %v4152, %v4150
        %s4169 = scalar_lea.vmem [#allocation2], 1280
        %v4170 = vld [vmem:[%s4169] sm:$0xff]
        %v4171 = vld [vmem:[%s4169 + $0x8] sm:$0xff]
        %v4172 = vld [vmem:[%s4169 + $0x10] sm:$0xff]
        %v4173 = vld [vmem:[%s4169 + $0x18] sm:$0xff]
        %v4174 = vld [vmem:[%s4169 + $0x20] sm:$0xff]
        %v4175 = vld [vmem:[%s4169 + $0x28] sm:$0xff]
        %v4176 = vld [vmem:[%s4169 + $0x30] sm:$0xff]
        %v4177 = vld [vmem:[%s4169 + $0x38] sm:$0xff]
        %v4178 = vld [vmem:[%s4169 + $0x40] sm:$0xff]
        %v4179 = vld [vmem:[%s4169 + $0x48] sm:$0xff]
        %v4180 = vld [vmem:[%s4169 + $0x50] sm:$0xff]
        %v4181 = vld [vmem:[%s4169 + $0x58] sm:$0xff]
        %v4182 = vld [vmem:[%s4169 + $0x60] sm:$0xff]
        %v4183 = vld [vmem:[%s4169 + $0x68] sm:$0xff]
        %v4184 = vld [vmem:[%s4169 + $0x70] sm:$0xff]
        %v4185 = vld [vmem:[%s4169 + $0x78] sm:$0xff]
        %v4186 = vld [vmem:[%s4169 + $0x80] sm:$0xff]
        %v4187 = vld [vmem:[%s4169 + $0x88] sm:$0xff]
        %v4188 = vld [vmem:[%s4169 + $0x90] sm:$0xff]
        %v4189 = vld [vmem:[%s4169 + $0x98] sm:$0xff]
        %v4190 = vld [vmem:[%s4169 + $0xa0] sm:$0xff]
        %v4191 = vld [vmem:[%s4169 + $0xa8] sm:$0xff]
        %v4192 = vld [vmem:[%s4169 + $0xb0] sm:$0xff]
        %v4193 = vld [vmem:[%s4169 + $0xb8] sm:$0xff]
        %v4194 = vld [vmem:[%s4169 + $0xc0] sm:$0xff]
        %v4195 = vld [vmem:[%s4169 + $0xc8] sm:$0xff]
        %v4196 = vld [vmem:[%s4169 + $0xd0] sm:$0xff]
        %v4197 = vld [vmem:[%s4169 + $0xd8] sm:$0xff]
        %v4198 = vld [vmem:[%s4169 + $0xe0] sm:$0xff]
        %v4199 = vld [vmem:[%s4169 + $0xe8] sm:$0xff]
        %v4200 = vld [vmem:[%s4169 + $0xf0] sm:$0xff]
        %v4201 = vld [vmem:[%s4169 + $0xf8] sm:$0xff]
        %v4202 = vlaneseq
        %v4203 = vshrl.u32 %v4202, 7
        %v4204 = vsub.s32 5, %v4203
        %v4205 = vrot.slane %v822, %v4204
        %v4206 = vlaneseq
        %v4207 = vshrl.u32 %v4206, 7
        %v4208 = vsub.s32 5, %v4207
        %v4209 = vrot.slane %v823, %v4208
        %v4242 = vunpack.c.l.b16 %v4170
        %v4243 = vunpack.c.h.b16 %v4170
        %v4244 = vunpack.c.l.b16 %v4171
        %v4245 = vunpack.c.h.b16 %v4171
        %v4246 = vunpack.c.l.b16 %v4172
        %v4247 = vunpack.c.h.b16 %v4172
        %v4248 = vunpack.c.l.b16 %v4173
        %v4249 = vunpack.c.h.b16 %v4173
        %v4250 = vunpack.c.l.b16 %v4174
        %v4251 = vunpack.c.h.b16 %v4174
        %v4252 = vunpack.c.l.b16 %v4175
        %v4253 = vunpack.c.h.b16 %v4175
        %v4254 = vunpack.c.l.b16 %v4176
        %v4255 = vunpack.c.h.b16 %v4176
        %v4256 = vunpack.c.l.b16 %v4177
        %v4257 = vunpack.c.h.b16 %v4177
        %v4258 = vunpack.c.l.b16 %v4178
        %v4259 = vunpack.c.h.b16 %v4178
        %v4260 = vunpack.c.l.b16 %v4179
        %v4261 = vunpack.c.h.b16 %v4179
        %v4262 = vunpack.c.l.b16 %v4180
        %v4263 = vunpack.c.h.b16 %v4180
        %v4264 = vunpack.c.l.b16 %v4181
        %v4265 = vunpack.c.h.b16 %v4181
        %v4266 = vunpack.c.l.b16 %v4182
        %v4267 = vunpack.c.h.b16 %v4182
        %v4268 = vunpack.c.l.b16 %v4183
        %v4269 = vunpack.c.h.b16 %v4183
        %v4270 = vunpack.c.l.b16 %v4184
        %v4271 = vunpack.c.h.b16 %v4184
        %v4272 = vunpack.c.l.b16 %v4185
        %v4273 = vunpack.c.h.b16 %v4185
        %v4274 = vunpack.c.l.b16 %v4186
        %v4275 = vunpack.c.h.b16 %v4186
        %v4276 = vunpack.c.l.b16 %v4187
        %v4277 = vunpack.c.h.b16 %v4187
        %v4278 = vunpack.c.l.b16 %v4188
        %v4279 = vunpack.c.h.b16 %v4188
        %v4280 = vunpack.c.l.b16 %v4189
        %v4281 = vunpack.c.h.b16 %v4189
        %v4282 = vunpack.c.l.b16 %v4190
        %v4283 = vunpack.c.h.b16 %v4190
        %v4284 = vunpack.c.l.b16 %v4191
        %v4285 = vunpack.c.h.b16 %v4191
        %v4286 = vunpack.c.l.b16 %v4192
        %v4287 = vunpack.c.h.b16 %v4192
        %v4288 = vunpack.c.l.b16 %v4193
        %v4289 = vunpack.c.h.b16 %v4193
        %v4290 = vunpack.c.l.b16 %v4194
        %v4291 = vunpack.c.h.b16 %v4194
        %v4292 = vunpack.c.l.b16 %v4195
        %v4293 = vunpack.c.h.b16 %v4195
        %v4294 = vunpack.c.l.b16 %v4196
        %v4295 = vunpack.c.h.b16 %v4196
        %v4296 = vunpack.c.l.b16 %v4197
        %v4297 = vunpack.c.h.b16 %v4197
        %v4298 = vunpack.c.l.b16 %v4198
        %v4299 = vunpack.c.h.b16 %v4198
        %v4300 = vunpack.c.l.b16 %v4199
        %v4301 = vunpack.c.h.b16 %v4199
        %v4302 = vunpack.c.l.b16 %v4200
        %v4303 = vunpack.c.h.b16 %v4200
        %v4304 = vunpack.c.l.b16 %v4201
        %v4305 = vunpack.c.h.b16 %v4201
        %v4306 = vpack.c.b16 %v4244, %v4242
        %v4307 = vpack.c.b16 %v4245, %v4243
        %v4308 = vpack.c.b16 %v4248, %v4246
        %v4309 = vpack.c.b16 %v4249, %v4247
        %v4310 = vpack.c.b16 %v4252, %v4250
        %v4311 = vpack.c.b16 %v4253, %v4251
        %v4312 = vpack.c.b16 %v4256, %v4254
        %v4313 = vpack.c.b16 %v4257, %v4255
        %v4314 = vpack.c.b16 %v4260, %v4258
        %v4315 = vpack.c.b16 %v4261, %v4259
        %v4316 = vpack.c.b16 %v4264, %v4262
        %v4317 = vpack.c.b16 %v4265, %v4263
        %v4318 = vpack.c.b16 %v4268, %v4266
        %v4319 = vpack.c.b16 %v4269, %v4267
        %v4320 = vpack.c.b16 %v4272, %v4270
        %v4321 = vpack.c.b16 %v4273, %v4271
        %v4322 = vpack.c.b16 %v4276, %v4274
        %v4323 = vpack.c.b16 %v4277, %v4275
        %v4324 = vpack.c.b16 %v4280, %v4278
        %v4325 = vpack.c.b16 %v4281, %v4279
        %v4326 = vpack.c.b16 %v4284, %v4282
        %v4327 = vpack.c.b16 %v4285, %v4283
        %v4328 = vpack.c.b16 %v4288, %v4286
        %v4329 = vpack.c.b16 %v4289, %v4287
        %v4330 = vpack.c.b16 %v4292, %v4290
        %v4331 = vpack.c.b16 %v4293, %v4291
        %v4332 = vpack.c.b16 %v4296, %v4294
        %v4333 = vpack.c.b16 %v4297, %v4295
        %v4334 = vpack.c.b16 %v4300, %v4298
        %v4335 = vpack.c.b16 %v4301, %v4299
        %v4336 = vpack.c.b16 %v4304, %v4302
        %v4337 = vpack.c.b16 %v4305, %v4303
        %4370 = vmatprep.subr.bf16.mxu0 %v4307
        %4371 = vmatpush1.bf16.msra.mxu0 %v4306
        %4372 = vmatprep.subr.bf16.mxu0 %v4309
        %4373 = vmatpush1.bf16.msra.mxu0 %v4308
        %4374 = vmatprep.subr.bf16.mxu0 %v4311
        %4375 = vmatpush1.bf16.msra.mxu0 %v4310
        %4376 = vmatprep.subr.bf16.mxu0 %v4313
        %4377 = vmatpush1.bf16.msra.mxu0 %v4312
        %4378 = vmatprep.subr.bf16.mxu0 %v4315
        %4379 = vmatpush1.bf16.msra.mxu0 %v4314
        %4380 = vmatprep.subr.bf16.mxu0 %v4317
        %4381 = vmatpush1.bf16.msra.mxu0 %v4316
        %4382 = vmatprep.subr.bf16.mxu0 %v4319
        %4383 = vmatpush1.bf16.msra.mxu0 %v4318
        %4384 = vmatprep.subr.bf16.mxu0 %v4321
        %4385 = vmatpush1.bf16.msra.mxu0 %v4320
        %4386 = vmatprep.subr.bf16.mxu0 %v4323
        %4387 = vmatpush1.bf16.msra.mxu0 %v4322
        %4388 = vmatprep.subr.bf16.mxu0 %v4325
        %4389 = vmatpush1.bf16.msra.mxu0 %v4324
        %4390 = vmatprep.subr.bf16.mxu0 %v4327
        %4391 = vmatpush1.bf16.msra.mxu0 %v4326
        %4392 = vmatprep.subr.bf16.mxu0 %v4329
        %4393 = vmatpush1.bf16.msra.mxu0 %v4328
        %4394 = vmatprep.subr.bf16.mxu0 %v4331
        %4395 = vmatpush1.bf16.msra.mxu0 %v4330
        %4396 = vmatprep.subr.bf16.mxu0 %v4333
        %4397 = vmatpush1.bf16.msra.mxu0 %v4332
        %4398 = vmatprep.subr.bf16.mxu0 %v4335
        %4399 = vmatpush1.bf16.msra.mxu0 %v4334
        %4400 = vmatprep.subr.bf16.mxu0 %v4337
        %4401 = vmatpush1.bf16.msra.mxu0 %v4336
        %4402 = vmatprep.mubr.bf16.mxu0 %v4154
        %4403 = vmatmul.mubr.bf16.gmra.mrb[0].mxu0 %v4153
        %v4404 = vpop.f32.mrb[0].mxu0
        %v4405 = vadd.f32 %v4205, %v4404
        %v4406 = vpop.f32.mrb[0].mxu0
        %v4407 = vadd.f32 %v4209, %v4406
        %v4408 = vpop.f32.mrb[0].mxu0
        %v4409 = vadd.f32 %v4205, %v4408
        %v4410 = vpop.f32.mrb[0].mxu0
        %v4411 = vadd.f32 %v4209, %v4410
        %4412 = vmatprep.mubr.bf16.mxu0 %v4156
        %4413 = vmatmul.mubr.bf16.gmra.mrb[0].mxu0 %v4155
        %v4414 = vpop.f32.mrb[0].mxu0
        %v4415 = vadd.f32 %v4205, %v4414
        %v4416 = vpop.f32.mrb[0].mxu0
        %v4417 = vadd.f32 %v4209, %v4416
        %v4418 = vpop.f32.mrb[0].mxu0
        %v4419 = vadd.f32 %v4205, %v4418
        %v4420 = vpop.f32.mrb[0].mxu0
        %v4421 = vadd.f32 %v4209, %v4420
        %4422 = vmatprep.mubr.bf16.mxu0 %v4158
        %4423 = vmatmul.mubr.bf16.gmra.mrb[0].mxu0 %v4157
        %v4424 = vpop.f32.mrb[0].mxu0
        %v4425 = vadd.f32 %v4205, %v4424
        %v4426 = vpop.f32.mrb[0].mxu0
        %v4427 = vadd.f32 %v4209, %v4426
        %v4428 = vpop.f32.mrb[0].mxu0
        %v4429 = vadd.f32 %v4205, %v4428
        %v4430 = vpop.f32.mrb[0].mxu0
        %v4431 = vadd.f32 %v4209, %v4430
        %4432 = vmatprep.mubr.bf16.mxu0 %v4160
        %4433 = vmatmul.mubr.bf16.gmra.mrb[0].mxu0 %v4159
        %v4434 = vpop.f32.mrb[0].mxu0
        %v4435 = vadd.f32 %v4205, %v4434
        %v4436 = vpop.f32.mrb[0].mxu0
        %v4437 = vadd.f32 %v4209, %v4436
        %v4438 = vpop.f32.mrb[0].mxu0
        %v4439 = vadd.f32 %v4205, %v4438
        %v4440 = vpop.f32.mrb[0].mxu0
        %v4441 = vadd.f32 %v4209, %v4440
        %4442 = vmatprep.mubr.bf16.mxu0 %v4162
        %4443 = vmatmul.mubr.bf16.gmra.mrb[0].mxu0 %v4161
        %v4444 = vpop.f32.mrb[0].mxu0
        %v4445 = vadd.f32 %v4205, %v4444
        %v4446 = vpop.f32.mrb[0].mxu0
        %v4447 = vadd.f32 %v4209, %v4446
        %v4448 = vpop.f32.mrb[0].mxu0
        %v4449 = vadd.f32 %v4205, %v4448
        %v4450 = vpop.f32.mrb[0].mxu0
        %v4451 = vadd.f32 %v4209, %v4450
        %4452 = vmatprep.mubr.bf16.mxu0 %v4164
        %4453 = vmatmul.mubr.bf16.gmra.mrb[0].mxu0 %v4163
        %v4454 = vpop.f32.mrb[0].mxu0
        %v4455 = vadd.f32 %v4205, %v4454
        %v4456 = vpop.f32.mrb[0].mxu0
        %v4457 = vadd.f32 %v4209, %v4456
        %v4458 = vpop.f32.mrb[0].mxu0
        %v4459 = vadd.f32 %v4205, %v4458
        %v4460 = vpop.f32.mrb[0].mxu0
        %v4461 = vadd.f32 %v4209, %v4460
        %4462 = vmatprep.mubr.bf16.mxu0 %v4166
        %4463 = vmatmul.mubr.bf16.gmra.mrb[0].mxu0 %v4165
        %v4464 = vpop.f32.mrb[0].mxu0
        %v4465 = vadd.f32 %v4205, %v4464
        %v4466 = vpop.f32.mrb[0].mxu0
        %v4467 = vadd.f32 %v4209, %v4466
        %v4468 = vpop.f32.mrb[0].mxu0
        %v4469 = vadd.f32 %v4205, %v4468
        %v4470 = vpop.f32.mrb[0].mxu0
        %v4471 = vadd.f32 %v4209, %v4470
        %4472 = vmatprep.mubr.bf16.mxu0 %v4168
        %4473 = vmatmul.mubr.bf16.gmra.mrb[0].mxu0 %v4167
        %v4474 = vpop.f32.mrb[0].mxu0
        %v4475 = vadd.f32 %v4205, %v4474
        %v4476 = vpop.f32.mrb[0].mxu0
        %v4477 = vadd.f32 %v4209, %v4476
        %v4478 = vpop.f32.mrb[0].mxu0
        %v4479 = vadd.f32 %v4205, %v4478
        %v4480 = vpop.f32.mrb[0].mxu0
        %v4481 = vadd.f32 %v4209, %v4480
        %4482 = vdwg.mxu0
        %v4483 = vadd.f32 %v4405, %v4407
        %4484 = vadd.xlane.f32.xlu0 %v4483
        %v4485 = vpop.xlane.xlu0 %4484
        %v4486 = vadd.f32 %v4409, %v4411
        %4487 = vadd.xlane.f32.xlu0 %v4486
        %v4488 = vpop.xlane.xlu0 %4487
        %v4489 = vadd.f32 %v4415, %v4417
        %4490 = vadd.xlane.f32.xlu0 %v4489
        %v4491 = vpop.xlane.xlu0 %4490
        %v4492 = vadd.f32 %v4419, %v4421
        %4493 = vadd.xlane.f32.xlu0 %v4492
        %v4494 = vpop.xlane.xlu0 %4493
        %v4495 = vadd.f32 %v4425, %v4427
        %4496 = vadd.xlane.f32.xlu0 %v4495
        %v4497 = vpop.xlane.xlu0 %4496
        %v4498 = vadd.f32 %v4429, %v4431
        %4499 = vadd.xlane.f32.xlu0 %v4498
        %v4500 = vpop.xlane.xlu0 %4499
        %v4501 = vadd.f32 %v4435, %v4437
        %4502 = vadd.xlane.f32.xlu0 %v4501
        %v4503 = vpop.xlane.xlu0 %4502
        %v4504 = vadd.f32 %v4439, %v4441
        %4505 = vadd.xlane.f32.xlu0 %v4504
        %v4506 = vpop.xlane.xlu0 %4505
        %v4507 = vadd.f32 %v4445, %v4447
        %4508 = vadd.xlane.f32.xlu0 %v4507
        %v4509 = vpop.xlane.xlu0 %4508
        %v4510 = vadd.f32 %v4449, %v4451
        %4511 = vadd.xlane.f32.xlu0 %v4510
        %v4512 = vpop.xlane.xlu0 %4511
        %v4513 = vadd.f32 %v4455, %v4457
        %4514 = vadd.xlane.f32.xlu0 %v4513
        %v4515 = vpop.xlane.xlu0 %4514
        %v4516 = vadd.f32 %v4459, %v4461
        %4517 = vadd.xlane.f32.xlu0 %v4516
        %v4518 = vpop.xlane.xlu0 %4517
        %v4519 = vadd.f32 %v4465, %v4467
        %4520 = vadd.xlane.f32.xlu0 %v4519
        %v4521 = vpop.xlane.xlu0 %4520
        %v4522 = vadd.f32 %v4469, %v4471
        %4523 = vadd.xlane.f32.xlu0 %v4522
        %v4524 = vpop.xlane.xlu0 %4523
        %v4525 = vadd.f32 %v4475, %v4477
        %4526 = vadd.xlane.f32.xlu0 %v4525
        %v4527 = vpop.xlane.xlu0 %4526
        %v4528 = vadd.f32 %v4479, %v4481
        %4529 = vadd.xlane.f32.xlu0 %v4528
        %v4530 = vpop.xlane.xlu0 %4529
        %v4531 = vmul.f32 %v4485, %v533
        %v4532 = vmul.f32 %v4488, %v533
        %v4533 = vmul.f32 %v4491, %v533
        %v4534 = vmul.f32 %v4494, %v533
        %v4535 = vmul.f32 %v4497, %v533
        %v4536 = vmul.f32 %v4500, %v533
        %v4537 = vmul.f32 %v4503, %v533
        %v4538 = vmul.f32 %v4506, %v533
        %v4539 = vmul.f32 %v4509, %v533
        %v4540 = vmul.f32 %v4512, %v533
        %v4541 = vmul.f32 %v4515, %v533
        %v4542 = vmul.f32 %v4518, %v533
        %v4543 = vmul.f32 %v4521, %v533
        %v4544 = vmul.f32 %v4524, %v533
        %v4545 = vmul.f32 %v4527, %v533
        %v4546 = vmul.f32 %v4530, %v533
        %v4547 = vmul.f32 %v4405, %v4405
        %v4548 = vmul.f32 %v4407, %v4407
        %v4549 = vmul.f32 %v4409, %v4409
        %v4550 = vmul.f32 %v4411, %v4411
        %v4551 = vmul.f32 %v4415, %v4415
        %v4552 = vmul.f32 %v4417, %v4417
        %v4553 = vmul.f32 %v4419, %v4419
        %v4554 = vmul.f32 %v4421, %v4421
        %v4555 = vmul.f32 %v4425, %v4425
        %v4556 = vmul.f32 %v4427, %v4427
        %v4557 = vmul.f32 %v4429, %v4429
        %v4558 = vmul.f32 %v4431, %v4431
        %v4559 = vmul.f32 %v4435, %v4435
        %v4560 = vmul.f32 %v4437, %v4437
        %v4561 = vmul.f32 %v4439, %v4439
        %v4562 = vmul.f32 %v4441, %v4441
        %v4563 = vmul.f32 %v4445, %v4445
        %v4564 = vmul.f32 %v4447, %v4447
        %v4565 = vmul.f32 %v4449, %v4449
        %v4566 = vmul.f32 %v4451, %v4451
        %v4567 = vmul.f32 %v4455, %v4455
        %v4568 = vmul.f32 %v4457, %v4457
        %v4569 = vmul.f32 %v4459, %v4459
        %v4570 = vmul.f32 %v4461, %v4461
        %v4571 = vmul.f32 %v4465, %v4465
        %v4572 = vmul.f32 %v4467, %v4467
        %v4573 = vmul.f32 %v4469, %v4469
        %v4574 = vmul.f32 %v4471, %v4471
        %v4575 = vmul.f32 %v4475, %v4475
        %v4576 = vmul.f32 %v4477, %v4477
        %v4577 = vmul.f32 %v4479, %v4479
        %v4578 = vmul.f32 %v4481, %v4481
        %v4579 = vadd.f32 %v4547, %v4548
        %4580 = vadd.xlane.f32.xlu0 %v4579
        %v4581 = vpop.xlane.xlu0 %4580
        %v4582 = vadd.f32 %v4549, %v4550
        %4583 = vadd.xlane.f32.xlu0 %v4582
        %v4584 = vpop.xlane.xlu0 %4583
        %v4585 = vadd.f32 %v4551, %v4552
        %4586 = vadd.xlane.f32.xlu0 %v4585
        %v4587 = vpop.xlane.xlu0 %4586
        %v4588 = vadd.f32 %v4553, %v4554
        %4589 = vadd.xlane.f32.xlu0 %v4588
        %v4590 = vpop.xlane.xlu0 %4589
        %v4591 = vadd.f32 %v4555, %v4556
        %4592 = vadd.xlane.f32.xlu0 %v4591
        %v4593 = vpop.xlane.xlu0 %4592
        %v4594 = vadd.f32 %v4557, %v4558
        %4595 = vadd.xlane.f32.xlu0 %v4594
        %v4596 = vpop.xlane.xlu0 %4595
        %v4597 = vadd.f32 %v4559, %v4560
        %4598 = vadd.xlane.f32.xlu0 %v4597
        %v4599 = vpop.xlane.xlu0 %4598
        %v4600 = vadd.f32 %v4561, %v4562
        %4601 = vadd.xlane.f32.xlu0 %v4600
        %v4602 = vpop.xlane.xlu0 %4601
        %v4603 = vadd.f32 %v4563, %v4564
        %4604 = vadd.xlane.f32.xlu0 %v4603
        %v4605 = vpop.xlane.xlu0 %4604
        %v4606 = vadd.f32 %v4565, %v4566
        %4607 = vadd.xlane.f32.xlu0 %v4606
        %v4608 = vpop.xlane.xlu0 %4607
        %v4609 = vadd.f32 %v4567, %v4568
        %4610 = vadd.xlane.f32.xlu0 %v4609
        %v4611 = vpop.xlane.xlu0 %4610
        %v4612 = vadd.f32 %v4569, %v4570
        %4613 = vadd.xlane.f32.xlu0 %v4612
        %v4614 = vpop.xlane.xlu0 %4613
        %v4615 = vadd.f32 %v4571, %v4572
        %4616 = vadd.xlane.f32.xlu0 %v4615
        %v4617 = vpop.xlane.xlu0 %4616
        %v4618 = vadd.f32 %v4573, %v4574
        %4619 = vadd.xlane.f32.xlu0 %v4618
        %v4620 = vpop.xlane.xlu0 %4619
        %v4621 = vadd.f32 %v4575, %v4576
        %4622 = vadd.xlane.f32.xlu0 %v4621
        %v4623 = vpop.xlane.xlu0 %4622
        %v4624 = vadd.f32 %v4577, %v4578
        %4625 = vadd.xlane.f32.xlu0 %v4624
        %v4626 = vpop.xlane.xlu0 %4625
        %v4627 = vmul.f32 %v4581, %v533
        %v4628 = vmul.f32 %v4584, %v533
        %v4629 = vmul.f32 %v4587, %v533
        %v4630 = vmul.f32 %v4590, %v533
        %v4631 = vmul.f32 %v4593, %v533
        %v4632 = vmul.f32 %v4596, %v533
        %v4633 = vmul.f32 %v4599, %v533
        %v4634 = vmul.f32 %v4602, %v533
        %v4635 = vmul.f32 %v4605, %v533
        %v4636 = vmul.f32 %v4608, %v533
        %v4637 = vmul.f32 %v4611, %v533
        %v4638 = vmul.f32 %v4614, %v533
        %v4639 = vmul.f32 %v4617, %v533
        %v4640 = vmul.f32 %v4620, %v533
        %v4641 = vmul.f32 %v4623, %v533
        %v4642 = vmul.f32 %v4626, %v533
        %v4643 = vmul.f32 %v4531, %v4531
        %v4644 = vmul.f32 %v4532, %v4532
        %v4645 = vmul.f32 %v4533, %v4533
        %v4646 = vmul.f32 %v4534, %v4534
        %v4647 = vmul.f32 %v4535, %v4535
        %v4648 = vmul.f32 %v4536, %v4536
        %v4649 = vmul.f32 %v4537, %v4537
        %v4650 = vmul.f32 %v4538, %v4538
        %v4651 = vmul.f32 %v4539, %v4539
        %v4652 = vmul.f32 %v4540, %v4540
        %v4653 = vmul.f32 %v4541, %v4541
        %v4654 = vmul.f32 %v4542, %v4542
        %v4655 = vmul.f32 %v4543, %v4543
        %v4656 = vmul.f32 %v4544, %v4544
        %v4657 = vmul.f32 %v4545, %v4545
        %v4658 = vmul.f32 %v4546, %v4546
        %v4659 = vsub.f32 %v4627, %v4643
        %v4660 = vsub.f32 %v4628, %v4644
        %v4661 = vsub.f32 %v4629, %v4645
        %v4662 = vsub.f32 %v4630, %v4646
        %v4663 = vsub.f32 %v4631, %v4647
        %v4664 = vsub.f32 %v4632, %v4648
        %v4665 = vsub.f32 %v4633, %v4649
        %v4666 = vsub.f32 %v4634, %v4650
        %v4667 = vsub.f32 %v4635, %v4651
        %v4668 = vsub.f32 %v4636, %v4652
        %v4669 = vsub.f32 %v4637, %v4653
        %v4670 = vsub.f32 %v4638, %v4654
        %v4671 = vsub.f32 %v4639, %v4655
        %v4672 = vsub.f32 %v4640, %v4656
        %v4673 = vsub.f32 %v4641, %v4657
        %v4674 = vsub.f32 %v4642, %v4658
        %v4675 = vmax.f32 %v4659, 0.0
        %v4676 = vmax.f32 %v4660, 0.0
        %v4677 = vmax.f32 %v4661, 0.0
        %v4678 = vmax.f32 %v4662, 0.0
        %v4679 = vmax.f32 %v4663, 0.0
        %v4680 = vmax.f32 %v4664, 0.0
        %v4681 = vmax.f32 %v4665, 0.0
        %v4682 = vmax.f32 %v4666, 0.0
        %v4683 = vmax.f32 %v4667, 0.0
        %v4684 = vmax.f32 %v4668, 0.0
        %v4685 = vmax.f32 %v4669, 0.0
        %v4686 = vmax.f32 %v4670, 0.0
        %v4687 = vmax.f32 %v4671, 0.0
        %v4688 = vmax.f32 %v4672, 0.0
        %v4689 = vmax.f32 %v4673, 0.0
        %v4690 = vmax.f32 %v4674, 0.0
        %v4691 = vsub.f32 %v4405, %v4531
        %v4692 = vsub.f32 %v4407, %v4531
        %v4693 = vsub.f32 %v4409, %v4532
        %v4694 = vsub.f32 %v4411, %v4532
        %v4695 = vsub.f32 %v4415, %v4533
        %v4696 = vsub.f32 %v4417, %v4533
        %v4697 = vsub.f32 %v4419, %v4534
        %v4698 = vsub.f32 %v4421, %v4534
        %v4699 = vsub.f32 %v4425, %v4535
        %v4700 = vsub.f32 %v4427, %v4535
        %v4701 = vsub.f32 %v4429, %v4536
        %v4702 = vsub.f32 %v4431, %v4536
        %v4703 = vsub.f32 %v4435, %v4537
        %v4704 = vsub.f32 %v4437, %v4537
        %v4705 = vsub.f32 %v4439, %v4538
        %v4706 = vsub.f32 %v4441, %v4538
        %v4707 = vsub.f32 %v4445, %v4539
        %v4708 = vsub.f32 %v4447, %v4539
        %v4709 = vsub.f32 %v4449, %v4540
        %v4710 = vsub.f32 %v4451, %v4540
        %v4711 = vsub.f32 %v4455, %v4541
        %v4712 = vsub.f32 %v4457, %v4541
        %v4713 = vsub.f32 %v4459, %v4542
        %v4714 = vsub.f32 %v4461, %v4542
        %v4715 = vsub.f32 %v4465, %v4543
        %v4716 = vsub.f32 %v4467, %v4543
        %v4717 = vsub.f32 %v4469, %v4544
        %v4718 = vsub.f32 %v4471, %v4544
        %v4719 = vsub.f32 %v4475, %v4545
        %v4720 = vsub.f32 %v4477, %v4545
        %v4721 = vsub.f32 %v4479, %v4546
        %v4722 = vsub.f32 %v4481, %v4546
        %v4723 = vadd.f32 %v4675, 1e-05
        %v4724 = vadd.f32 %v4676, 1e-05
        %v4725 = vadd.f32 %v4677, 1e-05
        %v4726 = vadd.f32 %v4678, 1e-05
        %v4727 = vadd.f32 %v4679, 1e-05
        %v4728 = vadd.f32 %v4680, 1e-05
        %v4729 = vadd.f32 %v4681, 1e-05
        %v4730 = vadd.f32 %v4682, 1e-05
        %v4731 = vadd.f32 %v4683, 1e-05
        %v4732 = vadd.f32 %v4684, 1e-05
        %v4733 = vadd.f32 %v4685, 1e-05
        %v4734 = vadd.f32 %v4686, 1e-05
        %v4735 = vadd.f32 %v4687, 1e-05
        %v4736 = vadd.f32 %v4688, 1e-05
        %v4737 = vadd.f32 %v4689, 1e-05
        %v4738 = vadd.f32 %v4690, 1e-05
        %v4739 = vrsqrt.pop %v4723
        %v4740 = vrsqrt.pop %v4724
        %v4741 = vrsqrt.pop %v4725
        %v4742 = vrsqrt.pop %v4726
        %v4743 = vrsqrt.pop %v4727
        %v4744 = vrsqrt.pop %v4728
        %v4745 = vrsqrt.pop %v4729
        %v4746 = vrsqrt.pop %v4730
        %v4747 = vrsqrt.pop %v4731
        %v4748 = vrsqrt.pop %v4732
        %v4749 = vrsqrt.pop %v4733
        %v4750 = vrsqrt.pop %v4734
        %v4751 = vrsqrt.pop %v4735
        %v4752 = vrsqrt.pop %v4736
        %v4753 = vrsqrt.pop %v4737
        %v4754 = vrsqrt.pop %v4738
        %v4755 = vmul.f32 %v4691, %v4739
        %v4756 = vmul.f32 %v4692, %v4739
        %v4757 = vmul.f32 %v4693, %v4740
        %v4758 = vmul.f32 %v4694, %v4740
        %v4759 = vmul.f32 %v4695, %v4741
        %v4760 = vmul.f32 %v4696, %v4741
        %v4761 = vmul.f32 %v4697, %v4742
        %v4762 = vmul.f32 %v4698, %v4742
        %v4763 = vmul.f32 %v4699, %v4743
        %v4764 = vmul.f32 %v4700, %v4743
        %v4765 = vmul.f32 %v4701, %v4744
        %v4766 = vmul.f32 %v4702, %v4744
        %v4767 = vmul.f32 %v4703, %v4745
        %v4768 = vmul.f32 %v4704, %v4745
        %v4769 = vmul.f32 %v4705, %v4746
        %v4770 = vmul.f32 %v4706, %v4746
        %v4771 = vmul.f32 %v4707, %v4747
        %v4772 = vmul.f32 %v4708, %v4747
        %v4773 = vmul.f32 %v4709, %v4748
        %v4774 = vmul.f32 %v4710, %v4748
        %v4775 = vmul.f32 %v4711, %v4749
        %v4776 = vmul.f32 %v4712, %v4749
        %v4777 = vmul.f32 %v4713, %v4750
        %v4778 = vmul.f32 %v4714, %v4750
        %v4779 = vmul.f32 %v4715, %v4751
        %v4780 = vmul.f32 %v4716, %v4751
        %v4781 = vmul.f32 %v4717, %v4752
        %v4782 = vmul.f32 %v4718, %v4752
        %v4783 = vmul.f32 %v4719, %v4753
        %v4784 = vmul.f32 %v4720, %v4753
        %v4785 = vmul.f32 %v4721, %v4754
        %v4786 = vmul.f32 %v4722, %v4754
        %v4787 = vmax.f32 %v4755, 0.0
        %v4788 = vmax.f32 %v4756, 0.0
        %v4789 = vmax.f32 %v4757, 0.0
        %v4790 = vmax.f32 %v4758, 0.0
        %v4791 = vmax.f32 %v4759, 0.0
        %v4792 = vmax.f32 %v4760, 0.0
        %v4793 = vmax.f32 %v4761, 0.0
        %v4794 = vmax.f32 %v4762, 0.0
        %v4795 = vmax.f32 %v4763, 0.0
        %v4796 = vmax.f32 %v4764, 0.0
        %v4797 = vmax.f32 %v4765, 0.0
        %v4798 = vmax.f32 %v4766, 0.0
        %v4799 = vmax.f32 %v4767, 0.0
        %v4800 = vmax.f32 %v4768, 0.0
        %v4801 = vmax.f32 %v4769, 0.0
        %v4802 = vmax.f32 %v4770, 0.0
        %v4803 = vmax.f32 %v4771, 0.0
        %v4804 = vmax.f32 %v4772, 0.0
        %v4805 = vmax.f32 %v4773, 0.0
        %v4806 = vmax.f32 %v4774, 0.0
        %v4807 = vmax.f32 %v4775, 0.0
        %v4808 = vmax.f32 %v4776, 0.0
        %v4809 = vmax.f32 %v4777, 0.0
        %v4810 = vmax.f32 %v4778, 0.0
        %v4811 = vmax.f32 %v4779, 0.0
        %v4812 = vmax.f32 %v4780, 0.0
        %v4813 = vmax.f32 %v4781, 0.0
        %v4814 = vmax.f32 %v4782, 0.0
        %v4815 = vmax.f32 %v4783, 0.0
        %v4816 = vmax.f32 %v4784, 0.0
        %v4817 = vmax.f32 %v4785, 0.0
        %v4818 = vmax.f32 %v4786, 0.0
        %v4819 = vpack.c.bf16 %v4789, %v4787
        %v4820 = vpack.c.bf16 %v4790, %v4788
        %v4821 = vpack.c.bf16 %v4793, %v4791
        %v4822 = vpack.c.bf16 %v4794, %v4792
        %v4823 = vpack.c.bf16 %v4797, %v4795
        %v4824 = vpack.c.bf16 %v4798, %v4796
        %v4825 = vpack.c.bf16 %v4801, %v4799
        %v4826 = vpack.c.bf16 %v4802, %v4800
        %v4827 = vpack.c.bf16 %v4805, %v4803
        %v4828 = vpack.c.bf16 %v4806, %v4804
        %v4829 = vpack.c.bf16 %v4809, %v4807
        %v4830 = vpack.c.bf16 %v4810, %v4808
        %v4831 = vpack.c.bf16 %v4813, %v4811
        %v4832 = vpack.c.bf16 %v4814, %v4812
        %v4833 = vpack.c.bf16 %v4817, %v4815
        %v4834 = vpack.c.bf16 %v4818, %v4816
        %v4835 = vld [vmem:[%s5] sm:$0xf]
        %v4836 = vld [vmem:[%s5 + $0x4] sm:$0xf]
        %v4837 = vld [vmem:[%s5 + $0x8] sm:$0xf]
        %v4838 = vld [vmem:[%s5 + $0xc] sm:$0xf]
        %v4839 = vld [vmem:[%s5 + $0x10] sm:$0xf]
        %v4840 = vld [vmem:[%s5 + $0x14] sm:$0xf]
        %v4841 = vld [vmem:[%s5 + $0x18] sm:$0xf]
        %v4842 = vld [vmem:[%s5 + $0x1c] sm:$0xf]
        %v4843 = vld [vmem:[%s5 + $0x20] sm:$0xf]
        %v4844 = vld [vmem:[%s5 + $0x24] sm:$0xf]
        %v4845 = vld [vmem:[%s5 + $0x28] sm:$0xf]
        %v4846 = vld [vmem:[%s5 + $0x2c] sm:$0xf]
        %v4847 = vld [vmem:[%s5 + $0x30] sm:$0xf]
        %v4848 = vld [vmem:[%s5 + $0x34] sm:$0xf]
        %v4849 = vld [vmem:[%s5 + $0x38] sm:$0xf]
        %v4850 = vld [vmem:[%s5 + $0x3c] sm:$0xf]
        %v4851 = vld [vmem:[%s5 + $0x40] sm:$0xf]
        %v4852 = vld [vmem:[%s5 + $0x44] sm:$0xf]
        %v4853 = vld [vmem:[%s5 + $0x48] sm:$0xf]
        %v4854 = vld [vmem:[%s5 + $0x4c] sm:$0xf]
        %v4855 = vld [vmem:[%s5 + $0x50] sm:$0xf]
        %v4856 = vld [vmem:[%s5 + $0x54] sm:$0xf]
        %v4857 = vld [vmem:[%s5 + $0x58] sm:$0xf]
        %v4858 = vld [vmem:[%s5 + $0x5c] sm:$0xf]
        %v4859 = vld [vmem:[%s5 + $0x60] sm:$0xf]
        %v4860 = vld [vmem:[%s5 + $0x64] sm:$0xf]
        %v4861 = vld [vmem:[%s5 + $0x68] sm:$0xf]
        %v4862 = vld [vmem:[%s5 + $0x6c] sm:$0xf]
        %v4863 = vld [vmem:[%s5 + $0x70] sm:$0xf]
        %v4864 = vld [vmem:[%s5 + $0x74] sm:$0xf]
        %v4865 = vld [vmem:[%s5 + $0x78] sm:$0xf]
        %v4866 = vld [vmem:[%s5 + $0x7c] sm:$0xf]
        %v4867 = vld [vmem:[%s6] sm:$0x1]
        %v4869 = vlaneseq
        %v4870 = vshrl.u32 %v4869, 7
        %v4871 = vsub.s32 0, %v4870
        %v4872 = vrot.slane %v4867, %v4871
        %v4906 = vunpack.c.l.b16 %v4835
        %v4907 = vunpack.c.l.b16 %v4836
        %v4908 = vunpack.c.l.b16 %v4837
        %v4909 = vunpack.c.l.b16 %v4838
        %v4910 = vunpack.c.l.b16 %v4839
        %v4911 = vunpack.c.l.b16 %v4840
        %v4912 = vunpack.c.l.b16 %v4841
        %v4913 = vunpack.c.l.b16 %v4842
        %v4914 = vunpack.c.l.b16 %v4843
        %v4915 = vunpack.c.l.b16 %v4844
        %v4916 = vunpack.c.l.b16 %v4845
        %v4917 = vunpack.c.l.b16 %v4846
        %v4918 = vunpack.c.l.b16 %v4847
        %v4919 = vunpack.c.l.b16 %v4848
        %v4920 = vunpack.c.l.b16 %v4849
        %v4921 = vunpack.c.l.b16 %v4850
        %v4922 = vunpack.c.l.b16 %v4851
        %v4923 = vunpack.c.l.b16 %v4852
        %v4924 = vunpack.c.l.b16 %v4853
        %v4925 = vunpack.c.l.b16 %v4854
        %v4926 = vunpack.c.l.b16 %v4855
        %v4927 = vunpack.c.l.b16 %v4856
        %v4928 = vunpack.c.l.b16 %v4857
        %v4929 = vunpack.c.l.b16 %v4858
        %v4930 = vunpack.c.l.b16 %v4859
        %v4931 = vunpack.c.l.b16 %v4860
        %v4932 = vunpack.c.l.b16 %v4861
        %v4933 = vunpack.c.l.b16 %v4862
        %v4934 = vunpack.c.l.b16 %v4863
        %v4935 = vunpack.c.l.b16 %v4864
        %v4936 = vunpack.c.l.b16 %v4865
        %v4937 = vunpack.c.l.b16 %v4866
        %v4938 = vpack.c.b16 %v4907, %v4906
        %v4939 = vpack.c.b16 %v4909, %v4908
        %v4940 = vpack.c.b16 %v4911, %v4910
        %v4941 = vpack.c.b16 %v4913, %v4912
        %v4942 = vpack.c.b16 %v4915, %v4914
        %v4943 = vpack.c.b16 %v4917, %v4916
        %v4944 = vpack.c.b16 %v4919, %v4918
        %v4945 = vpack.c.b16 %v4921, %v4920
        %v4946 = vpack.c.b16 %v4923, %v4922
        %v4947 = vpack.c.b16 %v4925, %v4924
        %v4948 = vpack.c.b16 %v4927, %v4926
        %v4949 = vpack.c.b16 %v4929, %v4928
        %v4950 = vpack.c.b16 %v4931, %v4930
        %v4951 = vpack.c.b16 %v4933, %v4932
        %v4952 = vpack.c.b16 %v4935, %v4934
        %v4953 = vpack.c.b16 %v4937, %v4936
        %4970 = vmatprep.subr.bf16.mxu0 0
        %4971 = vmatpush1.bf16.msra.mxu0 %v4938
        %4972 = vmatprep.subr.bf16.mxu0 0
        %4973 = vmatpush1.bf16.msra.mxu0 %v4939
        %4974 = vmatprep.subr.bf16.mxu0 0
        %4975 = vmatpush1.bf16.msra.mxu0 %v4940
        %4976 = vmatprep.subr.bf16.mxu0 0
        %4977 = vmatpush1.bf16.msra.mxu0 %v4941
        %4978 = vmatprep.subr.bf16.mxu0 0
        %4979 = vmatpush1.bf16.msra.mxu0 %v4942
        %4980 = vmatprep.subr.bf16.mxu0 0
        %4981 = vmatpush1.bf16.msra.mxu0 %v4943
        %4982 = vmatprep.subr.bf16.mxu0 0
        %4983 = vmatpush1.bf16.msra.mxu0 %v4944
        %4984 = vmatprep.subr.bf16.mxu0 0
        %4985 = vmatpush1.bf16.msra.mxu0 %v4945
        %4986 = vmatprep.subr.bf16.mxu0 0
        %4987 = vmatpush1.bf16.msra.mxu0 %v4946
        %4988 = vmatprep.subr.bf16.mxu0 0
        %4989 = vmatpush1.bf16.msra.mxu0 %v4947
        %4990 = vmatprep.subr.bf16.mxu0 0
        %4991 = vmatpush1.bf16.msra.mxu0 %v4948
        %4992 = vmatprep.subr.bf16.mxu0 0
        %4993 = vmatpush1.bf16.msra.mxu0 %v4949
        %4994 = vmatprep.subr.bf16.mxu0 0
        %4995 = vmatpush1.bf16.msra.mxu0 %v4950
        %4996 = vmatprep.subr.bf16.mxu0 0
        %4997 = vmatpush1.bf16.msra.mxu0 %v4951
        %4998 = vmatprep.subr.bf16.mxu0 0
        %4999 = vmatpush1.bf16.msra.mxu0 %v4952
        %5000 = vmatprep.subr.bf16.mxu0 0
        %5001 = vmatpush1.bf16.msra.mxu0 %v4953
        %5002 = vmatprep.mubr.bf16.mxu0 %v4820
        %5003 = vmatmul.mubr.bf16.gmra.mrb[0].mxu0 %v4819
        %v5004 = vpop.f32.mrb[0].mxu0
        %v5005 = vadd.f32 %v4872, %v5004
        %v5006 = vpop.f32.mrb[0].mxu0
        %v5007 = vpop.f32.mrb[0].mxu0
        %v5008 = vadd.f32 %v4872, %v5007
        %v5009 = vpop.f32.mrb[0].mxu0
        %5010 = vmatprep.mubr.bf16.mxu0 %v4822
        %5011 = vmatmul.mubr.bf16.gmra.mrb[0].mxu0 %v4821
        %v5012 = vpop.f32.mrb[0].mxu0
        %v5013 = vadd.f32 %v4872, %v5012
        %v5014 = vpop.f32.mrb[0].mxu0
        %v5015 = vpop.f32.mrb[0].mxu0
        %v5016 = vadd.f32 %v4872, %v5015
        %v5017 = vpop.f32.mrb[0].mxu0
        %5018 = vmatprep.mubr.bf16.mxu0 %v4824
        %5019 = vmatmul.mubr.bf16.gmra.mrb[0].mxu0 %v4823
        %v5020 = vpop.f32.mrb[0].mxu0
        %v5021 = vadd.f32 %v4872, %v5020
        %v5022 = vpop.f32.mrb[0].mxu0
        %v5023 = vpop.f32.mrb[0].mxu0
        %v5024 = vadd.f32 %v4872, %v5023
        %v5025 = vpop.f32.mrb[0].mxu0
        %5026 = vmatprep.mubr.bf16.mxu0 %v4826
        %5027 = vmatmul.mubr.bf16.gmra.mrb[0].mxu0 %v4825
        %v5028 = vpop.f32.mrb[0].mxu0
        %v5029 = vadd.f32 %v4872, %v5028
        %v5030 = vpop.f32.mrb[0].mxu0
        %v5031 = vpop.f32.mrb[0].mxu0
        %v5032 = vadd.f32 %v4872, %v5031
        %v5033 = vpop.f32.mrb[0].mxu0
        %5034 = vmatprep.mubr.bf16.mxu0 %v4828
        %5035 = vmatmul.mubr.bf16.gmra.mrb[0].mxu0 %v4827
        %v5036 = vpop.f32.mrb[0].mxu0
        %v5037 = vadd.f32 %v4872, %v5036
        %v5038 = vpop.f32.mrb[0].mxu0
        %v5039 = vpop.f32.mrb[0].mxu0
        %v5040 = vadd.f32 %v4872, %v5039
        %v5041 = vpop.f32.mrb[0].mxu0
        %5042 = vmatprep.mubr.bf16.mxu0 %v4830
        %5043 = vmatmul.mubr.bf16.gmra.mrb[0].mxu0 %v4829
        %v5044 = vpop.f32.mrb[0].mxu0
        %v5045 = vadd.f32 %v4872, %v5044
        %v5046 = vpop.f32.mrb[0].mxu0
        %v5047 = vpop.f32.mrb[0].mxu0
        %v5048 = vadd.f32 %v4872, %v5047
        %v5049 = vpop.f32.mrb[0].mxu0
        %5050 = vmatprep.mubr.bf16.mxu0 %v4832
        %5051 = vmatmul.mubr.bf16.gmra.mrb[0].mxu0 %v4831
        %v5052 = vpop.f32.mrb[0].mxu0
        %v5053 = vadd.f32 %v4872, %v5052
        %v5054 = vpop.f32.mrb[0].mxu0
        %v5055 = vpop.f32.mrb[0].mxu0
        %v5056 = vadd.f32 %v4872, %v5055
        %v5057 = vpop.f32.mrb[0].mxu0
        %5058 = vmatprep.mubr.bf16.mxu0 %v4834
        %5059 = vmatmul.mubr.bf16.gmra.mrb[0].mxu0 %v4833
        %v5060 = vpop.f32.mrb[0].mxu0
        %v5061 = vadd.f32 %v4872, %v5060
        %v5062 = vpop.f32.mrb[0].mxu0
        %v5063 = vpop.f32.mrb[0].mxu0
        %v5064 = vadd.f32 %v4872, %v5063
        %v5065 = vpop.f32.mrb[0].mxu0
        %5066 = vdwg.mxu0
        %v5067 = vxor.u32 %v5005, 2147483648
        %v5068 = vxor.u32 %v5008, 2147483648
        %v5069 = vxor.u32 %v5013, 2147483648
        %v5070 = vxor.u32 %v5016, 2147483648
        %v5071 = vxor.u32 %v5021, 2147483648
        %v5072 = vxor.u32 %v5024, 2147483648
        %v5073 = vxor.u32 %v5029, 2147483648
        %v5074 = vxor.u32 %v5032, 2147483648
        %v5075 = vxor.u32 %v5037, 2147483648
        %v5076 = vxor.u32 %v5040, 2147483648
        %v5077 = vxor.u32 %v5045, 2147483648
        %v5078 = vxor.u32 %v5048, 2147483648
        %v5079 = vxor.u32 %v5053, 2147483648
        %v5080 = vxor.u32 %v5056, 2147483648
        %v5081 = vxor.u32 %v5061, 2147483648
        %v5082 = vxor.u32 %v5064, 2147483648
        %v5083 = vmul.f32 %v5067, 1.442695
        %v5084 = vpow.pop %v5083
        %v5085 = vmul.f32 %v5068, 1.442695
        %v5086 = vpow.pop %v5085
        %v5087 = vmul.f32 %v5069, 1.442695
        %v5088 = vpow.pop %v5087
        %v5089 = vmul.f32 %v5070, 1.442695
        %v5090 = vpow.pop %v5089
        %v5091 = vmul.f32 %v5071, 1.442695
        %v5092 = vpow.pop %v5091
        %v5093 = vmul.f32 %v5072, 1.442695
        %v5094 = vpow.pop %v5093
        %v5095 = vmul.f32 %v5073, 1.442695
        %v5096 = vpow.pop %v5095
        %v5097 = vmul.f32 %v5074, 1.442695
        %v5098 = vpow.pop %v5097
        %v5099 = vmul.f32 %v5075, 1.442695
        %v5100 = vpow.pop %v5099
        %v5101 = vmul.f32 %v5076, 1.442695
        %v5102 = vpow.pop %v5101
        %v5103 = vmul.f32 %v5077, 1.442695
        %v5104 = vpow.pop %v5103
        %v5105 = vmul.f32 %v5078, 1.442695
        %v5106 = vpow.pop %v5105
        %v5107 = vmul.f32 %v5079, 1.442695
        %v5108 = vpow.pop %v5107
        %v5109 = vmul.f32 %v5080, 1.442695
        %v5110 = vpow.pop %v5109
        %v5111 = vmul.f32 %v5081, 1.442695
        %v5112 = vpow.pop %v5111
        %v5113 = vmul.f32 %v5082, 1.442695
        %v5114 = vpow.pop %v5113
        %v5115 = vadd.f32 %v5084, 1.0
        %v5116 = vadd.f32 %v5086, 1.0
        %v5117 = vadd.f32 %v5088, 1.0
        %v5118 = vadd.f32 %v5090, 1.0
        %v5119 = vadd.f32 %v5092, 1.0
        %v5120 = vadd.f32 %v5094, 1.0
        %v5121 = vadd.f32 %v5096, 1.0
        %v5122 = vadd.f32 %v5098, 1.0
        %v5123 = vadd.f32 %v5100, 1.0
        %v5124 = vadd.f32 %v5102, 1.0
        %v5125 = vadd.f32 %v5104, 1.0
        %v5126 = vadd.f32 %v5106, 1.0
        %v5127 = vadd.f32 %v5108, 1.0
        %v5128 = vadd.f32 %v5110, 1.0
        %v5129 = vadd.f32 %v5112, 1.0
        %v5130 = vadd.f32 %v5114, 1.0
        %v5131 = vrcp.pop %v5115
        %v5132 = vmul.f32 1.0, %v5131
        %v5133 = vrcp.pop %v5116
        %v5134 = vmul.f32 1.0, %v5133
        %v5135 = vrcp.pop %v5117
        %v5136 = vmul.f32 1.0, %v5135
        %v5137 = vrcp.pop %v5118
        %v5138 = vmul.f32 1.0, %v5137
        %v5139 = vrcp.pop %v5119
        %v5140 = vmul.f32 1.0, %v5139
        %v5141 = vrcp.pop %v5120
        %v5142 = vmul.f32 1.0, %v5141
        %v5143 = vrcp.pop %v5121
        %v5144 = vmul.f32 1.0, %v5143
        %v5145 = vrcp.pop %v5122
        %v5146 = vmul.f32 1.0, %v5145
        %v5147 = vrcp.pop %v5123
        %v5148 = vmul.f32 1.0, %v5147
        %v5149 = vrcp.pop %v5124
        %v5150 = vmul.f32 1.0, %v5149
        %v5151 = vrcp.pop %v5125
        %v5152 = vmul.f32 1.0, %v5151
        %v5153 = vrcp.pop %v5126
        %v5154 = vmul.f32 1.0, %v5153
        %v5155 = vrcp.pop %v5127
        %v5156 = vmul.f32 1.0, %v5155
        %v5157 = vrcp.pop %v5128
        %v5158 = vmul.f32 1.0, %v5157
        %v5159 = vrcp.pop %v5129
        %v5160 = vmul.f32 1.0, %v5159
        %v5161 = vrcp.pop %v5130
        %v5162 = vmul.f32 1.0, %v5161
        %v5163 = vlaneseq
        %v5164 = vand.u32 %v5163, 127
        %vm5165 = vcmp.eq.s32.totalorder %v5164, 1
        %5167 = vset.pattern.permute.xlu0 1
        %5168 = vperm.xlu0 %5167, %v5132
        %v5169 = vpop.permute.xlu0 %5168
        %5172 = vset.pattern.permute.xlu0 1
        %5173 = vperm.xlu0 %5172, %v5134
        %v5174 = vpop.permute.xlu0 %5173
        %5177 = vset.pattern.permute.xlu0 1
        %5178 = vperm.xlu0 %5177, %v5136
        %v5179 = vpop.permute.xlu0 %5178
        %5182 = vset.pattern.permute.xlu0 1
        %5183 = vperm.xlu0 %5182, %v5138
        %v5184 = vpop.permute.xlu0 %5183
        %5187 = vset.pattern.permute.xlu0 1
        %5188 = vperm.xlu0 %5187, %v5140
        %v5189 = vpop.permute.xlu0 %5188
        %5192 = vset.pattern.permute.xlu0 1
        %5193 = vperm.xlu0 %5192, %v5142
        %v5194 = vpop.permute.xlu0 %5193
        %5197 = vset.pattern.permute.xlu0 1
        %5198 = vperm.xlu0 %5197, %v5144
        %v5199 = vpop.permute.xlu0 %5198
        %5202 = vset.pattern.permute.xlu0 1
        %5203 = vperm.xlu0 %5202, %v5146
        %v5204 = vpop.permute.xlu0 %5203
        %5207 = vset.pattern.permute.xlu0 1
        %5208 = vperm.xlu0 %5207, %v5148
        %v5209 = vpop.permute.xlu0 %5208
        %5212 = vset.pattern.permute.xlu0 1
        %5213 = vperm.xlu0 %5212, %v5150
        %v5214 = vpop.permute.xlu0 %5213
        %5217 = vset.pattern.permute.xlu0 1
        %5218 = vperm.xlu0 %5217, %v5152
        %v5219 = vpop.permute.xlu0 %5218
        %5222 = vset.pattern.permute.xlu0 1
        %5223 = vperm.xlu0 %5222, %v5154
        %v5224 = vpop.permute.xlu0 %5223
        %5227 = vset.pattern.permute.xlu0 1
        %5228 = vperm.xlu0 %5227, %v5156
        %v5229 = vpop.permute.xlu0 %5228
        %5232 = vset.pattern.permute.xlu0 1
        %5233 = vperm.xlu0 %5232, %v5158
        %v5234 = vpop.permute.xlu0 %5233
        %5237 = vset.pattern.permute.xlu0 1
        %5238 = vperm.xlu0 %5237, %v5160
        %v5239 = vpop.permute.xlu0 %5238
        %5242 = vset.pattern.permute.xlu0 1
        %5243 = vperm.xlu0 %5242, %v5162
        %v5244 = vpop.permute.xlu0 %5243
        %v5246 = vsel %vm5165, %v5169, %v5005
        %v5247 = vsel %vm5165, %v5174, %v5008
        %v5248 = vsel %vm5165, %v5179, %v5013
        %v5249 = vsel %vm5165, %v5184, %v5016
        %v5250 = vsel %vm5165, %v5189, %v5021
        %v5251 = vsel %vm5165, %v5194, %v5024
        %v5252 = vsel %vm5165, %v5199, %v5029
        %v5253 = vsel %vm5165, %v5204, %v5032
        %v5254 = vsel %vm5165, %v5209, %v5037
        %v5255 = vsel %vm5165, %v5214, %v5040
        %v5256 = vsel %vm5165, %v5219, %v5045
        %v5257 = vsel %vm5165, %v5224, %v5048
        %v5258 = vsel %vm5165, %v5229, %v5053
        %v5259 = vsel %vm5165, %v5234, %v5056
        %v5260 = vsel %vm5165, %v5239, %v5061
        %v5261 = vsel %vm5165, %v5244, %v5064
        %5262 = vst.msk [vmem:[%s295] sm:$0xff] %vm340, %v5246
        %5263 = vst.msk [vmem:[%s295 + $0x8] sm:$0xff] %vm340, %v5247
        %5264 = vst.msk [vmem:[%s295 + $0x10] sm:$0xff] %vm340, %v5248
        %5265 = vst.msk [vmem:[%s295 + $0x18] sm:$0xff] %vm340, %v5249
        %5266 = vst.msk [vmem:[%s295 + $0x20] sm:$0xff] %vm340, %v5250
        %5267 = vst.msk [vmem:[%s295 + $0x28] sm:$0xff] %vm340, %v5251
        %5268 = vst.msk [vmem:[%s295 + $0x30] sm:$0xff] %vm340, %v5252
        %5269 = vst.msk [vmem:[%s295 + $0x38] sm:$0xff] %vm340, %v5253
        %5270 = vst.msk [vmem:[%s295 + $0x40] sm:$0xff] %vm340, %v5254
        %5271 = vst.msk [vmem:[%s295 + $0x48] sm:$0xff] %vm340, %v5255
        %5272 = vst.msk [vmem:[%s295 + $0x50] sm:$0xff] %vm340, %v5256
        %5273 = vst.msk [vmem:[%s295 + $0x58] sm:$0xff] %vm340, %v5257
        %5274 = vst.msk [vmem:[%s295 + $0x60] sm:$0xff] %vm340, %v5258
        %5275 = vst.msk [vmem:[%s295 + $0x68] sm:$0xff] %vm340, %v5259
        %5276 = vst.msk [vmem:[%s295 + $0x70] sm:$0xff] %vm340, %v5260
        %5277 = vst.msk [vmem:[%s295 + $0x78] sm:$0xff] %vm340, %v5261
        %s5278 = smul.u32 16, %s19
        %p5279 = scmp.lt.s32.totalorder %s5278, 31
        %s5280 = scalar_select %p5279, %s5278, 31
        %s5281 = smul.addr %s5280, 8
        %s5282 = scalar_lea.vmem %s7, %s5281
        // Predicated region
        $region53: #{light_field_model_forward.1} parent=47 // pred_check
          %p5283 = pneg %p189
        $region54: #{light_field_model_forward.1} parent=47 // pred_check_branch
          %5285 = sbr.rel (%p5283) target = $region56
        $region55: #{light_field_model_forward.1} parent=47 // pred_region
          %s5286 = smul.u32 16, %s19
        $region56: #{light_field_model_forward.1} parent=47 // pred_fallthru
          _
      $region48: #{light_field_model_forward.1} parent=5 // pred_fallthru
        _
      %p5287 = scmp.le.s32.totalorder 2, %s14
      // Predicated region
      $region57: #{light_field_model_forward.1} parent=5 // pred_check
        %p5288 = pneg %p5287
      $region58: #{light_field_model_forward.1} parent=5 // pred_check_branch
        %5290 = sbr.rel (%p5288) target = $region60
      $region59: #{light_field_model_forward.1} parent=5 // pred_region
        %s5291 = ssub.s32 %s14, 2
        // Predicated region
        $region61: #{light_field_model_forward.1} parent=59 // pred_check
          %p5292 = pneg %p195
        $region62: #{light_field_model_forward.1} parent=59 // pred_check_branch
          %5294 = sbr.rel (%p5292) target = $region64
        $region63: #{light_field_model_forward.1} parent=59 // pred_region
          %s5295 = smul.u32 16, %s20
          %p5296 = scmp.lt.s32.totalorder %s5295, 31
          %s5297 = scalar_select %p5296, %s5295, 31
          %s5298 = smul.addr %s5297, 8
          %s5299 = scalar_lea.vmem %s7, %s5298
        $region64: #{light_field_model_forward.1} parent=59 // pred_fallthru
          _
      $region60: #{light_field_model_forward.1} parent=5 // pred_fallthru
        _
    $region6: #{light_field_model_forward.1} parent=1 // loop_footer
      %s18 = sadd.s32 1, %s14
    $region7: #{light_field_model_forward.1} parent=1 // loop_footer_branch
      %13 = sbr.rel target = $region3
    $region8: #{light_field_model_forward.1} parent=1 // loop_exit
      _
    %5300 = vsyncpa [#allocation3], 1
    %s5301 = scalar_lea.sflag [#allocation3], 1
    %5302 = vsyncpa %s5301, 1

</llo_original>
